<compile_context>
chip_gen: v6e
topology: v6e:2x2x1
jax: 0.10.0
libtpu: 0.0.40
codegen_flags: <defaults>
</compile_context>

<pallas_src>
import functools

import jax
import jax.numpy as jnp
import numpy as np
from jax.experimental import pallas as pl
from jax.experimental.pallas import tpu as pltpu

# prm.REF_PPPAD is not given in the original snippet; use a small odd-width
# reference consistent with the module's arithmetic (output length = L - 2).
REF_PPPAD = (3, 3)          # (hp, wp); wp odd -> pad_wp = (wp - 1) // 2 - 1
HIDDEN_CHANNELS = 8
PADDING = 2


# ----------------------------------------------------------------------------
# Static shifted-window helper (all indices are Python ints -> static slices;
# the zero-fill path is only traced when pad_wp > 0 forces out-of-range taps).
# ----------------------------------------------------------------------------
def _shift_cols(m, start, size):
    """m[:, start:start+size] with zero fill outside [0, width)."""
    rows, width = m.shape
    lo, hi = max(start, 0), min(start + size, width)
    if hi <= lo:
        return jnp.zeros((rows, size), m.dtype)
    parts = []
    if lo - start:
        parts.append(jnp.zeros((rows, lo - start), m.dtype))
    parts.append(m[:, lo:hi])
    if (start + size) - hi:
        parts.append(jnp.zeros((rows, (start + size) - hi), m.dtype))
    return parts[0] if len(parts) == 1 else jnp.concatenate(parts, axis=1)


# ----------------------------------------------------------------------------
# Fused Pallas kernel: one image's full progressive-padding loop per grid cell.
# The output block (1, C, Hp, Wp) is the resident VMEM working canvas.
# ----------------------------------------------------------------------------
def _pppad_kernel(x_ref,
                  w1l_ref, b1l_ref, w2l_ref, b2l_ref, w3l_ref, b3l_ref,
                  w1v_ref, b1v_ref, w2v_ref, b2v_ref, w3v_ref, b3v_ref,
                  xp_ref,
                  *, C, H, W, p, hp, wp):
    f32 = jnp.float32
    pad_wp = (wp - 1) // 2 - 1
    Hp, Wp = H + 2 * p, W + 2 * p
    out_w = Wp + 2 * pad_wp - wp + 1          # lateral output length  (== Wp - 2)
    out_h = Hp + 2 * pad_wp - wp + 1          # vertical output length (== Hp - 2)

    # ---- prologue: build each padded channel plane as a value, store it once ----
    zc = jnp.zeros((H, p), f32)
    zr = jnp.zeros((p, Wp), f32)
    for c in range(C):
        mid = jnp.concatenate([zc, x_ref[0, c, :, :], zc], axis=1)      # (H, Wp)
        xp_ref[0, c, :, :] = jnp.concatenate([zr, mid, zr], axis=0)     # (Hp, Wp)

    # ---- packed (pair-fused, block-diagonal) weight tiles: ~10 vregs total ----
    wl = (w1l_ref[...], b1l_ref[...], w2l_ref[...], b2l_ref[...],
          w3l_ref[...], b3l_ref[...])
    wv = (w1v_ref[...], b1v_ref[...], w2v_ref[...], b2v_ref[...],
          w3v_ref[...], b3v_ref[...])

    def mlp_pair(a, w):
        """conv->1x1->1x1 (ReLU) chain on im2col columns of a fused branch pair."""
        w1, b1, w2, b2, w3, b3 = w
        h = jnp.maximum(jnp.dot(w1, a, preferred_element_type=f32) + b1, 0.0)
        h = jnp.maximum(jnp.dot(w2, h, preferred_element_type=f32) + b2, 0.0)
        return jnp.maximum(jnp.dot(w3, h, preferred_element_type=f32) + b3, 0.0)

    def lateral_cols(r0):
        """im2col of the (C, hp, Wp) strip starting at row r0; rows (kw, c, kh)."""
        flat = jnp.concatenate(
            [xp_ref[0, c, r0:r0 + hp, :] for c in range(C)], axis=0)     # (C*hp, Wp)
        blocks = [_shift_cols(flat, kw - pad_wp, out_w) for kw in range(wp)]
        return blocks[0] if wp == 1 else jnp.concatenate(blocks, axis=0)

    def vertical_cols(c0):
        """Lane-dense im2col of the (C, Hp, hp) strip at column c0; rows (ky, c, kx)."""
        strip = jnp.concatenate(
            [xp_ref[0, c, :, c0:c0 + hp] for c in range(C)], axis=1)     # (Hp, C*hp)
        flat = jnp.transpose(strip)                                      # (C*hp, Hp)
        blocks = [_shift_cols(flat, ky - pad_wp, out_h) for ky in range(wp)]
        return blocks[0] if wp == 1 else jnp.concatenate(blocks, axis=0)

    # ---- progressive padding; branch order (top, bottom, left, right) per spec ----
    for i in range(p):
        # top & bottom: one fused chain over 2*out_w lane columns
        a = jnp.concatenate([lateral_cols(p - i),
                             lateral_cols(p + H - hp + i)], axis=1)      # (F, 2*out_w)
        o = mlp_pair(a, wl)                                              # (2, 2*out_w)
        top = o[0:1, 0:out_w]
        bot = o[1:2, out_w:2 * out_w]
        xp_ref[0, :, p - 1 - i:p - i, 1:Wp - 1] = \
            jnp.broadcast_to(top[None], (C, 1, out_w))
        xp_ref[0, :, p + H + i:p + H + i + 1, 1:Wp - 1] = \
            jnp.broadcast_to(bot[None], (C, 1, out_w))

        # left & right: fused lane-dense chain; transpose only the final rows
        a = jnp.concatenate([vertical_cols(p - i),
                             vertical_cols(p + W - hp + i)], axis=1)     # (F, 2*out_h)
        o = mlp_pair(a, wv)                                              # (2, 2*out_h)
        left = jnp.transpose(o[0:1, 0:out_h])                            # (out_h, 1)
        right = jnp.transpose(o[1:2, out_h:2 * out_h])                   # (out_h, 1)
        xp_ref[0, :, 1:Hp - 1, p - 1 - i:p - i] = \
            jnp.broadcast_to(left[None], (C, out_h, 1))
        xp_ref[0, :, 1:Hp - 1, p + W + i:p + W + i + 1] = \
            jnp.broadcast_to(right[None], (C, out_h, 1))


# ----------------------------------------------------------------------------
# Host-side weight prep: fuse each branch pair into block-diagonal 2-D tiles.
# ----------------------------------------------------------------------------
def _pack_pair(branch_a, branch_b, pack_w1):
    w1a, b1a, w2a, b2a, w3a, b3a = branch_a
    w1b, b1b, w2b, b2b, w3b, b3b = branch_b
    hidden = w1a.shape[0]
    w1 = jnp.concatenate([pack_w1(w1a), pack_w1(w1b)], axis=0)           # (2h, F)
    b1 = jnp.concatenate([b1a, b1b]).reshape(2 * hidden, 1)
    w2 = jnp.zeros((2 * hidden, 2 * hidden), jnp.float32)
    w2 = w2.at[:hidden, :hidden].set(w2a.reshape(hidden, hidden))
    w2 = w2.at[hidden:, hidden:].set(w2b.reshape(hidden, hidden))
    b2 = jnp.concatenate([b2a, b2b]).reshape(2 * hidden, 1)
    w3 = jnp.zeros((2, 2 * hidden), jnp.float32)
    w3 = w3.at[0, :hidden].set(w3a.reshape(hidden))
    w3 = w3.at[1, hidden:].set(w3b.reshape(hidden))
    b3 = jnp.concatenate([b3a, b3b]).reshape(2, 1)
    return (w1, b1, w2, b2, w3, b3)


def _prep_lateral_pair(top, bottom):
    def pack_w1(w1):        # (hidden, C, hp, wp) -> (hidden, wp*C*hp), cols (kw, c, kh)
        h, c, hp_, wp_ = w1.shape
        return jnp.transpose(w1, (0, 3, 1, 2)).reshape(h, wp_ * c * hp_)
    return _pack_pair(top, bottom, pack_w1)


def _prep_vertical_pair(left, right):
    def pack_w1(w1):        # (hidden, C, wp, hp) -> (hidden, wp*C*hp), cols (ky, c, kx)
        h, c, wp_, hp_ = w1.shape
        return jnp.transpose(w1, (0, 2, 1, 3)).reshape(h, wp_ * c * hp_)
    return _pack_pair(left, right, pack_w1)


# ----------------------------------------------------------------------------
# calc_padding_conv forward (single pallas_call, grid over batch)
# ----------------------------------------------------------------------------
def calc_padding_conv_forward(x, params, p, ref):
    if p == 0:
        return x
    B, C, H, W = x.shape
    hp, wp = ref
    hidden = params["top"][0].shape[0]
    pad_wp = (wp - 1) // 2 - 1
    Hp, Wp = H + 2 * p, W + 2 * p
    out_w = Wp + 2 * pad_wp - wp + 1
    out_h = Hp + 2 * pad_wp - wp + 1
    # Module writes to rows/cols 1:dim-1, which assumes conv output == dim - 2.
    assert out_w == Wp - 2 and out_h == Hp - 2, "REF_PPPAD incompatible with write regions"
    assert H >= hp and W >= hp, "strips must fit inside the original image"

    weights = (_prep_lateral_pair(params["top"], params["bottom"])
               + _prep_vertical_pair(params["left"], params["right"]))

    kernel = functools.partial(_pppad_kernel, C=C, H=H, W=W, p=p, hp=hp, wp=wp)

    feat = wp * C * hp
    per_lane = 2 * (2 * hidden * feat + (2 * hidden) ** 2 + 2 * 2 * hidden)
    flops = int(p * B * (2 * out_w + 2 * out_h) * per_lane)
    bytes_accessed = 4 * (int(x.size)
                          + sum(int(np.prod(w.shape)) for w in weights)
                          + B * C * Hp * Wp)

    x_spec = pl.BlockSpec((1, C, H, W), lambda b: (b, 0, 0, 0))
    w_specs = [pl.BlockSpec(w.shape, lambda b: (0, 0)) for w in weights]
    out_spec = pl.BlockSpec((1, C, Hp, Wp), lambda b: (b, 0, 0, 0))

    return pl.pallas_call(
        kernel,
        out_shape=jax.ShapeDtypeStruct((B, C, Hp, Wp), jnp.float32),
        grid=(B,),
        in_specs=[x_spec] + w_specs,
        out_specs=out_spec,
        compiler_params=pltpu.CompilerParams(
            dimension_semantics=("parallel",)),
        cost_estimate=pl.CostEstimate(flops=flops, transcendentals=0,
                                      bytes_accessed=bytes_accessed),
    )(x, *weights)


# ----------------------------------------------------------------------------
# Deterministic parameter init (synthetic; matches nn.Conv2d shapes)
# ----------------------------------------------------------------------------
def init_branch_params(key, in_channels, hidden, kh, kw):
    k1, k2, k3, k4, k5, k6 = jax.random.split(key, 6)
    w1 = jax.random.normal(k1, (hidden, in_channels, kh, kw), jnp.float32) * 0.1
    b1 = jax.random.normal(k2, (hidden,), jnp.float32) * 0.1
    w2 = jax.random.normal(k3, (hidden, hidden, 1, 1), jnp.float32) * 0.1
    b2 = jax.random.normal(k4, (hidden,), jnp.float32) * 0.1
    w3 = jax.random.normal(k5, (1, hidden, 1, 1), jnp.float32) * 0.1
    b3 = jax.random.normal(k6, (1,), jnp.float32) * 0.1
    return (w1, b1, w2, b2, w3, b3)


def init_calc_padding_params(key, in_channels, hidden, ref):
    hp, wp = ref
    kt, kb, kl, kr = jax.random.split(key, 4)
    return {
        "top": init_branch_params(kt, in_channels, hidden, hp, wp),     # lateral (hp, wp)
        "bottom": init_branch_params(kb, in_channels, hidden, hp, wp),
        "left": init_branch_params(kl, in_channels, hidden, wp, hp),    # vertical (wp, hp)
        "right": init_branch_params(kr, in_channels, hidden, wp, hp),
    }


# ----------------------------------------------------------------------------
# Pure-JAX reference (lax.conv) for the correctness check
# ----------------------------------------------------------------------------
def _conv2d_nchw(x, w, b, padding_hw):
    out = jax.lax.conv_general_dilated(
        x, w, window_strides=(1, 1),
        padding=((padding_hw[0], padding_hw[0]), (padding_hw[1], padding_hw[1])),
        dimension_numbers=("NCHW", "OIHW", "NCHW"))
    return out + b.reshape(1, -1, 1, 1)


def _branch_ref(strip, raw, padding_hw):
    w1, b1, w2, b2, w3, b3 = raw
    h = jax.nn.relu(_conv2d_nchw(strip, w1, b1, padding_hw))
    h = jax.nn.relu(_conv2d_nchw(h, w2, b2, (0, 0)))
    return jax.nn.relu(_conv2d_nchw(h, w3, b3, (0, 0)))


def calc_padding_conv_reference(x, params, p, ref):
    if p == 0:
        return x
    B, C, H, W = x.shape
    hp, wp = ref
    pad_wp = (wp - 1) // 2 - 1
    Hp, Wp = H + 2 * p, W + 2 * p
    xp = jnp.zeros((B, C, Hp, Wp), jnp.float32)
    xp = xp.at[:, :, p:H + p, p:W + p].set(x)
    for i in range(p):
        out = _branch_ref(xp[:, :, p - i:p + hp - i, :], params["top"], (0, pad_wp))
        xp = xp.at[:, :, p - 1 - i:p - i, 1:Wp - 1].set(out)
        out = _branch_ref(xp[:, :, p + H - hp + i:p + H + i, :], params["bottom"], (0, pad_wp))
        xp = xp.at[:, :, p + H + i:p + H + i + 1, 1:Wp - 1].set(out)
        out = _branch_ref(xp[:, :, :, p - i:p + hp - i], params["left"], (pad_wp, 0))
        xp = xp.at[:, :, 1:Hp - 1, p - 1 - i:p - i].set(out)
        out = _branch_ref(xp[:, :, :, p + W - hp + i:p + W + i], params["right"], (pad_wp, 0))
        xp = xp.at[:, :, 1:Hp - 1, p + W + i:p + W + i + 1].set(out)
    return xp


if __name__ == "__main__":
    B, C, H, W = 2, 4, 16, 16
    key = jax.random.PRNGKey(0)
    k_x, k_p = jax.random.split(key)
    x = jax.random.normal(k_x, (B, C, H, W), jnp.float32)
    params = init_calc_padding_params(k_p, C, HIDDEN_CHANNELS, REF_PPPAD)

    fwd = jax.jit(lambda xx, pp: calc_padding_conv_forward(xx, pp, PADDING, REF_PPPAD))
    out = jax.block_until_ready(fwd(x, params))

    ref_out = jax.block_until_ready(calc_padding_conv_reference(x, params, PADDING, REF_PPPAD))
    assert out.shape == (B, C, H + 2 * PADDING, W + 2 * PADDING)
    np.testing.assert_allclose(np.asarray(out), np.asarray(ref_out), atol=1e-4, rtol=1e-4)

    print("KERNEL_OK")
</pallas_src>

<mosaic_0001>
module attributes {stable_mosaic.version = 11 : i64} {
  func.func @_pppad_kernel(%arg0: i32, %arg1: memref<1x4x16x16xf32, #tpu.memory_space<vmem>>, %arg2: memref<16x36xf32, #tpu.memory_space<vmem>>, %arg3: memref<16x1xf32, #tpu.memory_space<vmem>>, %arg4: memref<16x16xf32, #tpu.memory_space<vmem>>, %arg5: memref<16x1xf32, #tpu.memory_space<vmem>>, %arg6: memref<2x16xf32, #tpu.memory_space<vmem>>, %arg7: memref<2x1xf32, #tpu.memory_space<vmem>>, %arg8: memref<16x36xf32, #tpu.memory_space<vmem>>, %arg9: memref<16x1xf32, #tpu.memory_space<vmem>>, %arg10: memref<16x16xf32, #tpu.memory_space<vmem>>, %arg11: memref<16x1xf32, #tpu.memory_space<vmem>>, %arg12: memref<2x16xf32, #tpu.memory_space<vmem>>, %arg13: memref<2x1xf32, #tpu.memory_space<vmem>>, %arg14: memref<1x4x20x20xf32, #tpu.memory_space<vmem>>) attributes {dimension_semantics = [#tpu.dimension_semantics<parallel>], iteration_bounds = array<i64: 2>, scalar_prefetch = 0 : i64, scratch_operands = 0 : i64, tpu.core_type = #tpu.core_type<tc>, window_params = [{transform_indices = @transform_0, window_bounds = array<i64: 1, 4, 16, 16>}, {pipeline_mode = #tpu.pipeline_mode<synchronous>, transform_indices = @transform_1, window_bounds = array<i64: 16, 36>}, {pipeline_mode = #tpu.pipeline_mode<synchronous>, transform_indices = @transform_2, window_bounds = array<i64: 16, 1>}, {pipeline_mode = #tpu.pipeline_mode<synchronous>, transform_indices = @transform_3, window_bounds = array<i64: 16, 16>}, {pipeline_mode = #tpu.pipeline_mode<synchronous>, transform_indices = @transform_4, window_bounds = array<i64: 16, 1>}, {pipeline_mode = #tpu.pipeline_mode<synchronous>, transform_indices = @transform_5, window_bounds = array<i64: 2, 16>}, {pipeline_mode = #tpu.pipeline_mode<synchronous>, transform_indices = @transform_6, window_bounds = array<i64: 2, 1>}, {pipeline_mode = #tpu.pipeline_mode<synchronous>, transform_indices = @transform_7, window_bounds = array<i64: 16, 36>}, {pipeline_mode = #tpu.pipeline_mode<synchronous>, transform_indices = @transform_8, window_bounds = array<i64: 16, 1>}, {pipeline_mode = #tpu.pipeline_mode<synchronous>, transform_indices = @transform_9, window_bounds = array<i64: 16, 16>}, {pipeline_mode = #tpu.pipeline_mode<synchronous>, transform_indices = @transform_10, window_bounds = array<i64: 16, 1>}, {pipeline_mode = #tpu.pipeline_mode<synchronous>, transform_indices = @transform_11, window_bounds = array<i64: 2, 16>}, {pipeline_mode = #tpu.pipeline_mode<synchronous>, transform_indices = @transform_12, window_bounds = array<i64: 2, 1>}, {transform_indices = @transform_13, window_bounds = array<i64: 1, 4, 20, 20>}]} {
    %cst = arith.constant 0.000000e+00 : f32
    %0 = vector.broadcast %cst : f32 to vector<16x2xf32>
    %cst_0 = arith.constant 0.000000e+00 : f32
    %1 = vector.broadcast %cst_0 : f32 to vector<2x20xf32>
    %c0 = arith.constant 0 : index
    %c0_1 = arith.constant 0 : index
    %c0_2 = arith.constant 0 : index
    %c0_3 = arith.constant 0 : index
    %2 = vector.load %arg1[%c0, %c0_1, %c0_2, %c0_3] : memref<1x4x16x16xf32, #tpu.memory_space<vmem>>, vector<1x1x16x16xf32>
    %3 = vector.shape_cast %2 : vector<1x1x16x16xf32> to vector<16x16xf32>
    %4 = tpu.concatenate %0, %3, %0 in 1 : vector<16x2xf32>, vector<16x16xf32>, vector<16x2xf32> -> vector<16x20xf32>
    %5 = tpu.concatenate %1, %4, %1 in 0 : vector<2x20xf32>, vector<16x20xf32>, vector<2x20xf32> -> vector<20x20xf32>
    %c0_4 = arith.constant 0 : index
    %c0_5 = arith.constant 0 : index
    %c0_6 = arith.constant 0 : index
    %c0_7 = arith.constant 0 : index
    %6 = vector.load %arg14[%c0_4, %c0_5, %c0_6, %c0_7] : memref<1x4x20x20xf32, #tpu.memory_space<vmem>>, vector<1x1x20x20xf32>
    %7 = vector.shape_cast %6 : vector<1x1x20x20xf32> to vector<20x20xf32>
    %8 = vector.shape_cast %5 : vector<20x20xf32> to vector<1x1x20x20xf32>
    tpu.vector_store %arg14[%c0_4, %c0_5, %c0_6, %c0_7], %8 {strides = array<i32>} : memref<1x4x20x20xf32, #tpu.memory_space<vmem>>, vector<1x1x20x20xf32>,
    %c0_8 = arith.constant 0 : index
    %c1 = arith.constant 1 : index
    %c0_9 = arith.constant 0 : index
    %c0_10 = arith.constant 0 : index
    %9 = vector.load %arg1[%c0_8, %c1, %c0_9, %c0_10] : memref<1x4x16x16xf32, #tpu.memory_space<vmem>>, vector<1x1x16x16xf32>
    %10 = vector.shape_cast %9 : vector<1x1x16x16xf32> to vector<16x16xf32>
    %11 = tpu.concatenate %0, %10, %0 in 1 : vector<16x2xf32>, vector<16x16xf32>, vector<16x2xf32> -> vector<16x20xf32>
    %12 = tpu.concatenate %1, %11, %1 in 0 : vector<2x20xf32>, vector<16x20xf32>, vector<2x20xf32> -> vector<20x20xf32>
    %c0_11 = arith.constant 0 : index
    %c1_12 = arith.constant 1 : index
    %c0_13 = arith.constant 0 : index
    %c0_14 = arith.constant 0 : index
    %13 = vector.load %arg14[%c0_11, %c1_12, %c0_13, %c0_14] : memref<1x4x20x20xf32, #tpu.memory_space<vmem>>, vector<1x1x20x20xf32>
    %14 = vector.shape_cast %13 : vector<1x1x20x20xf32> to vector<20x20xf32>
    %15 = vector.shape_cast %12 : vector<20x20xf32> to vector<1x1x20x20xf32>
    tpu.vector_store %arg14[%c0_11, %c1_12, %c0_13, %c0_14], %15 {strides = array<i32>} : memref<1x4x20x20xf32, #tpu.memory_space<vmem>>, vector<1x1x20x20xf32>,
    %c0_15 = arith.constant 0 : index
    %c2 = arith.constant 2 : index
    %c0_16 = arith.constant 0 : index
    %c0_17 = arith.constant 0 : index
    %16 = vector.load %arg1[%c0_15, %c2, %c0_16, %c0_17] : memref<1x4x16x16xf32, #tpu.memory_space<vmem>>, vector<1x1x16x16xf32>
    %17 = vector.shape_cast %16 : vector<1x1x16x16xf32> to vector<16x16xf32>
    %18 = tpu.concatenate %0, %17, %0 in 1 : vector<16x2xf32>, vector<16x16xf32>, vector<16x2xf32> -> vector<16x20xf32>
    %19 = tpu.concatenate %1, %18, %1 in 0 : vector<2x20xf32>, vector<16x20xf32>, vector<2x20xf32> -> vector<20x20xf32>
    %c0_18 = arith.constant 0 : index
    %c2_19 = arith.constant 2 : index
    %c0_20 = arith.constant 0 : index
    %c0_21 = arith.constant 0 : index
    %20 = vector.load %arg14[%c0_18, %c2_19, %c0_20, %c0_21] : memref<1x4x20x20xf32, #tpu.memory_space<vmem>>, vector<1x1x20x20xf32>
    %21 = vector.shape_cast %20 : vector<1x1x20x20xf32> to vector<20x20xf32>
    %22 = vector.shape_cast %19 : vector<20x20xf32> to vector<1x1x20x20xf32>
    tpu.vector_store %arg14[%c0_18, %c2_19, %c0_20, %c0_21], %22 {strides = array<i32>} : memref<1x4x20x20xf32, #tpu.memory_space<vmem>>, vector<1x1x20x20xf32>,
    %c0_22 = arith.constant 0 : index
    %c3 = arith.constant 3 : index
    %c0_23 = arith.constant 0 : index
    %c0_24 = arith.constant 0 : index
    %23 = vector.load %arg1[%c0_22, %c3, %c0_23, %c0_24] : memref<1x4x16x16xf32, #tpu.memory_space<vmem>>, vector<1x1x16x16xf32>
    %24 = vector.shape_cast %23 : vector<1x1x16x16xf32> to vector<16x16xf32>
    %25 = tpu.concatenate %0, %24, %0 in 1 : vector<16x2xf32>, vector<16x16xf32>, vector<16x2xf32> -> vector<16x20xf32>
    %26 = tpu.concatenate %1, %25, %1 in 0 : vector<2x20xf32>, vector<16x20xf32>, vector<2x20xf32> -> vector<20x20xf32>
    %c0_25 = arith.constant 0 : index
    %c3_26 = arith.constant 3 : index
    %c0_27 = arith.constant 0 : index
    %c0_28 = arith.constant 0 : index
    %27 = vector.load %arg14[%c0_25, %c3_26, %c0_27, %c0_28] : memref<1x4x20x20xf32, #tpu.memory_space<vmem>>, vector<1x1x20x20xf32>
    %28 = vector.shape_cast %27 : vector<1x1x20x20xf32> to vector<20x20xf32>
    %29 = vector.shape_cast %26 : vector<20x20xf32> to vector<1x1x20x20xf32>
    tpu.vector_store %arg14[%c0_25, %c3_26, %c0_27, %c0_28], %29 {strides = array<i32>} : memref<1x4x20x20xf32, #tpu.memory_space<vmem>>, vector<1x1x20x20xf32>,
    %c0_29 = arith.constant 0 : index
    %c0_30 = arith.constant 0 : index
    %30 = vector.load %arg2[%c0_29, %c0_30] : memref<16x36xf32, #tpu.memory_space<vmem>>, vector<16x36xf32>
    %c0_31 = arith.constant 0 : index
    %c0_32 = arith.constant 0 : index
    %31 = vector.load %arg3[%c0_31, %c0_32] : memref<16x1xf32, #tpu.memory_space<vmem>>, vector<16x1xf32>
    %c0_33 = arith.constant 0 : index
    %c0_34 = arith.constant 0 : index
    %32 = vector.load %arg4[%c0_33, %c0_34] : memref<16x16xf32, #tpu.memory_space<vmem>>, vector<16x16xf32>
    %c0_35 = arith.constant 0 : index
    %c0_36 = arith.constant 0 : index
    %33 = vector.load %arg5[%c0_35, %c0_36] : memref<16x1xf32, #tpu.memory_space<vmem>>, vector<16x1xf32>
    %c0_37 = arith.constant 0 : index
    %c0_38 = arith.constant 0 : index
    %34 = vector.load %arg6[%c0_37, %c0_38] : memref<2x16xf32, #tpu.memory_space<vmem>>, vector<2x16xf32>
    %c0_39 = arith.constant 0 : index
    %c0_40 = arith.constant 0 : index
    %35 = vector.load %arg7[%c0_39, %c0_40] : memref<2x1xf32, #tpu.memory_space<vmem>>, vector<2x1xf32>
    %c0_41 = arith.constant 0 : index
    %c0_42 = arith.constant 0 : index
    %36 = vector.load %arg8[%c0_41, %c0_42] : memref<16x36xf32, #tpu.memory_space<vmem>>, vector<16x36xf32>
    %c0_43 = arith.constant 0 : index
    %c0_44 = arith.constant 0 : index
    %37 = vector.load %arg9[%c0_43, %c0_44] : memref<16x1xf32, #tpu.memory_space<vmem>>, vector<16x1xf32>
    %c0_45 = arith.constant 0 : index
    %c0_46 = arith.constant 0 : index
    %38 = vector.load %arg10[%c0_45, %c0_46] : memref<16x16xf32, #tpu.memory_space<vmem>>, vector<16x16xf32>
    %c0_47 = arith.constant 0 : index
    %c0_48 = arith.constant 0 : index
    %39 = vector.load %arg11[%c0_47, %c0_48] : memref<16x1xf32, #tpu.memory_space<vmem>>, vector<16x1xf32>
    %c0_49 = arith.constant 0 : index
    %c0_50 = arith.constant 0 : index
    %40 = vector.load %arg12[%c0_49, %c0_50] : memref<2x16xf32, #tpu.memory_space<vmem>>, vector<2x16xf32>
    %c0_51 = arith.constant 0 : index
    %c0_52 = arith.constant 0 : index
    %41 = vector.load %arg13[%c0_51, %c0_52] : memref<2x1xf32, #tpu.memory_space<vmem>>, vector<2x1xf32>
    %c0_53 = arith.constant 0 : index
    %c0_54 = arith.constant 0 : index
    %c2_55 = arith.constant 2 : index
    %c0_56 = arith.constant 0 : index
    %42 = vector.load %arg14[%c0_53, %c0_54, %c2_55, %c0_56] : memref<1x4x20x20xf32, #tpu.memory_space<vmem>>, vector<1x1x3x20xf32>
    %43 = vector.shape_cast %42 : vector<1x1x3x20xf32> to vector<3x20xf32>
    %c0_57 = arith.constant 0 : index
    %c1_58 = arith.constant 1 : index
    %c2_59 = arith.constant 2 : index
    %c0_60 = arith.constant 0 : index
    %44 = vector.load %arg14[%c0_57, %c1_58, %c2_59, %c0_60] : memref<1x4x20x20xf32, #tpu.memory_space<vmem>>, vector<1x1x3x20xf32>
    %45 = vector.shape_cast %44 : vector<1x1x3x20xf32> to vector<3x20xf32>
    %c0_61 = arith.constant 0 : index
    %c2_62 = arith.constant 2 : index
    %c2_63 = arith.constant 2 : index
    %c0_64 = arith.constant 0 : index
    %46 = vector.load %arg14[%c0_61, %c2_62, %c2_63, %c0_64] : memref<1x4x20x20xf32, #tpu.memory_space<vmem>>, vector<1x1x3x20xf32>
    %47 = vector.shape_cast %46 : vector<1x1x3x20xf32> to vector<3x20xf32>
    %c0_65 = arith.constant 0 : index
    %c3_66 = arith.constant 3 : index
    %c2_67 = arith.constant 2 : index
    %c0_68 = arith.constant 0 : index
    %48 = vector.load %arg14[%c0_65, %c3_66, %c2_67, %c0_68] : memref<1x4x20x20xf32, #tpu.memory_space<vmem>>, vector<1x1x3x20xf32>
    %49 = vector.shape_cast %48 : vector<1x1x3x20xf32> to vector<3x20xf32>
    %50 = tpu.concatenate %43, %45, %47, %49 in 0 : vector<3x20xf32>, vector<3x20xf32>, vector<3x20xf32>, vector<3x20xf32> -> vector<12x20xf32>
    %51 = vector.extract_strided_slice %50 {offsets = [0, 0], sizes = [12, 18], strides = [1, 1]} : vector<12x20xf32> to vector<12x18xf32>
    %52 = vector.extract_strided_slice %50 {offsets = [0, 1], sizes = [12, 18], strides = [1, 1]} : vector<12x20xf32> to vector<12x18xf32>
    %53 = vector.extract_strided_slice %50 {offsets = [0, 2], sizes = [12, 18], strides = [1, 1]} : vector<12x20xf32> to vector<12x18xf32>
    %54 = tpu.concatenate %51, %52, %53 in 0 : vector<12x18xf32>, vector<12x18xf32>, vector<12x18xf32> -> vector<36x18xf32>
    %c0_69 = arith.constant 0 : index
    %c0_70 = arith.constant 0 : index
    %c15 = arith.constant 15 : index
    %c0_71 = arith.constant 0 : index
    %55 = vector.load %arg14[%c0_69, %c0_70, %c15, %c0_71] : memref<1x4x20x20xf32, #tpu.memory_space<vmem>>, vector<1x1x3x20xf32>
    %56 = vector.shape_cast %55 : vector<1x1x3x20xf32> to vector<3x20xf32>
    %c0_72 = arith.constant 0 : index
    %c1_73 = arith.constant 1 : index
    %c15_74 = arith.constant 15 : index
    %c0_75 = arith.constant 0 : index
    %57 = vector.load %arg14[%c0_72, %c1_73, %c15_74, %c0_75] : memref<1x4x20x20xf32, #tpu.memory_space<vmem>>, vector<1x1x3x20xf32>
    %58 = vector.shape_cast %57 : vector<1x1x3x20xf32> to vector<3x20xf32>
    %c0_76 = arith.constant 0 : index
    %c2_77 = arith.constant 2 : index
    %c15_78 = arith.constant 15 : index
    %c0_79 = arith.constant 0 : index
    %59 = vector.load %arg14[%c0_76, %c2_77, %c15_78, %c0_79] : memref<1x4x20x20xf32, #tpu.memory_space<vmem>>, vector<1x1x3x20xf32>
    %60 = vector.shape_cast %59 : vector<1x1x3x20xf32> to vector<3x20xf32>
    %c0_80 = arith.constant 0 : index
    %c3_81 = arith.constant 3 : index
    %c15_82 = arith.constant 15 : index
    %c0_83 = arith.constant 0 : index
    %61 = vector.load %arg14[%c0_80, %c3_81, %c15_82, %c0_83] : memref<1x4x20x20xf32, #tpu.memory_space<vmem>>, vector<1x1x3x20xf32>
    %62 = vector.shape_cast %61 : vector<1x1x3x20xf32> to vector<3x20xf32>
    %63 = tpu.concatenate %56, %58, %60, %62 in 0 : vector<3x20xf32>, vector<3x20xf32>, vector<3x20xf32>, vector<3x20xf32> -> vector<12x20xf32>
    %64 = vector.extract_strided_slice %63 {offsets = [0, 0], sizes = [12, 18], strides = [1, 1]} : vector<12x20xf32> to vector<12x18xf32>
    %65 = vector.extract_strided_slice %63 {offsets = [0, 1], sizes = [12, 18], strides = [1, 1]} : vector<12x20xf32> to vector<12x18xf32>
    %66 = vector.extract_strided_slice %63 {offsets = [0, 2], sizes = [12, 18], strides = [1, 1]} : vector<12x20xf32> to vector<12x18xf32>
    %67 = tpu.concatenate %64, %65, %66 in 0 : vector<12x18xf32>, vector<12x18xf32>, vector<12x18xf32> -> vector<36x18xf32>
    %68 = tpu.concatenate %54, %67 in 1 : vector<36x18xf32>, vector<36x18xf32> -> vector<36x36xf32>
    %cst_84 = arith.constant dense<0.000000e+00> : vector<16x36xf32>
    %69 = tpu.matmul %30, %68, %cst_84 {dimension_numbers = #tpu.dot_dimension_numbers<[1], [0], [0], [1], [0, 0, 1, 1], [], []>} : vector<16x36xf32>, vector<36x36xf32>, vector<16x36xf32> -> vector<16x36xf32>
    %70 = vector.broadcast %31 : vector<16x1xf32> to vector<16x36xf32>
    %71 = arith.addf %69, %70 : vector<16x36xf32>
    %cst_85 = arith.constant 0.000000e+00 : f32
    %72 = vector.broadcast %cst_85 : f32 to vector<16x36xf32>
    %73 = arith.maximumf %71, %72 : vector<16x36xf32>
    %cst_86 = arith.constant dense<0.000000e+00> : vector<16x36xf32>
    %74 = tpu.matmul %32, %73, %cst_86 {dimension_numbers = #tpu.dot_dimension_numbers<[1], [0], [0], [1], [0, 0, 1, 1], [], []>} : vector<16x16xf32>, vector<16x36xf32>, vector<16x36xf32> -> vector<16x36xf32>
    %75 = vector.broadcast %33 : vector<16x1xf32> to vector<16x36xf32>
    %76 = arith.addf %74, %75 : vector<16x36xf32>
    %cst_87 = arith.constant 0.000000e+00 : f32
    %77 = vector.broadcast %cst_87 : f32 to vector<16x36xf32>
    %78 = arith.maximumf %76, %77 : vector<16x36xf32>
    %cst_88 = arith.constant dense<0.000000e+00> : vector<2x36xf32>
    %79 = tpu.matmul %34, %78, %cst_88 {dimension_numbers = #tpu.dot_dimension_numbers<[1], [0], [0], [1], [0, 0, 1, 1], [], []>} : vector<2x16xf32>, vector<16x36xf32>, vector<2x36xf32> -> vector<2x36xf32>
    %80 = vector.broadcast %35 : vector<2x1xf32> to vector<2x36xf32>
    %81 = arith.addf %79, %80 : vector<2x36xf32>
    %cst_89 = arith.constant 0.000000e+00 : f32
    %82 = vector.broadcast %cst_89 : f32 to vector<2x36xf32>
    %83 = arith.maximumf %81, %82 : vector<2x36xf32>
    %84 = vector.extract_strided_slice %83 {offsets = [0, 0], sizes = [1, 18], strides = [1, 1]} : vector<2x36xf32> to vector<1x18xf32>
    %85 = vector.extract_strided_slice %83 {offsets = [1, 18], sizes = [1, 18], strides = [1, 1]} : vector<2x36xf32> to vector<1x18xf32>
    %86 = vector.shape_cast %84 : vector<1x18xf32> to vector<1x1x18xf32>
    %87 = vector.shape_cast %86 : vector<1x1x18xf32> to vector<1x1x18xf32>
    %88 = vector.broadcast %87 : vector<1x1x18xf32> to vector<4x1x18xf32>
    %c0_90 = arith.constant 0 : index
    %c0_91 = arith.constant 0 : index
    %c1_92 = arith.constant 1 : index
    %c1_93 = arith.constant 1 : index
    %89 = vector.load %arg14[%c0_90, %c0_91, %c1_92, %c1_93] : memref<1x4x20x20xf32, #tpu.memory_space<vmem>>, vector<1x4x1x18xf32>
    %90 = vector.shape_cast %89 : vector<1x4x1x18xf32> to vector<4x1x18xf32>
    %91 = vector.shape_cast %88 : vector<4x1x18xf32> to vector<1x4x1x18xf32>
    tpu.vector_store %arg14[%c0_90, %c0_91, %c1_92, %c1_93], %91 {strides = array<i32>} : memref<1x4x20x20xf32, #tpu.memory_space<vmem>>, vector<1x4x1x18xf32>,
    %92 = vector.shape_cast %85 : vector<1x18xf32> to vector<1x1x18xf32>
    %93 = vector.shape_cast %92 : vector<1x1x18xf32> to vector<1x1x18xf32>
    %94 = vector.broadcast %93 : vector<1x1x18xf32> to vector<4x1x18xf32>
    %c0_94 = arith.constant 0 : index
    %c0_95 = arith.constant 0 : index
    %c18 = arith.constant 18 : index
    %c1_96 = arith.constant 1 : index
    %95 = vector.load %arg14[%c0_94, %c0_95, %c18, %c1_96] : memref<1x4x20x20xf32, #tpu.memory_space<vmem>>, vector<1x4x1x18xf32>
    %96 = vector.shape_cast %95 : vector<1x4x1x18xf32> to vector<4x1x18xf32>
    %97 = vector.shape_cast %94 : vector<4x1x18xf32> to vector<1x4x1x18xf32>
    tpu.vector_store %arg14[%c0_94, %c0_95, %c18, %c1_96], %97 {strides = array<i32>} : memref<1x4x20x20xf32, #tpu.memory_space<vmem>>, vector<1x4x1x18xf32>,
    %c0_97 = arith.constant 0 : index
    %c0_98 = arith.constant 0 : index
    %c0_99 = arith.constant 0 : index
    %c2_100 = arith.constant 2 : index
    %98 = vector.load %arg14[%c0_97, %c0_98, %c0_99, %c2_100] : memref<1x4x20x20xf32, #tpu.memory_space<vmem>>, vector<1x1x20x3xf32>
    %99 = vector.shape_cast %98 : vector<1x1x20x3xf32> to vector<20x3xf32>
    %c0_101 = arith.constant 0 : index
    %c1_102 = arith.constant 1 : index
    %c0_103 = arith.constant 0 : index
    %c2_104 = arith.constant 2 : index
    %100 = vector.load %arg14[%c0_101, %c1_102, %c0_103, %c2_104] : memref<1x4x20x20xf32, #tpu.memory_space<vmem>>, vector<1x1x20x3xf32>
    %101 = vector.shape_cast %100 : vector<1x1x20x3xf32> to vector<20x3xf32>
    %c0_105 = arith.constant 0 : index
    %c2_106 = arith.constant 2 : index
    %c0_107 = arith.constant 0 : index
    %c2_108 = arith.constant 2 : index
    %102 = vector.load %arg14[%c0_105, %c2_106, %c0_107, %c2_108] : memref<1x4x20x20xf32, #tpu.memory_space<vmem>>, vector<1x1x20x3xf32>
    %103 = vector.shape_cast %102 : vector<1x1x20x3xf32> to vector<20x3xf32>
    %c0_109 = arith.constant 0 : index
    %c3_110 = arith.constant 3 : index
    %c0_111 = arith.constant 0 : index
    %c2_112 = arith.constant 2 : index
    %104 = vector.load %arg14[%c0_109, %c3_110, %c0_111, %c2_112] : memref<1x4x20x20xf32, #tpu.memory_space<vmem>>, vector<1x1x20x3xf32>
    %105 = vector.shape_cast %104 : vector<1x1x20x3xf32> to vector<20x3xf32>
    %106 = tpu.concatenate %99, %101, %103, %105 in 1 : vector<20x3xf32>, vector<20x3xf32>, vector<20x3xf32>, vector<20x3xf32> -> vector<20x12xf32>
    %107 = tpu.transpose %106, [1, 0] : vector<20x12xf32> -> vector<12x20xf32>
    %108 = vector.extract_strided_slice %107 {offsets = [0, 0], sizes = [12, 18], strides = [1, 1]} : vector<12x20xf32> to vector<12x18xf32>
    %109 = vector.extract_strided_slice %107 {offsets = [0, 1], sizes = [12, 18], strides = [1, 1]} : vector<12x20xf32> to vector<12x18xf32>
    %110 = vector.extract_strided_slice %107 {offsets = [0, 2], sizes = [12, 18], strides = [1, 1]} : vector<12x20xf32> to vector<12x18xf32>
    %111 = tpu.concatenate %108, %109, %110 in 0 : vector<12x18xf32>, vector<12x18xf32>, vector<12x18xf32> -> vector<36x18xf32>
    %c0_113 = arith.constant 0 : index
    %c0_114 = arith.constant 0 : index
    %c0_115 = arith.constant 0 : index
    %c15_116 = arith.constant 15 : index
    %112 = vector.load %arg14[%c0_113, %c0_114, %c0_115, %c15_116] : memref<1x4x20x20xf32, #tpu.memory_space<vmem>>, vector<1x1x20x3xf32>
    %113 = vector.shape_cast %112 : vector<1x1x20x3xf32> to vector<20x3xf32>
    %c0_117 = arith.constant 0 : index
    %c1_118 = arith.constant 1 : index
    %c0_119 = arith.constant 0 : index
    %c15_120 = arith.constant 15 : index
    %114 = vector.load %arg14[%c0_117, %c1_118, %c0_119, %c15_120] : memref<1x4x20x20xf32, #tpu.memory_space<vmem>>, vector<1x1x20x3xf32>
    %115 = vector.shape_cast %114 : vector<1x1x20x3xf32> to vector<20x3xf32>
    %c0_121 = arith.constant 0 : index
    %c2_122 = arith.constant 2 : index
    %c0_123 = arith.constant 0 : index
    %c15_124 = arith.constant 15 : index
    %116 = vector.load %arg14[%c0_121, %c2_122, %c0_123, %c15_124] : memref<1x4x20x20xf32, #tpu.memory_space<vmem>>, vector<1x1x20x3xf32>
    %117 = vector.shape_cast %116 : vector<1x1x20x3xf32> to vector<20x3xf32>
    %c0_125 = arith.constant 0 : index
    %c3_126 = arith.constant 3 : index
    %c0_127 = arith.constant 0 : index
    %c15_128 = arith.constant 15 : index
    %118 = vector.load %arg14[%c0_125, %c3_126, %c0_127, %c15_128] : memref<1x4x20x20xf32, #tpu.memory_space<vmem>>, vector<1x1x20x3xf32>
    %119 = vector.shape_cast %118 : vector<1x1x20x3xf32> to vector<20x3xf32>
    %120 = tpu.concatenate %113, %115, %117, %119 in 1 : vector<20x3xf32>, vector<20x3xf32>, vector<20x3xf32>, vector<20x3xf32> -> vector<20x12xf32>
    %121 = tpu.transpose %120, [1, 0] : vector<20x12xf32> -> vector<12x20xf32>
    %122 = vector.extract_strided_slice %121 {offsets = [0, 0], sizes = [12, 18], strides = [1, 1]} : vector<12x20xf32> to vector<12x18xf32>
    %123 = vector.extract_strided_slice %121 {offsets = [0, 1], sizes = [12, 18], strides = [1, 1]} : vector<12x20xf32> to vector<12x18xf32>
    %124 = vector.extract_strided_slice %121 {offsets = [0, 2], sizes = [12, 18], strides = [1, 1]} : vector<12x20xf32> to vector<12x18xf32>
    %125 = tpu.concatenate %122, %123, %124 in 0 : vector<12x18xf32>, vector<12x18xf32>, vector<12x18xf32> -> vector<36x18xf32>
    %126 = tpu.concatenate %111, %125 in 1 : vector<36x18xf32>, vector<36x18xf32> -> vector<36x36xf32>
    %cst_129 = arith.constant dense<0.000000e+00> : vector<16x36xf32>
    %127 = tpu.matmul %36, %126, %cst_129 {dimension_numbers = #tpu.dot_dimension_numbers<[1], [0], [0], [1], [0, 0, 1, 1], [], []>} : vector<16x36xf32>, vector<36x36xf32>, vector<16x36xf32> -> vector<16x36xf32>
    %128 = vector.broadcast %37 : vector<16x1xf32> to vector<16x36xf32>
    %129 = arith.addf %127, %128 : vector<16x36xf32>
    %cst_130 = arith.constant 0.000000e+00 : f32
    %130 = vector.broadcast %cst_130 : f32 to vector<16x36xf32>
    %131 = arith.maximumf %129, %130 : vector<16x36xf32>
    %cst_131 = arith.constant dense<0.000000e+00> : vector<16x36xf32>
    %132 = tpu.matmul %38, %131, %cst_131 {dimension_numbers = #tpu.dot_dimension_numbers<[1], [0], [0], [1], [0, 0, 1, 1], [], []>} : vector<16x16xf32>, vector<16x36xf32>, vector<16x36xf32> -> vector<16x36xf32>
    %133 = vector.broadcast %39 : vector<16x1xf32> to vector<16x36xf32>
    %134 = arith.addf %132, %133 : vector<16x36xf32>
    %cst_132 = arith.constant 0.000000e+00 : f32
    %135 = vector.broadcast %cst_132 : f32 to vector<16x36xf32>
    %136 = arith.maximumf %134, %135 : vector<16x36xf32>
    %cst_133 = arith.constant dense<0.000000e+00> : vector<2x36xf32>
    %137 = tpu.matmul %40, %136, %cst_133 {dimension_numbers = #tpu.dot_dimension_numbers<[1], [0], [0], [1], [0, 0, 1, 1], [], []>} : vector<2x16xf32>, vector<16x36xf32>, vector<2x36xf32> -> vector<2x36xf32>
    %138 = vector.broadcast %41 : vector<2x1xf32> to vector<2x36xf32>
    %139 = arith.addf %137, %138 : vector<2x36xf32>
    %cst_134 = arith.constant 0.000000e+00 : f32
    %140 = vector.broadcast %cst_134 : f32 to vector<2x36xf32>
    %141 = arith.maximumf %139, %140 : vector<2x36xf32>
    %142 = vector.extract_strided_slice %141 {offsets = [0, 0], sizes = [1, 18], strides = [1, 1]} : vector<2x36xf32> to vector<1x18xf32>
    %143 = tpu.transpose %142, [1, 0] : vector<1x18xf32> -> vector<18x1xf32>
    %144 = vector.extract_strided_slice %141 {offsets = [1, 18], sizes = [1, 18], strides = [1, 1]} : vector<2x36xf32> to vector<1x18xf32>
    %145 = tpu.transpose %144, [1, 0] : vector<1x18xf32> -> vector<18x1xf32>
    %146 = vector.shape_cast %143 : vector<18x1xf32> to vector<1x18x1xf32>
    %147 = vector.shape_cast %146 : vector<1x18x1xf32> to vector<1x18x1xf32>
    %148 = vector.broadcast %147 : vector<1x18x1xf32> to vector<4x18x1xf32>
    %c0_135 = arith.constant 0 : index
    %c0_136 = arith.constant 0 : index
    %c1_137 = arith.constant 1 : index
    %c1_138 = arith.constant 1 : index
    %149 = vector.load %arg14[%c0_135, %c0_136, %c1_137, %c1_138] : memref<1x4x20x20xf32, #tpu.memory_space<vmem>>, vector<1x4x18x1xf32>
    %150 = vector.shape_cast %149 : vector<1x4x18x1xf32> to vector<4x18x1xf32>
    %151 = vector.shape_cast %148 : vector<4x18x1xf32> to vector<1x4x18x1xf32>
    tpu.vector_store %arg14[%c0_135, %c0_136, %c1_137, %c1_138], %151 {strides = array<i32>} : memref<1x4x20x20xf32, #tpu.memory_space<vmem>>, vector<1x4x18x1xf32>,
    %152 = vector.shape_cast %145 : vector<18x1xf32> to vector<1x18x1xf32>
    %153 = vector.shape_cast %152 : vector<1x18x1xf32> to vector<1x18x1xf32>
    %154 = vector.broadcast %153 : vector<1x18x1xf32> to vector<4x18x1xf32>
    %c0_139 = arith.constant 0 : index
    %c0_140 = arith.constant 0 : index
    %c1_141 = arith.constant 1 : index
    %c18_142 = arith.constant 18 : index
    %155 = vector.load %arg14[%c0_139, %c0_140, %c1_141, %c18_142] : memref<1x4x20x20xf32, #tpu.memory_space<vmem>>, vector<1x4x18x1xf32>
    %156 = vector.shape_cast %155 : vector<1x4x18x1xf32> to vector<4x18x1xf32>
    %157 = vector.shape_cast %154 : vector<4x18x1xf32> to vector<1x4x18x1xf32>
    tpu.vector_store %arg14[%c0_139, %c0_140, %c1_141, %c18_142], %157 {strides = array<i32>} : memref<1x4x20x20xf32, #tpu.memory_space<vmem>>, vector<1x4x18x1xf32>,
    %c0_143 = arith.constant 0 : index
    %c0_144 = arith.constant 0 : index
    %c1_145 = arith.constant 1 : index
    %c0_146 = arith.constant 0 : index
    %158 = vector.load %arg14[%c0_143, %c0_144, %c1_145, %c0_146] : memref<1x4x20x20xf32, #tpu.memory_space<vmem>>, vector<1x1x3x20xf32>
    %159 = vector.shape_cast %158 : vector<1x1x3x20xf32> to vector<3x20xf32>
    %c0_147 = arith.constant 0 : index
    %c1_148 = arith.constant 1 : index
    %c1_149 = arith.constant 1 : index
    %c0_150 = arith.constant 0 : index
    %160 = vector.load %arg14[%c0_147, %c1_148, %c1_149, %c0_150] : memref<1x4x20x20xf32, #tpu.memory_space<vmem>>, vector<1x1x3x20xf32>
    %161 = vector.shape_cast %160 : vector<1x1x3x20xf32> to vector<3x20xf32>
    %c0_151 = arith.constant 0 : index
    %c2_152 = arith.constant 2 : index
    %c1_153 = arith.constant 1 : index
    %c0_154 = arith.constant 0 : index
    %162 = vector.load %arg14[%c0_151, %c2_152, %c1_153, %c0_154] : memref<1x4x20x20xf32, #tpu.memory_space<vmem>>, vector<1x1x3x20xf32>
    %163 = vector.shape_cast %162 : vector<1x1x3x20xf32> to vector<3x20xf32>
    %c0_155 = arith.constant 0 : index
    %c3_156 = arith.constant 3 : index
    %c1_157 = arith.constant 1 : index
    %c0_158 = arith.constant 0 : index
    %164 = vector.load %arg14[%c0_155, %c3_156, %c1_157, %c0_158] : memref<1x4x20x20xf32, #tpu.memory_space<vmem>>, vector<1x1x3x20xf32>
    %165 = vector.shape_cast %164 : vector<1x1x3x20xf32> to vector<3x20xf32>
    %166 = tpu.concatenate %159, %161, %163, %165 in 0 : vector<3x20xf32>, vector<3x20xf32>, vector<3x20xf32>, vector<3x20xf32> -> vector<12x20xf32>
    %167 = vector.extract_strided_slice %166 {offsets = [0, 0], sizes = [12, 18], strides = [1, 1]} : vector<12x20xf32> to vector<12x18xf32>
    %168 = vector.extract_strided_slice %166 {offsets = [0, 1], sizes = [12, 18], strides = [1, 1]} : vector<12x20xf32> to vector<12x18xf32>
    %169 = vector.extract_strided_slice %166 {offsets = [0, 2], sizes = [12, 18], strides = [1, 1]} : vector<12x20xf32> to vector<12x18xf32>
    %170 = tpu.concatenate %167, %168, %169 in 0 : vector<12x18xf32>, vector<12x18xf32>, vector<12x18xf32> -> vector<36x18xf32>
    %c0_159 = arith.constant 0 : index
    %c0_160 = arith.constant 0 : index
    %c16 = arith.constant 16 : index
    %c0_161 = arith.constant 0 : index
    %171 = vector.load %arg14[%c0_159, %c0_160, %c16, %c0_161] : memref<1x4x20x20xf32, #tpu.memory_space<vmem>>, vector<1x1x3x20xf32>
    %172 = vector.shape_cast %171 : vector<1x1x3x20xf32> to vector<3x20xf32>
    %c0_162 = arith.constant 0 : index
    %c1_163 = arith.constant 1 : index
    %c16_164 = arith.constant 16 : index
    %c0_165 = arith.constant 0 : index
    %173 = vector.load %arg14[%c0_162, %c1_163, %c16_164, %c0_165] : memref<1x4x20x20xf32, #tpu.memory_space<vmem>>, vector<1x1x3x20xf32>
    %174 = vector.shape_cast %173 : vector<1x1x3x20xf32> to vector<3x20xf32>
    %c0_166 = arith.constant 0 : index
    %c2_167 = arith.constant 2 : index
    %c16_168 = arith.constant 16 : index
    %c0_169 = arith.constant 0 : index
    %175 = vector.load %arg14[%c0_166, %c2_167, %c16_168, %c0_169] : memref<1x4x20x20xf32, #tpu.memory_space<vmem>>, vector<1x1x3x20xf32>
    %176 = vector.shape_cast %175 : vector<1x1x3x20xf32> to vector<3x20xf32>
    %c0_170 = arith.constant 0 : index
    %c3_171 = arith.constant 3 : index
    %c16_172 = arith.constant 16 : index
    %c0_173 = arith.constant 0 : index
    %177 = vector.load %arg14[%c0_170, %c3_171, %c16_172, %c0_173] : memref<1x4x20x20xf32, #tpu.memory_space<vmem>>, vector<1x1x3x20xf32>
    %178 = vector.shape_cast %177 : vector<1x1x3x20xf32> to vector<3x20xf32>
    %179 = tpu.concatenate %172, %174, %176, %178 in 0 : vector<3x20xf32>, vector<3x20xf32>, vector<3x20xf32>, vector<3x20xf32> -> vector<12x20xf32>
    %180 = vector.extract_strided_slice %179 {offsets = [0, 0], sizes = [12, 18], strides = [1, 1]} : vector<12x20xf32> to vector<12x18xf32>
    %181 = vector.extract_strided_slice %179 {offsets = [0, 1], sizes = [12, 18], strides = [1, 1]} : vector<12x20xf32> to vector<12x18xf32>
    %182 = vector.extract_strided_slice %179 {offsets = [0, 2], sizes = [12, 18], strides = [1, 1]} : vector<12x20xf32> to vector<12x18xf32>
    %183 = tpu.concatenate %180, %181, %182 in 0 : vector<12x18xf32>, vector<12x18xf32>, vector<12x18xf32> -> vector<36x18xf32>
    %184 = tpu.concatenate %170, %183 in 1 : vector<36x18xf32>, vector<36x18xf32> -> vector<36x36xf32>
    %cst_174 = arith.constant dense<0.000000e+00> : vector<16x36xf32>
    %185 = tpu.matmul %30, %184, %cst_174 {dimension_numbers = #tpu.dot_dimension_numbers<[1], [0], [0], [1], [0, 0, 1, 1], [], []>} : vector<16x36xf32>, vector<36x36xf32>, vector<16x36xf32> -> vector<16x36xf32>
    %186 = vector.broadcast %31 : vector<16x1xf32> to vector<16x36xf32>
    %187 = arith.addf %185, %186 : vector<16x36xf32>
    %cst_175 = arith.constant 0.000000e+00 : f32
    %188 = vector.broadcast %cst_175 : f32 to vector<16x36xf32>
    %189 = arith.maximumf %187, %188 : vector<16x36xf32>
    %cst_176 = arith.constant dense<0.000000e+00> : vector<16x36xf32>
    %190 = tpu.matmul %32, %189, %cst_176 {dimension_numbers = #tpu.dot_dimension_numbers<[1], [0], [0], [1], [0, 0, 1, 1], [], []>} : vector<16x16xf32>, vector<16x36xf32>, vector<16x36xf32> -> vector<16x36xf32>
    %191 = vector.broadcast %33 : vector<16x1xf32> to vector<16x36xf32>
    %192 = arith.addf %190, %191 : vector<16x36xf32>
    %cst_177 = arith.constant 0.000000e+00 : f32
    %193 = vector.broadcast %cst_177 : f32 to vector<16x36xf32>
    %194 = arith.maximumf %192, %193 : vector<16x36xf32>
    %cst_178 = arith.constant dense<0.000000e+00> : vector<2x36xf32>
    %195 = tpu.matmul %34, %194, %cst_178 {dimension_numbers = #tpu.dot_dimension_numbers<[1], [0], [0], [1], [0, 0, 1, 1], [], []>} : vector<2x16xf32>, vector<16x36xf32>, vector<2x36xf32> -> vector<2x36xf32>
    %196 = vector.broadcast %35 : vector<2x1xf32> to vector<2x36xf32>
    %197 = arith.addf %195, %196 : vector<2x36xf32>
    %cst_179 = arith.constant 0.000000e+00 : f32
    %198 = vector.broadcast %cst_179 : f32 to vector<2x36xf32>
    %199 = arith.maximumf %197, %198 : vector<2x36xf32>
    %200 = vector.extract_strided_slice %199 {offsets = [0, 0], sizes = [1, 18], strides = [1, 1]} : vector<2x36xf32> to vector<1x18xf32>
    %201 = vector.extract_strided_slice %199 {offsets = [1, 18], sizes = [1, 18], strides = [1, 1]} : vector<2x36xf32> to vector<1x18xf32>
    %202 = vector.shape_cast %200 : vector<1x18xf32> to vector<1x1x18xf32>
    %203 = vector.shape_cast %202 : vector<1x1x18xf32> to vector<1x1x18xf32>
    %204 = vector.broadcast %203 : vector<1x1x18xf32> to vector<4x1x18xf32>
    %c0_180 = arith.constant 0 : index
    %c0_181 = arith.constant 0 : index
    %c0_182 = arith.constant 0 : index
    %c1_183 = arith.constant 1 : index
    %205 = vector.load %arg14[%c0_180, %c0_181, %c0_182, %c1_183] : memref<1x4x20x20xf32, #tpu.memory_space<vmem>>, vector<1x4x1x18xf32>
    %206 = vector.shape_cast %205 : vector<1x4x1x18xf32> to vector<4x1x18xf32>
    %207 = vector.shape_cast %204 : vector<4x1x18xf32> to vector<1x4x1x18xf32>
    tpu.vector_store %arg14[%c0_180, %c0_181, %c0_182, %c1_183], %207 {strides = array<i32>} : memref<1x4x20x20xf32, #tpu.memory_space<vmem>>, vector<1x4x1x18xf32>,
    %208 = vector.shape_cast %201 : vector<1x18xf32> to vector<1x1x18xf32>
    %209 = vector.shape_cast %208 : vector<1x1x18xf32> to vector<1x1x18xf32>
    %210 = vector.broadcast %209 : vector<1x1x18xf32> to vector<4x1x18xf32>
    %c0_184 = arith.constant 0 : index
    %c0_185 = arith.constant 0 : index
    %c19 = arith.constant 19 : index
    %c1_186 = arith.constant 1 : index
    %211 = vector.load %arg14[%c0_184, %c0_185, %c19, %c1_186] : memref<1x4x20x20xf32, #tpu.memory_space<vmem>>, vector<1x4x1x18xf32>
    %212 = vector.shape_cast %211 : vector<1x4x1x18xf32> to vector<4x1x18xf32>
    %213 = vector.shape_cast %210 : vector<4x1x18xf32> to vector<1x4x1x18xf32>
    tpu.vector_store %arg14[%c0_184, %c0_185, %c19, %c1_186], %213 {strides = array<i32>} : memref<1x4x20x20xf32, #tpu.memory_space<vmem>>, vector<1x4x1x18xf32>,
    %c0_187 = arith.constant 0 : index
    %c0_188 = arith.constant 0 : index
    %c0_189 = arith.constant 0 : index
    %c1_190 = arith.constant 1 : index
    %214 = vector.load %arg14[%c0_187, %c0_188, %c0_189, %c1_190] : memref<1x4x20x20xf32, #tpu.memory_space<vmem>>, vector<1x1x20x3xf32>
    %215 = vector.shape_cast %214 : vector<1x1x20x3xf32> to vector<20x3xf32>
    %c0_191 = arith.constant 0 : index
    %c1_192 = arith.constant 1 : index
    %c0_193 = arith.constant 0 : index
    %c1_194 = arith.constant 1 : index
    %216 = vector.load %arg14[%c0_191, %c1_192, %c0_193, %c1_194] : memref<1x4x20x20xf32, #tpu.memory_space<vmem>>, vector<1x1x20x3xf32>
    %217 = vector.shape_cast %216 : vector<1x1x20x3xf32> to vector<20x3xf32>
    %c0_195 = arith.constant 0 : index
    %c2_196 = arith.constant 2 : index
    %c0_197 = arith.constant 0 : index
    %c1_198 = arith.constant 1 : index
    %218 = vector.load %arg14[%c0_195, %c2_196, %c0_197, %c1_198] : memref<1x4x20x20xf32, #tpu.memory_space<vmem>>, vector<1x1x20x3xf32>
    %219 = vector.shape_cast %218 : vector<1x1x20x3xf32> to vector<20x3xf32>
    %c0_199 = arith.constant 0 : index
    %c3_200 = arith.constant 3 : index
    %c0_201 = arith.constant 0 : index
    %c1_202 = arith.constant 1 : index
    %220 = vector.load %arg14[%c0_199, %c3_200, %c0_201, %c1_202] : memref<1x4x20x20xf32, #tpu.memory_space<vmem>>, vector<1x1x20x3xf32>
    %221 = vector.shape_cast %220 : vector<1x1x20x3xf32> to vector<20x3xf32>
    %222 = tpu.concatenate %215, %217, %219, %221 in 1 : vector<20x3xf32>, vector<20x3xf32>, vector<20x3xf32>, vector<20x3xf32> -> vector<20x12xf32>
    %223 = tpu.transpose %222, [1, 0] : vector<20x12xf32> -> vector<12x20xf32>
    %224 = vector.extract_strided_slice %223 {offsets = [0, 0], sizes = [12, 18], strides = [1, 1]} : vector<12x20xf32> to vector<12x18xf32>
    %225 = vector.extract_strided_slice %223 {offsets = [0, 1], sizes = [12, 18], strides = [1, 1]} : vector<12x20xf32> to vector<12x18xf32>
    %226 = vector.extract_strided_slice %223 {offsets = [0, 2], sizes = [12, 18], strides = [1, 1]} : vector<12x20xf32> to vector<12x18xf32>
    %227 = tpu.concatenate %224, %225, %226 in 0 : vector<12x18xf32>, vector<12x18xf32>, vector<12x18xf32> -> vector<36x18xf32>
    %c0_203 = arith.constant 0 : index
    %c0_204 = arith.constant 0 : index
    %c0_205 = arith.constant 0 : index
    %c16_206 = arith.constant 16 : index
    %228 = vector.load %arg14[%c0_203, %c0_204, %c0_205, %c16_206] : memref<1x4x20x20xf32, #tpu.memory_space<vmem>>, vector<1x1x20x3xf32>
    %229 = vector.shape_cast %228 : vector<1x1x20x3xf32> to vector<20x3xf32>
    %c0_207 = arith.constant 0 : index
    %c1_208 = arith.constant 1 : index
    %c0_209 = arith.constant 0 : index
    %c16_210 = arith.constant 16 : index
    %230 = vector.load %arg14[%c0_207, %c1_208, %c0_209, %c16_210] : memref<1x4x20x20xf32, #tpu.memory_space<vmem>>, vector<1x1x20x3xf32>
    %231 = vector.shape_cast %230 : vector<1x1x20x3xf32> to vector<20x3xf32>
    %c0_211 = arith.constant 0 : index
    %c2_212 = arith.constant 2 : index
    %c0_213 = arith.constant 0 : index
    %c16_214 = arith.constant 16 : index
    %232 = vector.load %arg14[%c0_211, %c2_212, %c0_213, %c16_214] : memref<1x4x20x20xf32, #tpu.memory_space<vmem>>, vector<1x1x20x3xf32>
    %233 = vector.shape_cast %232 : vector<1x1x20x3xf32> to vector<20x3xf32>
    %c0_215 = arith.constant 0 : index
    %c3_216 = arith.constant 3 : index
    %c0_217 = arith.constant 0 : index
    %c16_218 = arith.constant 16 : index
    %234 = vector.load %arg14[%c0_215, %c3_216, %c0_217, %c16_218] : memref<1x4x20x20xf32, #tpu.memory_space<vmem>>, vector<1x1x20x3xf32>
    %235 = vector.shape_cast %234 : vector<1x1x20x3xf32> to vector<20x3xf32>
    %236 = tpu.concatenate %229, %231, %233, %235 in 1 : vector<20x3xf32>, vector<20x3xf32>, vector<20x3xf32>, vector<20x3xf32> -> vector<20x12xf32>
    %237 = tpu.transpose %236, [1, 0] : vector<20x12xf32> -> vector<12x20xf32>
    %238 = vector.extract_strided_slice %237 {offsets = [0, 0], sizes = [12, 18], strides = [1, 1]} : vector<12x20xf32> to vector<12x18xf32>
    %239 = vector.extract_strided_slice %237 {offsets = [0, 1], sizes = [12, 18], strides = [1, 1]} : vector<12x20xf32> to vector<12x18xf32>
    %240 = vector.extract_strided_slice %237 {offsets = [0, 2], sizes = [12, 18], strides = [1, 1]} : vector<12x20xf32> to vector<12x18xf32>
    %241 = tpu.concatenate %238, %239, %240 in 0 : vector<12x18xf32>, vector<12x18xf32>, vector<12x18xf32> -> vector<36x18xf32>
    %242 = tpu.concatenate %227, %241 in 1 : vector<36x18xf32>, vector<36x18xf32> -> vector<36x36xf32>
    %cst_219 = arith.constant dense<0.000000e+00> : vector<16x36xf32>
    %243 = tpu.matmul %36, %242, %cst_219 {dimension_numbers = #tpu.dot_dimension_numbers<[1], [0], [0], [1], [0, 0, 1, 1], [], []>} : vector<16x36xf32>, vector<36x36xf32>, vector<16x36xf32> -> vector<16x36xf32>
    %244 = vector.broadcast %37 : vector<16x1xf32> to vector<16x36xf32>
    %245 = arith.addf %243, %244 : vector<16x36xf32>
    %cst_220 = arith.constant 0.000000e+00 : f32
    %246 = vector.broadcast %cst_220 : f32 to vector<16x36xf32>
    %247 = arith.maximumf %245, %246 : vector<16x36xf32>
    %cst_221 = arith.constant dense<0.000000e+00> : vector<16x36xf32>
    %248 = tpu.matmul %38, %247, %cst_221 {dimension_numbers = #tpu.dot_dimension_numbers<[1], [0], [0], [1], [0, 0, 1, 1], [], []>} : vector<16x16xf32>, vector<16x36xf32>, vector<16x36xf32> -> vector<16x36xf32>
    %249 = vector.broadcast %39 : vector<16x1xf32> to vector<16x36xf32>
    %250 = arith.addf %248, %249 : vector<16x36xf32>
    %cst_222 = arith.constant 0.000000e+00 : f32
    %251 = vector.broadcast %cst_222 : f32 to vector<16x36xf32>
    %252 = arith.maximumf %250, %251 : vector<16x36xf32>
    %cst_223 = arith.constant dense<0.000000e+00> : vector<2x36xf32>
    %253 = tpu.matmul %40, %252, %cst_223 {dimension_numbers = #tpu.dot_dimension_numbers<[1], [0], [0], [1], [0, 0, 1, 1], [], []>} : vector<2x16xf32>, vector<16x36xf32>, vector<2x36xf32> -> vector<2x36xf32>
    %254 = vector.broadcast %41 : vector<2x1xf32> to vector<2x36xf32>
    %255 = arith.addf %253, %254 : vector<2x36xf32>
    %cst_224 = arith.constant 0.000000e+00 : f32
    %256 = vector.broadcast %cst_224 : f32 to vector<2x36xf32>
    %257 = arith.maximumf %255, %256 : vector<2x36xf32>
    %258 = vector.extract_strided_slice %257 {offsets = [0, 0], sizes = [1, 18], strides = [1, 1]} : vector<2x36xf32> to vector<1x18xf32>
    %259 = tpu.transpose %258, [1, 0] : vector<1x18xf32> -> vector<18x1xf32>
    %260 = vector.extract_strided_slice %257 {offsets = [1, 18], sizes = [1, 18], strides = [1, 1]} : vector<2x36xf32> to vector<1x18xf32>
    %261 = tpu.transpose %260, [1, 0] : vector<1x18xf32> -> vector<18x1xf32>
    %262 = vector.shape_cast %259 : vector<18x1xf32> to vector<1x18x1xf32>
    %263 = vector.shape_cast %262 : vector<1x18x1xf32> to vector<1x18x1xf32>
    %264 = vector.broadcast %263 : vector<1x18x1xf32> to vector<4x18x1xf32>
    %c0_225 = arith.constant 0 : index
    %c0_226 = arith.constant 0 : index
    %c1_227 = arith.constant 1 : index
    %c0_228 = arith.constant 0 : index
    %265 = vector.load %arg14[%c0_225, %c0_226, %c1_227, %c0_228] : memref<1x4x20x20xf32, #tpu.memory_space<vmem>>, vector<1x4x18x1xf32>
    %266 = vector.shape_cast %265 : vector<1x4x18x1xf32> to vector<4x18x1xf32>
    %267 = vector.shape_cast %264 : vector<4x18x1xf32> to vector<1x4x18x1xf32>
    tpu.vector_store %arg14[%c0_225, %c0_226, %c1_227, %c0_228], %267 {strides = array<i32>} : memref<1x4x20x20xf32, #tpu.memory_space<vmem>>, vector<1x4x18x1xf32>,
    %268 = vector.shape_cast %261 : vector<18x1xf32> to vector<1x18x1xf32>
    %269 = vector.shape_cast %268 : vector<1x18x1xf32> to vector<1x18x1xf32>
    %270 = vector.broadcast %269 : vector<1x18x1xf32> to vector<4x18x1xf32>
    %c0_229 = arith.constant 0 : index
    %c0_230 = arith.constant 0 : index
    %c1_231 = arith.constant 1 : index
    %c19_232 = arith.constant 19 : index
    %271 = vector.load %arg14[%c0_229, %c0_230, %c1_231, %c19_232] : memref<1x4x20x20xf32, #tpu.memory_space<vmem>>, vector<1x4x18x1xf32>
    %272 = vector.shape_cast %271 : vector<1x4x18x1xf32> to vector<4x18x1xf32>
    %273 = vector.shape_cast %270 : vector<4x18x1xf32> to vector<1x4x18x1xf32>
    tpu.vector_store %arg14[%c0_229, %c0_230, %c1_231, %c19_232], %273 {strides = array<i32>} : memref<1x4x20x20xf32, #tpu.memory_space<vmem>>, vector<1x4x18x1xf32>,
    return
  }
  func.func @transform_0(%arg0: i32) -> (i32, i32, i32, i32) {
    %c0_i32 = arith.constant 0 : i32
    %c0_i32_0 = arith.constant 0 : i32
    %c0_i32_1 = arith.constant 0 : i32
    %c0_i32_2 = arith.constant 0 : i32
    return %arg0, %c0_i32, %c0_i32_0, %c0_i32_1 : i32, i32, i32, i32
  }
  func.func @transform_1(%arg0: i32) -> (i32, i32) {
    %c0_i32 = arith.constant 0 : i32
    %c0_i32_0 = arith.constant 0 : i32
    %c0_i32_1 = arith.constant 0 : i32
    return %c0_i32, %c0_i32_0 : i32, i32
  }
  func.func @transform_2(%arg0: i32) -> (i32, i32) {
    %c0_i32 = arith.constant 0 : i32
    %c0_i32_0 = arith.constant 0 : i32
    %c0_i32_1 = arith.constant 0 : i32
    return %c0_i32, %c0_i32_0 : i32, i32
  }
  func.func @transform_3(%arg0: i32) -> (i32, i32) {
    %c0_i32 = arith.constant 0 : i32
    %c0_i32_0 = arith.constant 0 : i32
    %c0_i32_1 = arith.constant 0 : i32
    return %c0_i32, %c0_i32_0 : i32, i32
  }
  func.func @transform_4(%arg0: i32) -> (i32, i32) {
    %c0_i32 = arith.constant 0 : i32
    %c0_i32_0 = arith.constant 0 : i32
    %c0_i32_1 = arith.constant 0 : i32
    return %c0_i32, %c0_i32_0 : i32, i32
  }
  func.func @transform_5(%arg0: i32) -> (i32, i32) {
    %c0_i32 = arith.constant 0 : i32
    %c0_i32_0 = arith.constant 0 : i32
    %c0_i32_1 = arith.constant 0 : i32
    return %c0_i32, %c0_i32_0 : i32, i32
  }
  func.func @transform_6(%arg0: i32) -> (i32, i32) {
    %c0_i32 = arith.constant 0 : i32
    %c0_i32_0 = arith.constant 0 : i32
    %c0_i32_1 = arith.constant 0 : i32
    return %c0_i32, %c0_i32_0 : i32, i32
  }
  func.func @transform_7(%arg0: i32) -> (i32, i32) {
    %c0_i32 = arith.constant 0 : i32
    %c0_i32_0 = arith.constant 0 : i32
    %c0_i32_1 = arith.constant 0 : i32
    return %c0_i32, %c0_i32_0 : i32, i32
  }
  func.func @transform_8(%arg0: i32) -> (i32, i32) {
    %c0_i32 = arith.constant 0 : i32
    %c0_i32_0 = arith.constant 0 : i32
    %c0_i32_1 = arith.constant 0 : i32
    return %c0_i32, %c0_i32_0 : i32, i32
  }
  func.func @transform_9(%arg0: i32) -> (i32, i32) {
    %c0_i32 = arith.constant 0 : i32
    %c0_i32_0 = arith.constant 0 : i32
    %c0_i32_1 = arith.constant 0 : i32
    return %c0_i32, %c0_i32_0 : i32, i32
  }
  func.func @transform_10(%arg0: i32) -> (i32, i32) {
    %c0_i32 = arith.constant 0 : i32
    %c0_i32_0 = arith.constant 0 : i32
    %c0_i32_1 = arith.constant 0 : i32
    return %c0_i32, %c0_i32_0 : i32, i32
  }
  func.func @transform_11(%arg0: i32) -> (i32, i32) {
    %c0_i32 = arith.constant 0 : i32
    %c0_i32_0 = arith.constant 0 : i32
    %c0_i32_1 = arith.constant 0 : i32
    return %c0_i32, %c0_i32_0 : i32, i32
  }
  func.func @transform_12(%arg0: i32) -> (i32, i32) {
    %c0_i32 = arith.constant 0 : i32
    %c0_i32_0 = arith.constant 0 : i32
    %c0_i32_1 = arith.constant 0 : i32
    return %c0_i32, %c0_i32_0 : i32, i32
  }
  func.func @transform_13(%arg0: i32) -> (i32, i32, i32, i32) {
    %c0_i32 = arith.constant 0 : i32
    %c0_i32_0 = arith.constant 0 : i32
    %c0_i32_1 = arith.constant 0 : i32
    %c0_i32_2 = arith.constant 0 : i32
    return %arg0, %c0_i32, %c0_i32_0, %c0_i32_1 : i32, i32, i32, i32
  }
}

</mosaic_0001>

<llo_original>
// kernel: _lambda_.1
$region0: #{_lambda_.1}
  #allocation0 [shape = 'u32[]', space=smem, size = 0x4, offset = 0x4, fixed_abs, tag = 'smem constant byte address 0x4 - core index']
  #allocation1 [shape = 'u32[144,128]{1,0:T(1,128)}', space=vmem, size = 0x12000, scoped, tag = 'internal scratch']
  %s0 = inlined_call_operand.vmem [shape: f32[2,4,16,16], index: 0, kind: input, shape index: {}]
  %s1 = inlined_call_operand.vmem [shape: f32[16,36], index: 1, kind: input, shape index: {}]
  %s2 = inlined_call_operand.vmem [shape: f32[16,1], index: 2, kind: input, shape index: {}]
  %s3 = inlined_call_operand.vmem [shape: f32[16,16], index: 3, kind: input, shape index: {}]
  %s4 = inlined_call_operand.vmem [shape: f32[16,1], index: 4, kind: input, shape index: {}]
  %s5 = inlined_call_operand.vmem [shape: f32[2,16], index: 5, kind: input, shape index: {}]
  %s6 = inlined_call_operand.vmem [shape: f32[2,1], index: 6, kind: input, shape index: {}]
  %s7 = inlined_call_operand.vmem [shape: f32[16,36], index: 7, kind: input, shape index: {}]
  %s8 = inlined_call_operand.vmem [shape: f32[16,1], index: 8, kind: input, shape index: {}]
  %s9 = inlined_call_operand.vmem [shape: f32[16,16], index: 9, kind: input, shape index: {}]
  %s10 = inlined_call_operand.vmem [shape: f32[16,1], index: 10, kind: input, shape index: {}]
  %s11 = inlined_call_operand.vmem [shape: f32[2,16], index: 11, kind: input, shape index: {}]
  %s12 = inlined_call_operand.vmem [shape: f32[2,1], index: 12, kind: input, shape index: {}]
  %s13 = inlined_call_operand.vmem [shape: f32[2,4,20,20], index: 13, kind: output, shape index: {}]
  %s14 = sld [smem:[#allocation0]]
  $region85: #{_lambda_.1} parent=0
    _
  %s16 = ssub.s32 1, %s14
  %s17 = scalar_select 0, %s16, %s14
  loop: start=0, step=1, limit=4
  $region2: #{_lambda_.1} parent=0 // loop_pre_header
    _
  $region3: #{_lambda_.1} parent=0 // loop_header
    %s19 = sphi 0, %s23
    %p20 = scmp.ge.s32.totalorder %s19, 4
    %s29 = sphi 0, %s31
    %s32 = sphi 0, %s29
    %s33 = sphi 0, %s32
    %s49 = sphi 0, %s33
    %s53 = sphi 0, %s53
    %s55 = sphi 0, %s53
    %s56 = sphi 0, %s55
    %s70 = sphi 0, %s56
    %s74 = sphi 0, %s74
    %s76 = sphi 0, %s74
    %s77 = sphi 0, %s76
    %s91 = sphi 0, %s77
    %s95 = sphi 0, %s95
    %s97 = sphi 0, %s95
    %s98 = sphi 0, %s97
    %s112 = sphi 0, %s98
    %s116 = sphi 0, %s116
    %s118 = sphi 0, %s116
    %s119 = sphi 0, %s118
    %s133 = sphi 0, %s119
    %s137 = sphi 0, %s137
    %s139 = sphi 0, %s137
    %s140 = sphi 0, %s139
    %s154 = sphi 0, %s140
    %s158 = sphi 0, %s158
    %s160 = sphi 0, %s158
    %s161 = sphi 0, %s160
    %s175 = sphi 0, %s161
    %s179 = sphi 0, %s179
    %s181 = sphi 0, %s179
    %s182 = sphi 0, %s181
    %s196 = sphi 0, %s182
    %s200 = sphi 0, %s200
    %s202 = sphi 0, %s200
    %s203 = sphi 0, %s202
    %s217 = sphi 0, %s203
    %s221 = sphi 0, %s221
    %s223 = sphi 0, %s221
    %s224 = sphi 0, %s223
    %s238 = sphi 0, %s224
    %s242 = sphi 0, %s242
    %s244 = sphi 0, %s242
    %s245 = sphi 0, %s244
    %s259 = sphi 0, %s245
    %s263 = sphi 0, %s263
    %s265 = sphi 0, %s263
    %s266 = sphi 0, %s265
    %s280 = sphi 0, %s266
    %s284 = sphi 0, %s284
    %s286 = sphi 0, %s284
    %s287 = sphi 0, %s286
    %s301 = sphi 0, %s287
    %s307 = sphi 0, %s309
    %s310 = sphi 0, %s307
    %s311 = sphi 0, %s310
    %s327 = sphi 0, %s311
  $region4: #{_lambda_.1} parent=0 // loop_header_branch
    %22 = sbr.rel (%p20) target = $region8
  $region5: #{_lambda_.1} parent=0 // loop_body
    %s24 = ssub.s32 %s19, 1
    %s25 = ssub.s32 %s19, 2
    %s26 = sadd.s32 %s19, 1
    %s27 = ssub.s32 %s19, %s26
    %p28 = scmp.eq.s32.totalorder %s27, 0
    %s30 = sadd.s32 %s29, 1
    %s31 = scalar_select %p28, %s29, %s30
    %p34 = pneg %p28
    %p35 = scmp.eq.s32.totalorder %s19, 1
    %p36 = por %p34, %p35
    %p37 = scmp.ne.s32.totalorder %s29, %s32
    %p38 = scmp.eq.s32.totalorder %s19, 0
    %p39 = por %p37, %p38
    %p40 = scmp.ne.s32.totalorder %s29, %s32
    %p41 = scmp.eq.s32.totalorder %s24, 1
    %p42 = por %p40, %p41
    %p43 = scmp.ne.s32.totalorder %s32, %s33
    %p44 = scmp.eq.s32.totalorder %s24, 0
    %p45 = por %p43, %p44
    %p46 = scmp.ne.s32.totalorder %s32, %s33
    %p47 = scmp.eq.s32.totalorder %s25, 1
    %p48 = por %p46, %p47
    %p50 = scmp.ne.s32.totalorder %s33, %s49
    %p51 = scmp.eq.s32.totalorder %s25, 0
    %p52 = por %p50, %p51
    %s54 = sadd.s32 %s53, 1
    %p57 = scmp.eq.s32.totalorder %s19, 1
    %p58 = scmp.ne.s32.totalorder %s53, %s55
    %p59 = scmp.eq.s32.totalorder %s19, 0
    %p60 = por %p58, %p59
    %p61 = scmp.ne.s32.totalorder %s53, %s55
    %p62 = scmp.eq.s32.totalorder %s24, 1
    %p63 = por %p61, %p62
    %p64 = scmp.ne.s32.totalorder %s55, %s56
    %p65 = scmp.eq.s32.totalorder %s24, 0
    %p66 = por %p64, %p65
    %p67 = scmp.ne.s32.totalorder %s55, %s56
    %p68 = scmp.eq.s32.totalorder %s25, 1
    %p69 = por %p67, %p68
    %p71 = scmp.ne.s32.totalorder %s56, %s70
    %p72 = scmp.eq.s32.totalorder %s25, 0
    %p73 = por %p71, %p72
    %s75 = sadd.s32 %s74, 1
    %p78 = scmp.eq.s32.totalorder %s19, 1
    %p79 = scmp.ne.s32.totalorder %s74, %s76
    %p80 = scmp.eq.s32.totalorder %s19, 0
    %p81 = por %p79, %p80
    %p82 = scmp.ne.s32.totalorder %s74, %s76
    %p83 = scmp.eq.s32.totalorder %s24, 1
    %p84 = por %p82, %p83
    %p85 = scmp.ne.s32.totalorder %s76, %s77
    %p86 = scmp.eq.s32.totalorder %s24, 0
    %p87 = por %p85, %p86
    %p88 = scmp.ne.s32.totalorder %s76, %s77
    %p89 = scmp.eq.s32.totalorder %s25, 1
    %p90 = por %p88, %p89
    %p92 = scmp.ne.s32.totalorder %s77, %s91
    %p93 = scmp.eq.s32.totalorder %s25, 0
    %p94 = por %p92, %p93
    %s96 = sadd.s32 %s95, 1
    %p99 = scmp.eq.s32.totalorder %s19, 1
    %p100 = scmp.ne.s32.totalorder %s95, %s97
    %p101 = scmp.eq.s32.totalorder %s19, 0
    %p102 = por %p100, %p101
    %p103 = scmp.ne.s32.totalorder %s95, %s97
    %p104 = scmp.eq.s32.totalorder %s24, 1
    %p105 = por %p103, %p104
    %p106 = scmp.ne.s32.totalorder %s97, %s98
    %p107 = scmp.eq.s32.totalorder %s24, 0
    %p108 = por %p106, %p107
    %p109 = scmp.ne.s32.totalorder %s97, %s98
    %p110 = scmp.eq.s32.totalorder %s25, 1
    %p111 = por %p109, %p110
    %p113 = scmp.ne.s32.totalorder %s98, %s112
    %p114 = scmp.eq.s32.totalorder %s25, 0
    %p115 = por %p113, %p114
    %s117 = sadd.s32 %s116, 1
    %p120 = scmp.eq.s32.totalorder %s19, 1
    %p121 = scmp.ne.s32.totalorder %s116, %s118
    %p122 = scmp.eq.s32.totalorder %s19, 0
    %p123 = por %p121, %p122
    %p124 = scmp.ne.s32.totalorder %s116, %s118
    %p125 = scmp.eq.s32.totalorder %s24, 1
    %p126 = por %p124, %p125
    %p127 = scmp.ne.s32.totalorder %s118, %s119
    %p128 = scmp.eq.s32.totalorder %s24, 0
    %p129 = por %p127, %p128
    %p130 = scmp.ne.s32.totalorder %s118, %s119
    %p131 = scmp.eq.s32.totalorder %s25, 1
    %p132 = por %p130, %p131
    %p134 = scmp.ne.s32.totalorder %s119, %s133
    %p135 = scmp.eq.s32.totalorder %s25, 0
    %p136 = por %p134, %p135
    %s138 = sadd.s32 %s137, 1
    %p141 = scmp.eq.s32.totalorder %s19, 1
    %p142 = scmp.ne.s32.totalorder %s137, %s139
    %p143 = scmp.eq.s32.totalorder %s19, 0
    %p144 = por %p142, %p143
    %p145 = scmp.ne.s32.totalorder %s137, %s139
    %p146 = scmp.eq.s32.totalorder %s24, 1
    %p147 = por %p145, %p146
    %p148 = scmp.ne.s32.totalorder %s139, %s140
    %p149 = scmp.eq.s32.totalorder %s24, 0
    %p150 = por %p148, %p149
    %p151 = scmp.ne.s32.totalorder %s139, %s140
    %p152 = scmp.eq.s32.totalorder %s25, 1
    %p153 = por %p151, %p152
    %p155 = scmp.ne.s32.totalorder %s140, %s154
    %p156 = scmp.eq.s32.totalorder %s25, 0
    %p157 = por %p155, %p156
    %s159 = sadd.s32 %s158, 1
    %p162 = scmp.eq.s32.totalorder %s19, 1
    %p163 = scmp.ne.s32.totalorder %s158, %s160
    %p164 = scmp.eq.s32.totalorder %s19, 0
    %p165 = por %p163, %p164
    %p166 = scmp.ne.s32.totalorder %s158, %s160
    %p167 = scmp.eq.s32.totalorder %s24, 1
    %p168 = por %p166, %p167
    %p169 = scmp.ne.s32.totalorder %s160, %s161
    %p170 = scmp.eq.s32.totalorder %s24, 0
    %p171 = por %p169, %p170
    %p172 = scmp.ne.s32.totalorder %s160, %s161
    %p173 = scmp.eq.s32.totalorder %s25, 1
    %p174 = por %p172, %p173
    %p176 = scmp.ne.s32.totalorder %s161, %s175
    %p177 = scmp.eq.s32.totalorder %s25, 0
    %p178 = por %p176, %p177
    %s180 = sadd.s32 %s179, 1
    %p183 = scmp.eq.s32.totalorder %s19, 1
    %p184 = scmp.ne.s32.totalorder %s179, %s181
    %p185 = scmp.eq.s32.totalorder %s19, 0
    %p186 = por %p184, %p185
    %p187 = scmp.ne.s32.totalorder %s179, %s181
    %p188 = scmp.eq.s32.totalorder %s24, 1
    %p189 = por %p187, %p188
    %p190 = scmp.ne.s32.totalorder %s181, %s182
    %p191 = scmp.eq.s32.totalorder %s24, 0
    %p192 = por %p190, %p191
    %p193 = scmp.ne.s32.totalorder %s181, %s182
    %p194 = scmp.eq.s32.totalorder %s25, 1
    %p195 = por %p193, %p194
    %p197 = scmp.ne.s32.totalorder %s182, %s196
    %p198 = scmp.eq.s32.totalorder %s25, 0
    %p199 = por %p197, %p198
    %s201 = sadd.s32 %s200, 1
    %p204 = scmp.eq.s32.totalorder %s19, 1
    %p205 = scmp.ne.s32.totalorder %s200, %s202
    %p206 = scmp.eq.s32.totalorder %s19, 0
    %p207 = por %p205, %p206
    %p208 = scmp.ne.s32.totalorder %s200, %s202
    %p209 = scmp.eq.s32.totalorder %s24, 1
    %p210 = por %p208, %p209
    %p211 = scmp.ne.s32.totalorder %s202, %s203
    %p212 = scmp.eq.s32.totalorder %s24, 0
    %p213 = por %p211, %p212
    %p214 = scmp.ne.s32.totalorder %s202, %s203
    %p215 = scmp.eq.s32.totalorder %s25, 1
    %p216 = por %p214, %p215
    %p218 = scmp.ne.s32.totalorder %s203, %s217
    %p219 = scmp.eq.s32.totalorder %s25, 0
    %p220 = por %p218, %p219
    %s222 = sadd.s32 %s221, 1
    %p225 = scmp.eq.s32.totalorder %s19, 1
    %p226 = scmp.ne.s32.totalorder %s221, %s223
    %p227 = scmp.eq.s32.totalorder %s19, 0
    %p228 = por %p226, %p227
    %p229 = scmp.ne.s32.totalorder %s221, %s223
    %p230 = scmp.eq.s32.totalorder %s24, 1
    %p231 = por %p229, %p230
    %p232 = scmp.ne.s32.totalorder %s223, %s224
    %p233 = scmp.eq.s32.totalorder %s24, 0
    %p234 = por %p232, %p233
    %p235 = scmp.ne.s32.totalorder %s223, %s224
    %p236 = scmp.eq.s32.totalorder %s25, 1
    %p237 = por %p235, %p236
    %p239 = scmp.ne.s32.totalorder %s224, %s238
    %p240 = scmp.eq.s32.totalorder %s25, 0
    %p241 = por %p239, %p240
    %s243 = sadd.s32 %s242, 1
    %p246 = scmp.eq.s32.totalorder %s19, 1
    %p247 = scmp.ne.s32.totalorder %s242, %s244
    %p248 = scmp.eq.s32.totalorder %s19, 0
    %p249 = por %p247, %p248
    %p250 = scmp.ne.s32.totalorder %s242, %s244
    %p251 = scmp.eq.s32.totalorder %s24, 1
    %p252 = por %p250, %p251
    %p253 = scmp.ne.s32.totalorder %s244, %s245
    %p254 = scmp.eq.s32.totalorder %s24, 0
    %p255 = por %p253, %p254
    %p256 = scmp.ne.s32.totalorder %s244, %s245
    %p257 = scmp.eq.s32.totalorder %s25, 1
    %p258 = por %p256, %p257
    %p260 = scmp.ne.s32.totalorder %s245, %s259
    %p261 = scmp.eq.s32.totalorder %s25, 0
    %p262 = por %p260, %p261
    %s264 = sadd.s32 %s263, 1
    %p267 = scmp.eq.s32.totalorder %s19, 1
    %p268 = scmp.ne.s32.totalorder %s263, %s265
    %p269 = scmp.eq.s32.totalorder %s19, 0
    %p270 = por %p268, %p269
    %p271 = scmp.ne.s32.totalorder %s263, %s265
    %p272 = scmp.eq.s32.totalorder %s24, 1
    %p273 = por %p271, %p272
    %p274 = scmp.ne.s32.totalorder %s265, %s266
    %p275 = scmp.eq.s32.totalorder %s24, 0
    %p276 = por %p274, %p275
    %p277 = scmp.ne.s32.totalorder %s265, %s266
    %p278 = scmp.eq.s32.totalorder %s25, 1
    %p279 = por %p277, %p278
    %p281 = scmp.ne.s32.totalorder %s266, %s280
    %p282 = scmp.eq.s32.totalorder %s25, 0
    %p283 = por %p281, %p282
    %s285 = sadd.s32 %s284, 1
    %p288 = scmp.eq.s32.totalorder %s19, 1
    %p289 = scmp.ne.s32.totalorder %s284, %s286
    %p290 = scmp.eq.s32.totalorder %s19, 0
    %p291 = por %p289, %p290
    %p292 = scmp.ne.s32.totalorder %s284, %s286
    %p293 = scmp.eq.s32.totalorder %s24, 1
    %p294 = por %p292, %p293
    %p295 = scmp.ne.s32.totalorder %s286, %s287
    %p296 = scmp.eq.s32.totalorder %s24, 0
    %p297 = por %p295, %p296
    %p298 = scmp.ne.s32.totalorder %s286, %s287
    %p299 = scmp.eq.s32.totalorder %s25, 1
    %p300 = por %p298, %p299
    %p302 = scmp.ne.s32.totalorder %s287, %s301
    %p303 = scmp.eq.s32.totalorder %s25, 0
    %p304 = por %p302, %p303
    %s305 = ssub.s32 %s19, %s26
    %p306 = scmp.eq.s32.totalorder %s305, 0
    %s308 = sadd.s32 %s307, 1
    %s309 = scalar_select %p306, %s307, %s308
    %p312 = pneg %p306
    %p313 = scmp.eq.s32.totalorder %s19, 1
    %p314 = por %p312, %p313
    %p315 = scmp.ne.s32.totalorder %s307, %s310
    %p316 = scmp.eq.s32.totalorder %s19, 0
    %p317 = por %p315, %p316
    %p318 = scmp.ne.s32.totalorder %s307, %s310
    %p319 = scmp.eq.s32.totalorder %s24, 1
    %p320 = por %p318, %p319
    %p321 = scmp.ne.s32.totalorder %s310, %s311
    %p322 = scmp.eq.s32.totalorder %s24, 0
    %p323 = por %p321, %p322
    %p324 = scmp.ne.s32.totalorder %s310, %s311
    %p325 = scmp.eq.s32.totalorder %s25, 1
    %p326 = por %p324, %p325
    %p328 = scmp.ne.s32.totalorder %s311, %s327
    %p329 = scmp.eq.s32.totalorder %s25, 0
    %p330 = por %p328, %p329
    %p331 = scmp.le.s32.totalorder 1, %s19
    %p332 = scmp.lt.s32.totalorder %s19, 3
    %p333 = pnand %p331, %p332
    %p334 = pneg %p333
    // Predicated region
    $region9: #{_lambda_.1} parent=5 // pred_check
      _
    $region10: #{_lambda_.1} parent=5 // pred_check_branch
      %336 = sbr.rel (%p333) target = $region12
    $region11: #{_lambda_.1} parent=5 // pred_region
      %s337 = ssub.s32 %s19, 1
      // Predicated region
      $region13: #{_lambda_.1} parent=11 // pred_check
        %p338 = pneg %p66
      $region14: #{_lambda_.1} parent=11 // pred_check_branch
        %340 = sbr.rel (%p338) target = $region16
      $region15: #{_lambda_.1} parent=11 // pred_region
        _
      $region16: #{_lambda_.1} parent=11 // pred_fallthru
        _
      // Predicated region
      $region17: #{_lambda_.1} parent=11 // pred_check
        %p341 = pneg %p87
      $region18: #{_lambda_.1} parent=11 // pred_check_branch
        %343 = sbr.rel (%p341) target = $region20
      $region19: #{_lambda_.1} parent=11 // pred_region
        _
      $region20: #{_lambda_.1} parent=11 // pred_fallthru
        _
      // Predicated region
      $region21: #{_lambda_.1} parent=11 // pred_check
        %p344 = pneg %p108
      $region22: #{_lambda_.1} parent=11 // pred_check_branch
        %346 = sbr.rel (%p344) target = $region24
      $region23: #{_lambda_.1} parent=11 // pred_region
        _
      $region24: #{_lambda_.1} parent=11 // pred_fallthru
        _
      // Predicated region
      $region25: #{_lambda_.1} parent=11 // pred_check
        %p347 = pneg %p129
      $region26: #{_lambda_.1} parent=11 // pred_check_branch
        %349 = sbr.rel (%p347) target = $region28
      $region27: #{_lambda_.1} parent=11 // pred_region
        _
      $region28: #{_lambda_.1} parent=11 // pred_fallthru
        _
      // Predicated region
      $region29: #{_lambda_.1} parent=11 // pred_check
        %p350 = pneg %p150
      $region30: #{_lambda_.1} parent=11 // pred_check_branch
        %352 = sbr.rel (%p350) target = $region32
      $region31: #{_lambda_.1} parent=11 // pred_region
        _
      $region32: #{_lambda_.1} parent=11 // pred_fallthru
        _
      // Predicated region
      $region33: #{_lambda_.1} parent=11 // pred_check
        %p353 = pneg %p171
      $region34: #{_lambda_.1} parent=11 // pred_check_branch
        %355 = sbr.rel (%p353) target = $region36
      $region35: #{_lambda_.1} parent=11 // pred_region
        _
      $region36: #{_lambda_.1} parent=11 // pred_fallthru
        _
      // Predicated region
      $region37: #{_lambda_.1} parent=11 // pred_check
        %p356 = pneg %p192
      $region38: #{_lambda_.1} parent=11 // pred_check_branch
        %358 = sbr.rel (%p356) target = $region40
      $region39: #{_lambda_.1} parent=11 // pred_region
        _
      $region40: #{_lambda_.1} parent=11 // pred_fallthru
        _
      // Predicated region
      $region41: #{_lambda_.1} parent=11 // pred_check
        %p359 = pneg %p213
      $region42: #{_lambda_.1} parent=11 // pred_check_branch
        %361 = sbr.rel (%p359) target = $region44
      $region43: #{_lambda_.1} parent=11 // pred_region
        _
      $region44: #{_lambda_.1} parent=11 // pred_fallthru
        _
      // Predicated region
      $region45: #{_lambda_.1} parent=11 // pred_check
        %p362 = pneg %p234
      $region46: #{_lambda_.1} parent=11 // pred_check_branch
        %364 = sbr.rel (%p362) target = $region48
      $region47: #{_lambda_.1} parent=11 // pred_region
        _
      $region48: #{_lambda_.1} parent=11 // pred_fallthru
        _
      // Predicated region
      $region49: #{_lambda_.1} parent=11 // pred_check
        %p365 = pneg %p255
      $region50: #{_lambda_.1} parent=11 // pred_check_branch
        %367 = sbr.rel (%p365) target = $region52
      $region51: #{_lambda_.1} parent=11 // pred_region
        _
      $region52: #{_lambda_.1} parent=11 // pred_fallthru
        _
      // Predicated region
      $region53: #{_lambda_.1} parent=11 // pred_check
        %p368 = pneg %p276
      $region54: #{_lambda_.1} parent=11 // pred_check_branch
        %370 = sbr.rel (%p368) target = $region56
      $region55: #{_lambda_.1} parent=11 // pred_region
        _
      $region56: #{_lambda_.1} parent=11 // pred_fallthru
        _
      // Predicated region
      $region57: #{_lambda_.1} parent=11 // pred_check
        %p371 = pneg %p297
      $region58: #{_lambda_.1} parent=11 // pred_check_branch
        %373 = sbr.rel (%p371) target = $region60
      $region59: #{_lambda_.1} parent=11 // pred_region
        _
      $region60: #{_lambda_.1} parent=11 // pred_fallthru
        _
    $region12: #{_lambda_.1} parent=5 // pred_fallthru
      _
    %p374 = scmp.lt.s32.totalorder %s19, 2
    // Predicated region
    $region61: #{_lambda_.1} parent=5 // pred_check
      %p375 = pneg %p374
    $region62: #{_lambda_.1} parent=5 // pred_check_branch
      %377 = sbr.rel (%p375) target = $region64
    $region63: #{_lambda_.1} parent=5 // pred_region
      // Predicated region
      $region65: #{_lambda_.1} parent=63 // pred_check
        %p378 = pneg %p39
      $region66: #{_lambda_.1} parent=63 // pred_check_branch
        %380 = sbr.rel (%p378) target = $region68
      $region67: #{_lambda_.1} parent=63 // pred_region
        %p381 = scmp.lt.s32.totalorder %s19, 1
        %s382 = scalar_select %p381, %s19, 1
        %s383 = smul.addr %s382, 8
        %s384 = smul.addr %s383, 8
        %s385 = scalar_lea.vmem %s0, %s384
      $region68: #{_lambda_.1} parent=63 // pred_fallthru
        _
    $region64: #{_lambda_.1} parent=5 // pred_fallthru
      _
    %p386 = scmp.le.s32.totalorder 1, %s19
    %p387 = scmp.lt.s32.totalorder %s19, 3
    %p388 = pnand %p386, %p387
    %p389 = pneg %p388
    // Predicated region
    $region69: #{_lambda_.1} parent=5 // pred_check
      _
    $region70: #{_lambda_.1} parent=5 // pred_check_branch
      %391 = sbr.rel (%p388) target = $region72
    $region71: #{_lambda_.1} parent=5 // pred_region
      %s392 = ssub.s32 %s19, 1
      %p393 = scmp.lt.s32.totalorder %s24, 1
      %s394 = scalar_select %p393, %s24, 1
      %s395 = smul.addr %s394, 8
      %s396 = smul.addr %s395, 8
      %s397 = scalar_lea.vmem %s0, %s396
      %p398 = pneg %p45
      %p399 = pneg %p42
      %p400 = pneg %p66
      %p401 = pneg %p63
      %p402 = pneg %p87
      %p403 = pneg %p84
      %p404 = pneg %p108
      %p405 = pneg %p105
      %p406 = pneg %p129
      %p407 = pneg %p126
      %p408 = pneg %p150
      %p409 = pneg %p147
      %p410 = pneg %p171
      %p411 = pneg %p168
      %p412 = pneg %p192
      %p413 = pneg %p189
      %p414 = pneg %p213
      %p415 = pneg %p210
      %p416 = pneg %p234
      %p417 = pneg %p231
      %p418 = pneg %p255
      %p419 = pneg %p252
      %p420 = pneg %p276
      %p421 = pneg %p273
      %p422 = pneg %p297
      %p423 = pneg %p294
      %p424 = pneg %p323
      %p425 = pneg %p320
      %p426 = scmp.lt.s32.totalorder %s24, 1
      %s427 = scalar_select %p426, %s24, 1
      %s428 = smul.addr %s427, 12
      %s429 = smul.addr %s428, 8
      %s430 = scalar_lea.vmem %s13, %s429
      %p431 = scmp.lt.s32.totalorder %s24, 1
      %s432 = scalar_select %p431, %s24, 1
      %s433 = smul.addr %s432, 8
      %s434 = smul.addr %s433, 8
      %s435 = scalar_lea.vmem %s0, %s434
      %p436 = scmp.lt.s32.totalorder %s24, 1
      %s437 = scalar_select %p436, %s24, 1
      %s438 = smul.addr %s437, 12
      %s439 = smul.addr %s438, 8
      %s440 = scalar_lea.vmem %s13, %s439
      %v441 = vld [vmem:[%s435] sm:$0xff]
      %v442 = vld [vmem:[%s435 + $0x8] sm:$0xff]
      %445 = vrot.lane.b32.xlu0 %v441, 2
      %v446 = vpop.permute.xlu0 %445
      %447 = vrot.lane.b32.xlu0 %v442, 2
      %v448 = vpop.permute.xlu0 %447
      %vm451 = vcmask 15360
      %v452 = vsel %vm451, 0.0, %v446
      %v453 = vsel %vm451, 0.0, %v448
      %vm454 = vcmask 146432
      %v455 = vsel %vm454, %v452, 0.0
      %v456 = vsel %vm454, %v453, 0.0
      %vm459 = vcmask 1041408
      %v460 = vrot.slane %v455, 6
      %v461 = vrot.slane %v456, 6
      %v462 = vsel %vm459, %v460, %v461
      %v466 = vsel %vm459, 0.0, %v460
      %v467 = vsel %vm459, %v461, 0.0
      %vm468 = vcmask 162816
      %469 = vst.msk [vmem:[%s440] sm:$0xff] %vm468, %v466
      %470 = vst.msk [vmem:[%s440 + $0x8] sm:$0xff] %vm468, %v462
      %vm471 = vcmask 158720
      %472 = vst.msk [vmem:[%s440 + $0x10] sm:$0xf] %vm471, %v467
      %s473 = scalar_lea.vmem %s435, 16
      %v474 = vld [vmem:[%s473] sm:$0xff]
      %v475 = vld [vmem:[%s473 + $0x8] sm:$0xff]
      %478 = vrot.lane.b32.xlu0 %v474, 2
      %v479 = vpop.permute.xlu0 %478
      %480 = vrot.lane.b32.xlu0 %v475, 2
      %v481 = vpop.permute.xlu0 %480
      %v484 = vsel %vm451, 0.0, %v479
      %v485 = vsel %vm451, 0.0, %v481
      %v486 = vsel %vm454, %v484, 0.0
      %v487 = vsel %vm454, %v485, 0.0
      %v490 = vrot.slane %v486, 6
      %v491 = vrot.slane %v487, 6
      %v492 = vsel %vm459, %v490, %v491
      %v496 = vsel %vm459, 0.0, %v490
      %v497 = vsel %vm459, %v491, 0.0
      %s498 = scalar_lea.vmem %s440, 24
      %499 = vst.msk [vmem:[%s498] sm:$0xff] %vm468, %v496
      %500 = vst.msk [vmem:[%s498 + $0x8] sm:$0xff] %vm468, %v492
      %501 = vst.msk [vmem:[%s498 + $0x10] sm:$0xf] %vm471, %v497
      %s502 = scalar_lea.vmem %s435, 32
      %v503 = vld [vmem:[%s502] sm:$0xff]
      %v504 = vld [vmem:[%s502 + $0x8] sm:$0xff]
      %507 = vrot.lane.b32.xlu0 %v503, 2
      %v508 = vpop.permute.xlu0 %507
      %509 = vrot.lane.b32.xlu0 %v504, 2
      %v510 = vpop.permute.xlu0 %509
      %v513 = vsel %vm451, 0.0, %v508
      %v514 = vsel %vm451, 0.0, %v510
      %v515 = vsel %vm454, %v513, 0.0
      %v516 = vsel %vm454, %v514, 0.0
      %v519 = vrot.slane %v515, 6
      %v520 = vrot.slane %v516, 6
      %v521 = vsel %vm459, %v519, %v520
      %v525 = vsel %vm459, 0.0, %v519
      %v526 = vsel %vm459, %v520, 0.0
      %s527 = scalar_lea.vmem %s440, 48
      %528 = vst.msk [vmem:[%s527] sm:$0xff] %vm468, %v525
      %529 = vst.msk [vmem:[%s527 + $0x8] sm:$0xff] %vm468, %v521
      %530 = vst.msk [vmem:[%s527 + $0x10] sm:$0xf] %vm471, %v526
      %s531 = scalar_lea.vmem %s435, 48
      %v532 = vld [vmem:[%s531] sm:$0xff]
      %v533 = vld [vmem:[%s531 + $0x8] sm:$0xff]
      %536 = vrot.lane.b32.xlu0 %v532, 2
      %v537 = vpop.permute.xlu0 %536
      %538 = vrot.lane.b32.xlu0 %v533, 2
      %v539 = vpop.permute.xlu0 %538
      %v542 = vsel %vm451, 0.0, %v537
      %v543 = vsel %vm451, 0.0, %v539
      %v544 = vsel %vm454, %v542, 0.0
      %v545 = vsel %vm454, %v543, 0.0
      %v548 = vrot.slane %v544, 6
      %v549 = vrot.slane %v545, 6
      %v550 = vsel %vm459, %v548, %v549
      %v554 = vsel %vm459, 0.0, %v548
      %v555 = vsel %vm459, %v549, 0.0
      %s556 = scalar_lea.vmem %s440, 72
      %557 = vst.msk [vmem:[%s556] sm:$0xff] %vm468, %v554
      %558 = vst.msk [vmem:[%s556 + $0x8] sm:$0xff] %vm468, %v550
      %559 = vst.msk [vmem:[%s556 + $0x10] sm:$0xf] %vm471, %v555
      %v560 = vld [vmem:[%s1] sm:$0xff]
      %v561 = vld [vmem:[%s1 + $0x8] sm:$0xff]
      %v562 = vld [vmem:[%s2] sm:$0xff]
      %v563 = vld [vmem:[%s2 + $0x8] sm:$0xff]
      %v564 = vld [vmem:[%s3] sm:$0xff]
      %v565 = vld [vmem:[%s3 + $0x8] sm:$0xff]
      %v566 = vld [vmem:[%s4] sm:$0xff]
      %v567 = vld [vmem:[%s4 + $0x8] sm:$0xff]
      %v568 = vld [vmem:[%s5] sm:$0x3]
      %v569 = vld [vmem:[%s6] sm:$0x3]
      %v570 = vld [vmem:[%s7] sm:$0xff]
      %v571 = vld [vmem:[%s7 + $0x8] sm:$0xff]
      %v572 = vld [vmem:[%s8] sm:$0xff]
      %v573 = vld [vmem:[%s8 + $0x8] sm:$0xff]
      %v574 = vld [vmem:[%s9] sm:$0xff]
      %v575 = vld [vmem:[%s9 + $0x8] sm:$0xff]
      %v576 = vld [vmem:[%s10] sm:$0xff]
      %v577 = vld [vmem:[%s10 + $0x8] sm:$0xff]
      %v578 = vld [vmem:[%s11] sm:$0x3]
      %v579 = vld [vmem:[%s12] sm:$0x3]
      %v580 = vld [vmem:[%s440 + $0x2] sm:$0x7]
      %v581 = vld [vmem:[%s498 + $0x2] sm:$0x7]
      %v582 = vld [vmem:[%s527 + $0x2] sm:$0x7]
      %v583 = vld [vmem:[%s556 + $0x2] sm:$0x7]
      %v585 = vrot.slane %v581, 5
      %v588 = vrot.slane %v582, 2
      %v591 = vrot.slane %v583, 7
      %vm593 = vcmask 1042432
      %v594 = vsel %vm593, %v580, %v585
      %vm595 = vcmask 1045504
      %v596 = vsel %vm595, %v594, %v588
      %vm597 = vcmask 1040384
      %v598 = vsel %vm597, %v588, %v591
      %vm601 = vcmask 1043456
      %v602 = vrot.slane %v596, 4
      %v603 = vrot.slane %v598, 4
      %v604 = vsel %vm601, %v602, %v603
      %605 = vrot.lane.b32.xlu0 %v602, 127
      %v606 = vpop.permute.xlu0 %605
      %607 = vrot.lane.b32.xlu0 %v604, 127
      %v608 = vpop.permute.xlu0 %607
      %611 = vrot.lane.b32.xlu0 %v596, 126
      %v612 = vpop.permute.xlu0 %611
      %613 = vrot.lane.b32.xlu0 %v598, 126
      %v614 = vpop.permute.xlu0 %613
      %v617 = vsel %vm601, %v598, %v606
      %v618 = vld [vmem:[%s440 + $0xf] sm:$0x7]
      %v619 = vld [vmem:[%s498 + $0xf] sm:$0x7]
      %v620 = vld [vmem:[%s527 + $0xf] sm:$0x7]
      %v621 = vld [vmem:[%s556 + $0xf] sm:$0x7]
      %v623 = vrot.slane %v619, 5
      %v626 = vrot.slane %v620, 2
      %v629 = vrot.slane %v621, 7
      %v631 = vsel %vm593, %v618, %v623
      %v632 = vsel %vm595, %v631, %v626
      %v633 = vsel %vm597, %v626, %v629
      %v636 = vrot.slane %v632, 4
      %v637 = vrot.slane %v633, 4
      %v638 = vsel %vm601, %v636, %v637
      %639 = vrot.lane.b32.xlu0 %v636, 127
      %v640 = vpop.permute.xlu0 %639
      %641 = vrot.lane.b32.xlu0 %v638, 127
      %v642 = vpop.permute.xlu0 %641
      %644 = vrot.lane.b32.xlu0 %v632, 126
      %v645 = vpop.permute.xlu0 %644
      %646 = vrot.lane.b32.xlu0 %v633, 126
      %v647 = vpop.permute.xlu0 %646
      %v648 = vsel %vm601, %v633, %v640
      %650 = vrot.lane.b32.xlu0 %v632, 18
      %v651 = vpop.permute.xlu0 %650
      %652 = vrot.lane.b32.xlu0 %v648, 18
      %v653 = vpop.permute.xlu0 %652
      %654 = vrot.lane.b32.xlu0 %v642, 18
      %v655 = vpop.permute.xlu0 %654
      %656 = vrot.lane.b32.xlu0 %v645, 18
      %v657 = vpop.permute.xlu0 %656
      %658 = vrot.lane.b32.xlu0 %v647, 18
      %v659 = vpop.permute.xlu0 %658
      %v665 = vsel %vm454, %v596, %v651
      %v666 = vsel %vm454, %v617, %v653
      %v667 = vsel %vm454, %v608, %v655
      %v668 = vsel %vm454, %v612, %v657
      %v669 = vsel %vm454, %v614, %v659
      %671 = vset.pattern.permute.xlu0 0
      %672 = vperm.xlu0 %671, %v562
      %v673 = vpop.permute.xlu0 %672
      %676 = vset.pattern.permute.xlu0 0
      %677 = vperm.xlu0 %676, %v563
      %v678 = vpop.permute.xlu0 %677
      %vm680 = vcmask 293888
      %v682 = vsel %vm680, %v560, 0
      %v685 = vsel %vm680, %v561, 0
      %v688 = vsel %vm601, %v669, 0
      %690 = vmatprep.subr.mxu0 0.0
      %691 = vmatpush1.msra.mxu0 0.0
      %692 = vmatprep.subr.mxu0 0.0
      %693 = vmatpush1.msra.mxu0 0.0
      %694 = vmatprep.subr.mxu0 0.0
      %695 = vmatpush1.msra.mxu0 0.0
      %696 = vmatprep.subr.mxu0 0.0
      %697 = vmatpush1.msra.mxu0 0.0
      %698 = vmatprep.subr.mxu0 0.0
      %699 = vmatpush1.msra.mxu0 0.0
      %700 = vmatprep.subr.mxu0 0.0
      %701 = vmatpush1.msra.mxu0 0.0
      %702 = vmatprep.subr.mxu0 0.0
      %703 = vmatpush1.msra.mxu0 0.0
      %704 = vmatprep.subr.mxu0 0.0
      %705 = vmatpush1.msra.mxu0 0.0
      %706 = vmatprep.subr.mxu0 0.0
      %707 = vmatpush1.msra.mxu0 0.0
      %708 = vmatprep.subr.mxu0 0.0
      %709 = vmatpush1.msra.mxu0 0.0
      %710 = vmatprep.subr.mxu0 0.0
      %711 = vmatpush1.msra.mxu0 0.0
      %712 = vmatprep.subr.mxu0 0.0
      %713 = vmatpush1.msra.mxu0 %v688
      %714 = vmatprep.subr.mxu0 0.0
      %715 = vmatpush1.msra.mxu0 %v668
      %716 = vmatprep.subr.mxu0 0.0
      %717 = vmatpush1.msra.mxu0 %v667
      %718 = vmatprep.subr.mxu0 0.0
      %719 = vmatpush1.msra.mxu0 %v666
      %720 = vmatprep.subr.mxu0 0.0
      %721 = vmatpush1.msra.mxu0 %v665
      %722 = vmatprep.subr.mxu0 0.0
      %723 = vmatpush2.msra.mxu0 0.0
      %724 = vmatprep.subr.mxu0 0.0
      %725 = vmatpush2.msra.mxu0 0.0
      %726 = vmatprep.subr.mxu0 0.0
      %727 = vmatpush2.msra.mxu0 0.0
      %728 = vmatprep.subr.mxu0 0.0
      %729 = vmatpush2.msra.mxu0 0.0
      %730 = vmatprep.subr.mxu0 0.0
      %731 = vmatpush2.msra.mxu0 0.0
      %732 = vmatprep.subr.mxu0 0.0
      %733 = vmatpush2.msra.mxu0 0.0
      %734 = vmatprep.subr.mxu0 0.0
      %735 = vmatpush2.msra.mxu0 0.0
      %736 = vmatprep.subr.mxu0 0.0
      %737 = vmatpush2.msra.mxu0 0.0
      %738 = vmatprep.subr.mxu0 0.0
      %739 = vmatpush2.msra.mxu0 0.0
      %740 = vmatprep.subr.mxu0 0.0
      %741 = vmatpush2.msra.mxu0 0.0
      %742 = vmatprep.subr.mxu0 0.0
      %743 = vmatpush2.msra.mxu0 0.0
      %744 = vmatprep.subr.mxu0 0.0
      %745 = vmatpush2.msra.mxu0 0.0
      %746 = vmatprep.subr.mxu0 0.0
      %747 = vmatpush2.msra.mxu0 0.0
      %748 = vmatprep.subr.mxu0 0.0
      %749 = vmatpush2.msra.mxu0 0.0
      %750 = vmatprep.subr.mxu0 0.0
      %751 = vmatpush2.msra.mxu0 0.0
      %752 = vmatprep.subr.mxu0 0.0
      %753 = vmatpush2.msra.mxu0 0.0
      %754 = vmatprep.mubr.f32.mxu0 0.0
      %755 = vmatmul.mubr.f32.gmra.mxu0 %v682
      %v756 = vpop.f32.mrf.mxu0
      %v757 = vadd.f32 %v673, %v756
      %v758 = vpop.f32.mrf.mxu0
      %759 = vmatprep.mubr.f32.mxu0 0.0
      %760 = vmatmul.mubr.f32.gmra.mxu0 %v685
      %v761 = vpop.f32.mrf.mxu0
      %v762 = vadd.f32 %v678, %v761
      %v763 = vpop.f32.mrf.mxu0
      %764 = vdwg.mxu0
      %v765 = vmax.f32 %v757, 0.0
      %v766 = vmax.f32 %v762, 0.0
      %768 = vset.pattern.permute.xlu0 0
      %769 = vperm.xlu0 %768, %v566
      %v770 = vpop.permute.xlu0 %769
      %773 = vset.pattern.permute.xlu0 0
      %774 = vperm.xlu0 %773, %v567
      %v775 = vpop.permute.xlu0 %774
      %vm777 = vcmask 130048
      %v779 = vsel %vm777, %v564, 0
      %v782 = vsel %vm777, %v565, 0
      %784 = vmatprep.subr.mxu0 0.0
      %785 = vmatpush1.msra.mxu0 0.0
      %786 = vmatprep.subr.mxu0 0.0
      %787 = vmatpush1.msra.mxu0 0.0
      %788 = vmatprep.subr.mxu0 0.0
      %789 = vmatpush1.msra.mxu0 0.0
      %790 = vmatprep.subr.mxu0 0.0
      %791 = vmatpush1.msra.mxu0 0.0
      %792 = vmatprep.subr.mxu0 0.0
      %793 = vmatpush1.msra.mxu0 0.0
      %794 = vmatprep.subr.mxu0 0.0
      %795 = vmatpush1.msra.mxu0 0.0
      %796 = vmatprep.subr.mxu0 0.0
      %797 = vmatpush1.msra.mxu0 0.0
      %798 = vmatprep.subr.mxu0 0.0
      %799 = vmatpush1.msra.mxu0 0.0
      %800 = vmatprep.subr.mxu0 0.0
      %801 = vmatpush1.msra.mxu0 0.0
      %802 = vmatprep.subr.mxu0 0.0
      %803 = vmatpush1.msra.mxu0 0.0
      %804 = vmatprep.subr.mxu0 0.0
      %805 = vmatpush1.msra.mxu0 0.0
      %806 = vmatprep.subr.mxu0 0.0
      %807 = vmatpush1.msra.mxu0 0.0
      %808 = vmatprep.subr.mxu0 0.0
      %809 = vmatpush1.msra.mxu0 0.0
      %810 = vmatprep.subr.mxu0 0.0
      %811 = vmatpush1.msra.mxu0 0.0
      %812 = vmatprep.subr.mxu0 0.0
      %813 = vmatpush1.msra.mxu0 %v766
      %814 = vmatprep.subr.mxu0 0.0
      %815 = vmatpush1.msra.mxu0 %v765
      %816 = vmatprep.subr.mxu0 0.0
      %817 = vmatpush2.msra.mxu0 0.0
      %818 = vmatprep.subr.mxu0 0.0
      %819 = vmatpush2.msra.mxu0 0.0
      %820 = vmatprep.subr.mxu0 0.0
      %821 = vmatpush2.msra.mxu0 0.0
      %822 = vmatprep.subr.mxu0 0.0
      %823 = vmatpush2.msra.mxu0 0.0
      %824 = vmatprep.subr.mxu0 0.0
      %825 = vmatpush2.msra.mxu0 0.0
      %826 = vmatprep.subr.mxu0 0.0
      %827 = vmatpush2.msra.mxu0 0.0
      %828 = vmatprep.subr.mxu0 0.0
      %829 = vmatpush2.msra.mxu0 0.0
      %830 = vmatprep.subr.mxu0 0.0
      %831 = vmatpush2.msra.mxu0 0.0
      %832 = vmatprep.subr.mxu0 0.0
      %833 = vmatpush2.msra.mxu0 0.0
      %834 = vmatprep.subr.mxu0 0.0
      %835 = vmatpush2.msra.mxu0 0.0
      %836 = vmatprep.subr.mxu0 0.0
      %837 = vmatpush2.msra.mxu0 0.0
      %838 = vmatprep.subr.mxu0 0.0
      %839 = vmatpush2.msra.mxu0 0.0
      %840 = vmatprep.subr.mxu0 0.0
      %841 = vmatpush2.msra.mxu0 0.0
      %842 = vmatprep.subr.mxu0 0.0
      %843 = vmatpush2.msra.mxu0 0.0
      %844 = vmatprep.subr.mxu0 0.0
      %845 = vmatpush2.msra.mxu0 0.0
      %846 = vmatprep.subr.mxu0 0.0
      %847 = vmatpush2.msra.mxu0 0.0
      %848 = vmatprep.mubr.f32.mxu0 0.0
      %849 = vmatmul.mubr.f32.gmra.mxu0 %v779
      %v850 = vpop.f32.mrf.mxu0
      %v851 = vadd.f32 %v770, %v850
      %v852 = vpop.f32.mrf.mxu0
      %853 = vmatprep.mubr.f32.mxu0 0.0
      %854 = vmatmul.mubr.f32.gmra.mxu0 %v782
      %v855 = vpop.f32.mrf.mxu0
      %v856 = vadd.f32 %v775, %v855
      %v857 = vpop.f32.mrf.mxu0
      %858 = vdwg.mxu0
      %v859 = vmax.f32 %v851, 0.0
      %v860 = vmax.f32 %v856, 0.0
      %862 = vset.pattern.permute.xlu0 0
      %863 = vperm.xlu0 %862, %v569
      %v864 = vpop.permute.xlu0 %863
      %v867 = vsel %vm777, %v568, 0
      %869 = vmatprep.subr.mxu0 0.0
      %870 = vmatpush1.msra.mxu0 0.0
      %871 = vmatprep.subr.mxu0 0.0
      %872 = vmatpush1.msra.mxu0 0.0
      %873 = vmatprep.subr.mxu0 0.0
      %874 = vmatpush1.msra.mxu0 0.0
      %875 = vmatprep.subr.mxu0 0.0
      %876 = vmatpush1.msra.mxu0 0.0
      %877 = vmatprep.subr.mxu0 0.0
      %878 = vmatpush1.msra.mxu0 0.0
      %879 = vmatprep.subr.mxu0 0.0
      %880 = vmatpush1.msra.mxu0 0.0
      %881 = vmatprep.subr.mxu0 0.0
      %882 = vmatpush1.msra.mxu0 0.0
      %883 = vmatprep.subr.mxu0 0.0
      %884 = vmatpush1.msra.mxu0 0.0
      %885 = vmatprep.subr.mxu0 0.0
      %886 = vmatpush1.msra.mxu0 0.0
      %887 = vmatprep.subr.mxu0 0.0
      %888 = vmatpush1.msra.mxu0 0.0
      %889 = vmatprep.subr.mxu0 0.0
      %890 = vmatpush1.msra.mxu0 0.0
      %891 = vmatprep.subr.mxu0 0.0
      %892 = vmatpush1.msra.mxu0 0.0
      %893 = vmatprep.subr.mxu0 0.0
      %894 = vmatpush1.msra.mxu0 0.0
      %895 = vmatprep.subr.mxu0 0.0
      %896 = vmatpush1.msra.mxu0 0.0
      %897 = vmatprep.subr.mxu0 0.0
      %898 = vmatpush1.msra.mxu0 %v860
      %899 = vmatprep.subr.mxu0 0.0
      %900 = vmatpush1.msra.mxu0 %v859
      %901 = vmatprep.subr.mxu0 0.0
      %902 = vmatpush2.msra.mxu0 0.0
      %903 = vmatprep.subr.mxu0 0.0
      %904 = vmatpush2.msra.mxu0 0.0
      %905 = vmatprep.subr.mxu0 0.0
      %906 = vmatpush2.msra.mxu0 0.0
      %907 = vmatprep.subr.mxu0 0.0
      %908 = vmatpush2.msra.mxu0 0.0
      %909 = vmatprep.subr.mxu0 0.0
      %910 = vmatpush2.msra.mxu0 0.0
      %911 = vmatprep.subr.mxu0 0.0
      %912 = vmatpush2.msra.mxu0 0.0
      %913 = vmatprep.subr.mxu0 0.0
      %914 = vmatpush2.msra.mxu0 0.0
      %915 = vmatprep.subr.mxu0 0.0
      %916 = vmatpush2.msra.mxu0 0.0
      %917 = vmatprep.subr.mxu0 0.0
      %918 = vmatpush2.msra.mxu0 0.0
      %919 = vmatprep.subr.mxu0 0.0
      %920 = vmatpush2.msra.mxu0 0.0
      %921 = vmatprep.subr.mxu0 0.0
      %922 = vmatpush2.msra.mxu0 0.0
      %923 = vmatprep.subr.mxu0 0.0
      %924 = vmatpush2.msra.mxu0 0.0
      %925 = vmatprep.subr.mxu0 0.0
      %926 = vmatpush2.msra.mxu0 0.0
      %927 = vmatprep.subr.mxu0 0.0
      %928 = vmatpush2.msra.mxu0 0.0
      %929 = vmatprep.subr.mxu0 0.0
      %930 = vmatpush2.msra.mxu0 0.0
      %931 = vmatprep.subr.mxu0 0.0
      %932 = vmatpush2.msra.mxu0 0.0
      %933 = vmatprep.mubr.f32.mxu0 0.0
      %934 = vmatmul.mubr.f32.gmra.mxu0 %v867
      %v935 = vpop.f32.mrf.mxu0
      %v936 = vadd.f32 %v864, %v935
      %v937 = vpop.f32.mrf.mxu0
      %938 = vdwg.mxu0
      %v939 = vmax.f32 %v936, 0.0
      %941 = vrot.lane.b32.xlu0 %v939, 1
      %v942 = vpop.permute.xlu0 %941
      %vm944 = vcmask 147464
      %945 = vst.msk [vmem:[%s440 + $0x1] sm:$0x1] %vm944, %v942
      %946 = vst.msk [vmem:[%s440 + $0x19] sm:$0x1] %vm944, %v942
      %947 = vst.msk [vmem:[%s440 + $0x31] sm:$0x1] %vm944, %v942
      %948 = vst.msk [vmem:[%s440 + $0x49] sm:$0x1] %vm944, %v942
      %949 = vrot.lane.b32.xlu0 %v939, 111
      %v950 = vpop.permute.xlu0 %949
      %vm952 = vcmask 148489
      %953 = vst.msk [vmem:[%s440 + $0x11] sm:$0x2] %vm952, %v950
      %954 = vst.msk [vmem:[%s440 + $0x29] sm:$0x2] %vm952, %v950
      %955 = vst.msk [vmem:[%s440 + $0x41] sm:$0x2] %vm952, %v950
      %956 = vst.msk [vmem:[%s440 + $0x59] sm:$0x2] %vm952, %v950
      %v957 = vld [vmem:[%s440] sm:$0xff]
      %v958 = vld [vmem:[%s440 + $0x8] sm:$0xff]
      %v959 = vld [vmem:[%s440 + $0x10] sm:$0xf]
      %v960 = vld [vmem:[%s498] sm:$0xff]
      %v961 = vld [vmem:[%s498 + $0x8] sm:$0xff]
      %v962 = vld [vmem:[%s498 + $0x10] sm:$0xf]
      %v963 = vld [vmem:[%s527] sm:$0xff]
      %v964 = vld [vmem:[%s527 + $0x8] sm:$0xff]
      %v965 = vld [vmem:[%s527 + $0x10] sm:$0xf]
      %v966 = vld [vmem:[%s556] sm:$0xff]
      %v967 = vld [vmem:[%s556 + $0x8] sm:$0xff]
      %v968 = vld [vmem:[%s556 + $0x10] sm:$0xf]
      %972 = vrot.lane.b32.xlu0 %v957, 126
      %v973 = vpop.permute.xlu0 %972
      %974 = vrot.lane.b32.xlu0 %v958, 126
      %v975 = vpop.permute.xlu0 %974
      %976 = vrot.lane.b32.xlu0 %v959, 126
      %v977 = vpop.permute.xlu0 %976
      %984 = vrot.lane.b32.xlu0 %v960, 1
      %v985 = vpop.permute.xlu0 %984
      %986 = vrot.lane.b32.xlu0 %v961, 1
      %v987 = vpop.permute.xlu0 %986
      %988 = vrot.lane.b32.xlu0 %v962, 1
      %v989 = vpop.permute.xlu0 %988
      %996 = vrot.lane.b32.xlu0 %v963, 4
      %v997 = vpop.permute.xlu0 %996
      %998 = vrot.lane.b32.xlu0 %v964, 4
      %v999 = vpop.permute.xlu0 %998
      %1000 = vrot.lane.b32.xlu0 %v965, 4
      %v1001 = vpop.permute.xlu0 %1000
      %1008 = vrot.lane.b32.xlu0 %v966, 7
      %v1009 = vpop.permute.xlu0 %1008
      %1010 = vrot.lane.b32.xlu0 %v967, 7
      %v1011 = vpop.permute.xlu0 %1010
      %1012 = vrot.lane.b32.xlu0 %v968, 7
      %v1013 = vpop.permute.xlu0 %1012
      %vm1017 = vcmask 23552
      %v1018 = vsel %vm1017, %v973, %v985
      %v1019 = vsel %vm1017, %v975, %v987
      %v1020 = vsel %vm1017, %v977, %v989
      %vm1021 = vcmask 48128
      %v1022 = vsel %vm1021, %v1018, %v997
      %v1023 = vsel %vm1021, %v1019, %v999
      %v1024 = vsel %vm1021, %v1020, %v1001
      %vm1025 = vcmask 72704
      %v1026 = vsel %vm1025, %v1022, %v1009
      %v1027 = vsel %vm1025, %v1023, %v1011
      %v1028 = vsel %vm1025, %v1024, %v1013
      %1029 = vxpose.xlu0.b32.start [1/16] %v1026, 128
      %1030 = vxpose.xlu0.b32.cont [2/16] %v1027, 128
      %1031 = vxpose.xlu0.b32.cont [3/16] %v1028, 128
      %1032 = vxpose.xlu0.b32.cont [4/16] 0.0, 128
      %1033 = vxpose.xlu0.b32.cont [5/16] 0.0, 128
      %1034 = vxpose.xlu0.b32.cont [6/16] 0.0, 128
      %1035 = vxpose.xlu0.b32.cont [7/16] 0.0, 128
      %1036 = vxpose.xlu0.b32.cont [8/16] 0.0, 128
      %1037 = vxpose.xlu0.b32.cont [9/16] 0.0, 128
      %1038 = vxpose.xlu0.b32.cont [10/16] 0.0, 128
      %1039 = vxpose.xlu0.b32.cont [11/16] 0.0, 128
      %1040 = vxpose.xlu0.b32.cont [12/16] 0.0, 128
      %1041 = vxpose.xlu0.b32.cont [13/16] 0.0, 128
      %1042 = vxpose.xlu0.b32.cont [14/16] 0.0, 128
      %1043 = vxpose.xlu0.b32.cont [15/16] 0.0, 128
      %1044 = vxpose.xlu0.b32.end [16/16] 0.0, 128
      %v1045 = vpop.trf.xlu0
      %v1046 = vpop.trf.xlu0
      %v1047 = vpop.trf.xlu0
      %v1048 = vpop.trf.xlu0
      %v1049 = vpop.trf.xlu0
      %v1050 = vpop.trf.xlu0
      %v1051 = vpop.trf.xlu0
      %v1052 = vpop.trf.xlu0
      %v1053 = vpop.trf.xlu0
      %v1054 = vpop.trf.xlu0
      %v1055 = vpop.trf.xlu0
      %v1056 = vpop.trf.xlu0
      %v1057 = vpop.trf.xlu0
      %v1058 = vpop.trf.xlu0
      %v1059 = vpop.trf.xlu0
      %v1060 = vpop.trf.xlu0
      %v1063 = vrot.slane %v1045, 4
      %v1064 = vrot.slane %v1046, 4
      %v1065 = vsel %vm601, %v1063, %v1064
      %1066 = vrot.lane.b32.xlu0 %v1063, 127
      %v1067 = vpop.permute.xlu0 %1066
      %1068 = vrot.lane.b32.xlu0 %v1065, 127
      %v1069 = vpop.permute.xlu0 %1068
      %1072 = vrot.lane.b32.xlu0 %v1045, 126
      %v1073 = vpop.permute.xlu0 %1072
      %1074 = vrot.lane.b32.xlu0 %v1046, 126
      %v1075 = vpop.permute.xlu0 %1074
      %v1078 = vsel %vm601, %v1046, %v1067
      %1079 = vrot.lane.b32.xlu0 %v957, 113
      %v1080 = vpop.permute.xlu0 %1079
      %1081 = vrot.lane.b32.xlu0 %v958, 113
      %v1082 = vpop.permute.xlu0 %1081
      %1083 = vrot.lane.b32.xlu0 %v959, 113
      %v1084 = vpop.permute.xlu0 %1083
      %1088 = vrot.lane.b32.xlu0 %v960, 116
      %v1089 = vpop.permute.xlu0 %1088
      %1090 = vrot.lane.b32.xlu0 %v961, 116
      %v1091 = vpop.permute.xlu0 %1090
      %1092 = vrot.lane.b32.xlu0 %v962, 116
      %v1093 = vpop.permute.xlu0 %1092
      %1097 = vrot.lane.b32.xlu0 %v963, 119
      %v1098 = vpop.permute.xlu0 %1097
      %1099 = vrot.lane.b32.xlu0 %v964, 119
      %v1100 = vpop.permute.xlu0 %1099
      %1101 = vrot.lane.b32.xlu0 %v965, 119
      %v1102 = vpop.permute.xlu0 %1101
      %1106 = vrot.lane.b32.xlu0 %v966, 122
      %v1107 = vpop.permute.xlu0 %1106
      %1108 = vrot.lane.b32.xlu0 %v967, 122
      %v1109 = vpop.permute.xlu0 %1108
      %1110 = vrot.lane.b32.xlu0 %v968, 122
      %v1111 = vpop.permute.xlu0 %1110
      %v1115 = vsel %vm1017, %v1080, %v1089
      %v1116 = vsel %vm1017, %v1082, %v1091
      %v1117 = vsel %vm1017, %v1084, %v1093
      %v1118 = vsel %vm1021, %v1115, %v1098
      %v1119 = vsel %vm1021, %v1116, %v1100
      %v1120 = vsel %vm1021, %v1117, %v1102
      %v1121 = vsel %vm1025, %v1118, %v1107
      %v1122 = vsel %vm1025, %v1119, %v1109
      %v1123 = vsel %vm1025, %v1120, %v1111
      %1124 = vxpose.xlu0.b32.start [1/16] %v1121, 128
      %1125 = vxpose.xlu0.b32.cont [2/16] %v1122, 128
      %1126 = vxpose.xlu0.b32.cont [3/16] %v1123, 128
      %1127 = vxpose.xlu0.b32.cont [4/16] 0.0, 128
      %1128 = vxpose.xlu0.b32.cont [5/16] 0.0, 128
      %1129 = vxpose.xlu0.b32.cont [6/16] 0.0, 128
      %1130 = vxpose.xlu0.b32.cont [7/16] 0.0, 128
      %1131 = vxpose.xlu0.b32.cont [8/16] 0.0, 128
      %1132 = vxpose.xlu0.b32.cont [9/16] 0.0, 128
      %1133 = vxpose.xlu0.b32.cont [10/16] 0.0, 128
      %1134 = vxpose.xlu0.b32.cont [11/16] 0.0, 128
      %1135 = vxpose.xlu0.b32.cont [12/16] 0.0, 128
      %1136 = vxpose.xlu0.b32.cont [13/16] 0.0, 128
      %1137 = vxpose.xlu0.b32.cont [14/16] 0.0, 128
      %1138 = vxpose.xlu0.b32.cont [15/16] 0.0, 128
      %1139 = vxpose.xlu0.b32.end [16/16] 0.0, 128
      %v1140 = vpop.trf.xlu0
      %v1141 = vpop.trf.xlu0
      %v1142 = vpop.trf.xlu0
      %v1143 = vpop.trf.xlu0
      %v1144 = vpop.trf.xlu0
      %v1145 = vpop.trf.xlu0
      %v1146 = vpop.trf.xlu0
      %v1147 = vpop.trf.xlu0
      %v1148 = vpop.trf.xlu0
      %v1149 = vpop.trf.xlu0
      %v1150 = vpop.trf.xlu0
      %v1151 = vpop.trf.xlu0
      %v1152 = vpop.trf.xlu0
      %v1153 = vpop.trf.xlu0
      %v1154 = vpop.trf.xlu0
      %v1155 = vpop.trf.xlu0
      %v1158 = vrot.slane %v1140, 4
      %v1159 = vrot.slane %v1141, 4
      %v1160 = vsel %vm601, %v1158, %v1159
      %1161 = vrot.lane.b32.xlu0 %v1158, 127
      %v1162 = vpop.permute.xlu0 %1161
      %1163 = vrot.lane.b32.xlu0 %v1160, 127
      %v1164 = vpop.permute.xlu0 %1163
      %1166 = vrot.lane.b32.xlu0 %v1140, 126
      %v1167 = vpop.permute.xlu0 %1166
      %1168 = vrot.lane.b32.xlu0 %v1141, 126
      %v1169 = vpop.permute.xlu0 %1168
      %v1170 = vsel %vm601, %v1141, %v1162
      %1172 = vrot.lane.b32.xlu0 %v1140, 18
      %v1173 = vpop.permute.xlu0 %1172
      %1174 = vrot.lane.b32.xlu0 %v1170, 18
      %v1175 = vpop.permute.xlu0 %1174
      %1176 = vrot.lane.b32.xlu0 %v1164, 18
      %v1177 = vpop.permute.xlu0 %1176
      %1178 = vrot.lane.b32.xlu0 %v1167, 18
      %v1179 = vpop.permute.xlu0 %1178
      %1180 = vrot.lane.b32.xlu0 %v1169, 18
      %v1181 = vpop.permute.xlu0 %1180
      %v1187 = vsel %vm454, %v1045, %v1173
      %v1188 = vsel %vm454, %v1078, %v1175
      %v1189 = vsel %vm454, %v1069, %v1177
      %v1190 = vsel %vm454, %v1073, %v1179
      %v1191 = vsel %vm454, %v1075, %v1181
      %1193 = vset.pattern.permute.xlu0 0
      %1194 = vperm.xlu0 %1193, %v572
      %v1195 = vpop.permute.xlu0 %1194
      %1198 = vset.pattern.permute.xlu0 0
      %1199 = vperm.xlu0 %1198, %v573
      %v1200 = vpop.permute.xlu0 %1199
      %v1203 = vsel %vm680, %v570, 0
      %v1206 = vsel %vm680, %v571, 0
      %v1209 = vsel %vm601, %v1191, 0
      %1211 = vmatprep.subr.mxu0 0.0
      %1212 = vmatpush1.msra.mxu0 0.0
      %1213 = vmatprep.subr.mxu0 0.0
      %1214 = vmatpush1.msra.mxu0 0.0
      %1215 = vmatprep.subr.mxu0 0.0
      %1216 = vmatpush1.msra.mxu0 0.0
      %1217 = vmatprep.subr.mxu0 0.0
      %1218 = vmatpush1.msra.mxu0 0.0
      %1219 = vmatprep.subr.mxu0 0.0
      %1220 = vmatpush1.msra.mxu0 0.0
      %1221 = vmatprep.subr.mxu0 0.0
      %1222 = vmatpush1.msra.mxu0 0.0
      %1223 = vmatprep.subr.mxu0 0.0
      %1224 = vmatpush1.msra.mxu0 0.0
      %1225 = vmatprep.subr.mxu0 0.0
      %1226 = vmatpush1.msra.mxu0 0.0
      %1227 = vmatprep.subr.mxu0 0.0
      %1228 = vmatpush1.msra.mxu0 0.0
      %1229 = vmatprep.subr.mxu0 0.0
      %1230 = vmatpush1.msra.mxu0 0.0
      %1231 = vmatprep.subr.mxu0 0.0
      %1232 = vmatpush1.msra.mxu0 0.0
      %1233 = vmatprep.subr.mxu0 0.0
      %1234 = vmatpush1.msra.mxu0 %v1209
      %1235 = vmatprep.subr.mxu0 0.0
      %1236 = vmatpush1.msra.mxu0 %v1190
      %1237 = vmatprep.subr.mxu0 0.0
      %1238 = vmatpush1.msra.mxu0 %v1189
      %1239 = vmatprep.subr.mxu0 0.0
      %1240 = vmatpush1.msra.mxu0 %v1188
      %1241 = vmatprep.subr.mxu0 0.0
      %1242 = vmatpush1.msra.mxu0 %v1187
      %1243 = vmatprep.subr.mxu0 0.0
      %1244 = vmatpush2.msra.mxu0 0.0
      %1245 = vmatprep.subr.mxu0 0.0
      %1246 = vmatpush2.msra.mxu0 0.0
      %1247 = vmatprep.subr.mxu0 0.0
      %1248 = vmatpush2.msra.mxu0 0.0
      %1249 = vmatprep.subr.mxu0 0.0
      %1250 = vmatpush2.msra.mxu0 0.0
      %1251 = vmatprep.subr.mxu0 0.0
      %1252 = vmatpush2.msra.mxu0 0.0
      %1253 = vmatprep.subr.mxu0 0.0
      %1254 = vmatpush2.msra.mxu0 0.0
      %1255 = vmatprep.subr.mxu0 0.0
      %1256 = vmatpush2.msra.mxu0 0.0
      %1257 = vmatprep.subr.mxu0 0.0
      %1258 = vmatpush2.msra.mxu0 0.0
      %1259 = vmatprep.subr.mxu0 0.0
      %1260 = vmatpush2.msra.mxu0 0.0
      %1261 = vmatprep.subr.mxu0 0.0
      %1262 = vmatpush2.msra.mxu0 0.0
      %1263 = vmatprep.subr.mxu0 0.0
      %1264 = vmatpush2.msra.mxu0 0.0
      %1265 = vmatprep.subr.mxu0 0.0
      %1266 = vmatpush2.msra.mxu0 0.0
      %1267 = vmatprep.subr.mxu0 0.0
      %1268 = vmatpush2.msra.mxu0 0.0
      %1269 = vmatprep.subr.mxu0 0.0
      %1270 = vmatpush2.msra.mxu0 0.0
      %1271 = vmatprep.subr.mxu0 0.0
      %1272 = vmatpush2.msra.mxu0 0.0
      %1273 = vmatprep.subr.mxu0 0.0
      %1274 = vmatpush2.msra.mxu0 0.0
      %1275 = vmatprep.mubr.f32.mxu0 0.0
      %1276 = vmatmul.mubr.f32.gmra.mxu0 %v1203
      %v1277 = vpop.f32.mrf.mxu0
      %v1278 = vadd.f32 %v1195, %v1277
      %v1279 = vpop.f32.mrf.mxu0
      %1280 = vmatprep.mubr.f32.mxu0 0.0
      %1281 = vmatmul.mubr.f32.gmra.mxu0 %v1206
      %v1282 = vpop.f32.mrf.mxu0
      %v1283 = vadd.f32 %v1200, %v1282
      %v1284 = vpop.f32.mrf.mxu0
      %1285 = vdwg.mxu0
      %v1286 = vmax.f32 %v1278, 0.0
      %v1287 = vmax.f32 %v1283, 0.0
      %1289 = vset.pattern.permute.xlu0 0
      %1290 = vperm.xlu0 %1289, %v576
      %v1291 = vpop.permute.xlu0 %1290
      %1294 = vset.pattern.permute.xlu0 0
      %1295 = vperm.xlu0 %1294, %v577
      %v1296 = vpop.permute.xlu0 %1295
      %v1299 = vsel %vm777, %v574, 0
      %v1302 = vsel %vm777, %v575, 0
      %1304 = vmatprep.subr.mxu0 0.0
      %1305 = vmatpush1.msra.mxu0 0.0
      %1306 = vmatprep.subr.mxu0 0.0
      %1307 = vmatpush1.msra.mxu0 0.0
      %1308 = vmatprep.subr.mxu0 0.0
      %1309 = vmatpush1.msra.mxu0 0.0
      %1310 = vmatprep.subr.mxu0 0.0
      %1311 = vmatpush1.msra.mxu0 0.0
      %1312 = vmatprep.subr.mxu0 0.0
      %1313 = vmatpush1.msra.mxu0 0.0
      %1314 = vmatprep.subr.mxu0 0.0
      %1315 = vmatpush1.msra.mxu0 0.0
      %1316 = vmatprep.subr.mxu0 0.0
      %1317 = vmatpush1.msra.mxu0 0.0
      %1318 = vmatprep.subr.mxu0 0.0
      %1319 = vmatpush1.msra.mxu0 0.0
      %1320 = vmatprep.subr.mxu0 0.0
      %1321 = vmatpush1.msra.mxu0 0.0
      %1322 = vmatprep.subr.mxu0 0.0
      %1323 = vmatpush1.msra.mxu0 0.0
      %1324 = vmatprep.subr.mxu0 0.0
      %1325 = vmatpush1.msra.mxu0 0.0
      %1326 = vmatprep.subr.mxu0 0.0
      %1327 = vmatpush1.msra.mxu0 0.0
      %1328 = vmatprep.subr.mxu0 0.0
      %1329 = vmatpush1.msra.mxu0 0.0
      %1330 = vmatprep.subr.mxu0 0.0
      %1331 = vmatpush1.msra.mxu0 0.0
      %1332 = vmatprep.subr.mxu0 0.0
      %1333 = vmatpush1.msra.mxu0 %v1287
      %1334 = vmatprep.subr.mxu0 0.0
      %1335 = vmatpush1.msra.mxu0 %v1286
      %1336 = vmatprep.subr.mxu0 0.0
      %1337 = vmatpush2.msra.mxu0 0.0
      %1338 = vmatprep.subr.mxu0 0.0
      %1339 = vmatpush2.msra.mxu0 0.0
      %1340 = vmatprep.subr.mxu0 0.0
      %1341 = vmatpush2.msra.mxu0 0.0
      %1342 = vmatprep.subr.mxu0 0.0
      %1343 = vmatpush2.msra.mxu0 0.0
      %1344 = vmatprep.subr.mxu0 0.0
      %1345 = vmatpush2.msra.mxu0 0.0
      %1346 = vmatprep.subr.mxu0 0.0
      %1347 = vmatpush2.msra.mxu0 0.0
      %1348 = vmatprep.subr.mxu0 0.0
      %1349 = vmatpush2.msra.mxu0 0.0
      %1350 = vmatprep.subr.mxu0 0.0
      %1351 = vmatpush2.msra.mxu0 0.0
      %1352 = vmatprep.subr.mxu0 0.0
      %1353 = vmatpush2.msra.mxu0 0.0
      %1354 = vmatprep.subr.mxu0 0.0
      %1355 = vmatpush2.msra.mxu0 0.0
      %1356 = vmatprep.subr.mxu0 0.0
      %1357 = vmatpush2.msra.mxu0 0.0
      %1358 = vmatprep.subr.mxu0 0.0
      %1359 = vmatpush2.msra.mxu0 0.0
      %1360 = vmatprep.subr.mxu0 0.0
      %1361 = vmatpush2.msra.mxu0 0.0
      %1362 = vmatprep.subr.mxu0 0.0
      %1363 = vmatpush2.msra.mxu0 0.0
      %1364 = vmatprep.subr.mxu0 0.0
      %1365 = vmatpush2.msra.mxu0 0.0
      %1366 = vmatprep.subr.mxu0 0.0
      %1367 = vmatpush2.msra.mxu0 0.0
      %1368 = vmatprep.mubr.f32.mxu0 0.0
      %1369 = vmatmul.mubr.f32.gmra.mxu0 %v1299
      %v1370 = vpop.f32.mrf.mxu0
      %v1371 = vadd.f32 %v1291, %v1370
      %v1372 = vpop.f32.mrf.mxu0
      %1373 = vmatprep.mubr.f32.mxu0 0.0
      %1374 = vmatmul.mubr.f32.gmra.mxu0 %v1302
      %v1375 = vpop.f32.mrf.mxu0
      %v1376 = vadd.f32 %v1296, %v1375
      %v1377 = vpop.f32.mrf.mxu0
      %1378 = vdwg.mxu0
      %v1379 = vmax.f32 %v1371, 0.0
      %v1380 = vmax.f32 %v1376, 0.0
      %1382 = vset.pattern.permute.xlu0 0
      %1383 = vperm.xlu0 %1382, %v579
      %v1384 = vpop.permute.xlu0 %1383
      %v1387 = vsel %vm777, %v578, 0
      %1389 = vmatprep.subr.mxu0 0.0
      %1390 = vmatpush1.msra.mxu0 0.0
      %1391 = vmatprep.subr.mxu0 0.0
      %1392 = vmatpush1.msra.mxu0 0.0
      %1393 = vmatprep.subr.mxu0 0.0
      %1394 = vmatpush1.msra.mxu0 0.0
      %1395 = vmatprep.subr.mxu0 0.0
      %1396 = vmatpush1.msra.mxu0 0.0
      %1397 = vmatprep.subr.mxu0 0.0
      %1398 = vmatpush1.msra.mxu0 0.0
      %1399 = vmatprep.subr.mxu0 0.0
      %1400 = vmatpush1.msra.mxu0 0.0
      %1401 = vmatprep.subr.mxu0 0.0
      %1402 = vmatpush1.msra.mxu0 0.0
      %1403 = vmatprep.subr.mxu0 0.0
      %1404 = vmatpush1.msra.mxu0 0.0
      %1405 = vmatprep.subr.mxu0 0.0
      %1406 = vmatpush1.msra.mxu0 0.0
      %1407 = vmatprep.subr.mxu0 0.0
      %1408 = vmatpush1.msra.mxu0 0.0
      %1409 = vmatprep.subr.mxu0 0.0
      %1410 = vmatpush1.msra.mxu0 0.0
      %1411 = vmatprep.subr.mxu0 0.0
      %1412 = vmatpush1.msra.mxu0 0.0
      %1413 = vmatprep.subr.mxu0 0.0
      %1414 = vmatpush1.msra.mxu0 0.0
      %1415 = vmatprep.subr.mxu0 0.0
      %1416 = vmatpush1.msra.mxu0 0.0
      %1417 = vmatprep.subr.mxu0 0.0
      %1418 = vmatpush1.msra.mxu0 %v1380
      %1419 = vmatprep.subr.mxu0 0.0
      %1420 = vmatpush1.msra.mxu0 %v1379
      %1421 = vmatprep.subr.mxu0 0.0
      %1422 = vmatpush2.msra.mxu0 0.0
      %1423 = vmatprep.subr.mxu0 0.0
      %1424 = vmatpush2.msra.mxu0 0.0
      %1425 = vmatprep.subr.mxu0 0.0
      %1426 = vmatpush2.msra.mxu0 0.0
      %1427 = vmatprep.subr.mxu0 0.0
      %1428 = vmatpush2.msra.mxu0 0.0
      %1429 = vmatprep.subr.mxu0 0.0
      %1430 = vmatpush2.msra.mxu0 0.0
      %1431 = vmatprep.subr.mxu0 0.0
      %1432 = vmatpush2.msra.mxu0 0.0
      %1433 = vmatprep.subr.mxu0 0.0
      %1434 = vmatpush2.msra.mxu0 0.0
      %1435 = vmatprep.subr.mxu0 0.0
      %1436 = vmatpush2.msra.mxu0 0.0
      %1437 = vmatprep.subr.mxu0 0.0
      %1438 = vmatpush2.msra.mxu0 0.0
      %1439 = vmatprep.subr.mxu0 0.0
      %1440 = vmatpush2.msra.mxu0 0.0
      %1441 = vmatprep.subr.mxu0 0.0
      %1442 = vmatpush2.msra.mxu0 0.0
      %1443 = vmatprep.subr.mxu0 0.0
      %1444 = vmatpush2.msra.mxu0 0.0
      %1445 = vmatprep.subr.mxu0 0.0
      %1446 = vmatpush2.msra.mxu0 0.0
      %1447 = vmatprep.subr.mxu0 0.0
      %1448 = vmatpush2.msra.mxu0 0.0
      %1449 = vmatprep.subr.mxu0 0.0
      %1450 = vmatpush2.msra.mxu0 0.0
      %1451 = vmatprep.subr.mxu0 0.0
      %1452 = vmatpush2.msra.mxu0 0.0
      %1453 = vmatprep.mubr.f32.mxu0 0.0
      %1454 = vmatmul.mubr.f32.gmra.mxu0 %v1387
      %v1455 = vpop.f32.mrf.mxu0
      %v1456 = vadd.f32 %v1384, %v1455
      %v1457 = vpop.f32.mrf.mxu0
      %1458 = vdwg.mxu0
      %v1459 = vmax.f32 %v1456, 0.0
      %1460 = vxpose.xlu0.b32.start [1/16] %v1459, 128
      %1461 = vxpose.xlu0.b32.cont [2/16] 0.0, 128
      %1462 = vxpose.xlu0.b32.cont [3/16] 0.0, 128
      %1463 = vxpose.xlu0.b32.cont [4/16] 0.0, 128
      %1464 = vxpose.xlu0.b32.cont [5/16] 0.0, 128
      %1465 = vxpose.xlu0.b32.cont [6/16] 0.0, 128
      %1466 = vxpose.xlu0.b32.cont [7/16] 0.0, 128
      %1467 = vxpose.xlu0.b32.cont [8/16] 0.0, 128
      %1468 = vxpose.xlu0.b32.cont [9/16] 0.0, 128
      %1469 = vxpose.xlu0.b32.cont [10/16] 0.0, 128
      %1470 = vxpose.xlu0.b32.cont [11/16] 0.0, 128
      %1471 = vxpose.xlu0.b32.cont [12/16] 0.0, 128
      %1472 = vxpose.xlu0.b32.cont [13/16] 0.0, 128
      %1473 = vxpose.xlu0.b32.cont [14/16] 0.0, 128
      %1474 = vxpose.xlu0.b32.cont [15/16] 0.0, 128
      %1475 = vxpose.xlu0.b32.end [16/16] 0.0, 128
      %v1476 = vpop.trf.xlu0
      %v1477 = vpop.trf.xlu0
      %v1478 = vpop.trf.xlu0
      %v1479 = vpop.trf.xlu0
      %v1480 = vpop.trf.xlu0
      %v1481 = vpop.trf.xlu0
      %v1482 = vpop.trf.xlu0
      %v1483 = vpop.trf.xlu0
      %v1484 = vpop.trf.xlu0
      %v1485 = vpop.trf.xlu0
      %v1486 = vpop.trf.xlu0
      %v1487 = vpop.trf.xlu0
      %v1488 = vpop.trf.xlu0
      %v1489 = vpop.trf.xlu0
      %v1490 = vpop.trf.xlu0
      %v1491 = vpop.trf.xlu0
      %v1493 = vrot.slane %v1459, 1
      %1494 = vrot.lane.b32.xlu0 %v1493, 110
      %v1495 = vpop.permute.xlu0 %1494
      %1497 = vxpose.xlu0.b32.start [1/16] %v1495, 128
      %1498 = vxpose.xlu0.b32.cont [2/16] 0.0, 128
      %1499 = vxpose.xlu0.b32.cont [3/16] 0.0, 128
      %1500 = vxpose.xlu0.b32.cont [4/16] 0.0, 128
      %1501 = vxpose.xlu0.b32.cont [5/16] 0.0, 128
      %1502 = vxpose.xlu0.b32.cont [6/16] 0.0, 128
      %1503 = vxpose.xlu0.b32.cont [7/16] 0.0, 128
      %1504 = vxpose.xlu0.b32.cont [8/16] 0.0, 128
      %1505 = vxpose.xlu0.b32.cont [9/16] 0.0, 128
      %1506 = vxpose.xlu0.b32.cont [10/16] 0.0, 128
      %1507 = vxpose.xlu0.b32.cont [11/16] 0.0, 128
      %1508 = vxpose.xlu0.b32.cont [12/16] 0.0, 128
      %1509 = vxpose.xlu0.b32.cont [13/16] 0.0, 128
      %1510 = vxpose.xlu0.b32.cont [14/16] 0.0, 128
      %1511 = vxpose.xlu0.b32.cont [15/16] 0.0, 128
      %1512 = vxpose.xlu0.b32.end [16/16] 0.0, 128
      %v1513 = vpop.trf.xlu0
      %v1514 = vpop.trf.xlu0
      %v1515 = vpop.trf.xlu0
      %v1516 = vpop.trf.xlu0
      %v1517 = vpop.trf.xlu0
      %v1518 = vpop.trf.xlu0
      %v1519 = vpop.trf.xlu0
      %v1520 = vpop.trf.xlu0
      %v1521 = vpop.trf.xlu0
      %v1522 = vpop.trf.xlu0
      %v1523 = vpop.trf.xlu0
      %v1524 = vpop.trf.xlu0
      %v1525 = vpop.trf.xlu0
      %v1526 = vpop.trf.xlu0
      %v1527 = vpop.trf.xlu0
      %v1528 = vpop.trf.xlu0
      %1532 = vrot.lane.b32.xlu0 %v1476, 1
      %v1533 = vpop.permute.xlu0 %1532
      %1534 = vrot.lane.b32.xlu0 %v1477, 1
      %v1535 = vpop.permute.xlu0 %1534
      %1536 = vrot.lane.b32.xlu0 %v1478, 1
      %v1537 = vpop.permute.xlu0 %1536
      %vm1541 = vcmask 15368
      %1542 = vst.msk [vmem:[%s440 + $0x1] sm:$0xff] %vm1541, %v1533
      %1543 = vst.msk [vmem:[%s440 + $0x9] sm:$0xff] %vm1541, %v1535
      %vm1544 = vcmask 9224
      %1545 = vst.msk [vmem:[%s440 + $0x11] sm:$0x3] %vm1544, %v1537
      %1546 = vst.msk [vmem:[%s440 + $0x19] sm:$0xff] %vm1541, %v1533
      %1547 = vst.msk [vmem:[%s440 + $0x21] sm:$0xff] %vm1541, %v1535
      %1548 = vst.msk [vmem:[%s440 + $0x29] sm:$0x3] %vm1544, %v1537
      %1549 = vst.msk [vmem:[%s440 + $0x31] sm:$0xff] %vm1541, %v1533
      %1550 = vst.msk [vmem:[%s440 + $0x39] sm:$0xff] %vm1541, %v1535
      %1551 = vst.msk [vmem:[%s440 + $0x41] sm:$0x3] %vm1544, %v1537
      %1552 = vst.msk [vmem:[%s440 + $0x49] sm:$0xff] %vm1541, %v1533
      %1553 = vst.msk [vmem:[%s440 + $0x51] sm:$0xff] %vm1541, %v1535
      %1554 = vst.msk [vmem:[%s440 + $0x59] sm:$0x3] %vm1544, %v1537
      %1558 = vrot.lane.b32.xlu0 %v1513, 18
      %v1559 = vpop.permute.xlu0 %1558
      %1560 = vrot.lane.b32.xlu0 %v1514, 18
      %v1561 = vpop.permute.xlu0 %1560
      %1562 = vrot.lane.b32.xlu0 %v1515, 18
      %v1563 = vpop.permute.xlu0 %1562
      %vm1567 = vcmask 154768
      %1568 = vst.msk [vmem:[%s440 + $0x1] sm:$0xff] %vm1567, %v1559
      %1569 = vst.msk [vmem:[%s440 + $0x9] sm:$0xff] %vm1567, %v1561
      %vm1570 = vcmask 148624
      %1571 = vst.msk [vmem:[%s440 + $0x11] sm:$0x3] %vm1570, %v1563
      %1572 = vst.msk [vmem:[%s440 + $0x19] sm:$0xff] %vm1567, %v1559
      %1573 = vst.msk [vmem:[%s440 + $0x21] sm:$0xff] %vm1567, %v1561
      %1574 = vst.msk [vmem:[%s440 + $0x29] sm:$0x3] %vm1570, %v1563
      %1575 = vst.msk [vmem:[%s440 + $0x31] sm:$0xff] %vm1567, %v1559
      %1576 = vst.msk [vmem:[%s440 + $0x39] sm:$0xff] %vm1567, %v1561
      %1577 = vst.msk [vmem:[%s440 + $0x41] sm:$0x3] %vm1570, %v1563
      %1578 = vst.msk [vmem:[%s440 + $0x49] sm:$0xff] %vm1567, %v1559
      %1579 = vst.msk [vmem:[%s440 + $0x51] sm:$0xff] %vm1567, %v1561
      %1580 = vst.msk [vmem:[%s440 + $0x59] sm:$0x3] %vm1570, %v1563
      %v1581 = vld [vmem:[%s440 + $0x1] sm:$0x7]
      %v1582 = vld [vmem:[%s498 + $0x1] sm:$0x7]
      %v1583 = vld [vmem:[%s527 + $0x1] sm:$0x7]
      %v1584 = vld [vmem:[%s556 + $0x1] sm:$0x7]
      %v1586 = vrot.slane %v1582, 5
      %v1589 = vrot.slane %v1583, 2
      %v1592 = vrot.slane %v1584, 7
      %v1594 = vsel %vm593, %v1581, %v1586
      %v1595 = vsel %vm595, %v1594, %v1589
      %v1596 = vsel %vm597, %v1589, %v1592
      %v1599 = vrot.slane %v1595, 4
      %v1600 = vrot.slane %v1596, 4
      %v1601 = vsel %vm601, %v1599, %v1600
      %1602 = vrot.lane.b32.xlu0 %v1599, 127
      %v1603 = vpop.permute.xlu0 %1602
      %1604 = vrot.lane.b32.xlu0 %v1601, 127
      %v1605 = vpop.permute.xlu0 %1604
      %1608 = vrot.lane.b32.xlu0 %v1595, 126
      %v1609 = vpop.permute.xlu0 %1608
      %1610 = vrot.lane.b32.xlu0 %v1596, 126
      %v1611 = vpop.permute.xlu0 %1610
      %v1614 = vsel %vm601, %v1596, %v1603
      %v1615 = vld [vmem:[%s440 + $0x10] sm:$0x7]
      %v1616 = vld [vmem:[%s498 + $0x10] sm:$0x7]
      %v1617 = vld [vmem:[%s527 + $0x10] sm:$0x7]
      %v1618 = vld [vmem:[%s556 + $0x10] sm:$0x7]
      %v1620 = vrot.slane %v1616, 5
      %v1623 = vrot.slane %v1617, 2
      %v1626 = vrot.slane %v1618, 7
      %v1628 = vsel %vm593, %v1615, %v1620
      %v1629 = vsel %vm595, %v1628, %v1623
      %v1630 = vsel %vm597, %v1623, %v1626
      %v1633 = vrot.slane %v1629, 4
      %v1634 = vrot.slane %v1630, 4
      %v1635 = vsel %vm601, %v1633, %v1634
      %1636 = vrot.lane.b32.xlu0 %v1633, 127
      %v1637 = vpop.permute.xlu0 %1636
      %1638 = vrot.lane.b32.xlu0 %v1635, 127
      %v1639 = vpop.permute.xlu0 %1638
      %1641 = vrot.lane.b32.xlu0 %v1629, 126
      %v1642 = vpop.permute.xlu0 %1641
      %1643 = vrot.lane.b32.xlu0 %v1630, 126
      %v1644 = vpop.permute.xlu0 %1643
      %v1645 = vsel %vm601, %v1630, %v1637
      %1647 = vrot.lane.b32.xlu0 %v1629, 18
      %v1648 = vpop.permute.xlu0 %1647
      %1649 = vrot.lane.b32.xlu0 %v1645, 18
      %v1650 = vpop.permute.xlu0 %1649
      %1651 = vrot.lane.b32.xlu0 %v1639, 18
      %v1652 = vpop.permute.xlu0 %1651
      %1653 = vrot.lane.b32.xlu0 %v1642, 18
      %v1654 = vpop.permute.xlu0 %1653
      %1655 = vrot.lane.b32.xlu0 %v1644, 18
      %v1656 = vpop.permute.xlu0 %1655
      %v1662 = vsel %vm454, %v1595, %v1648
      %v1663 = vsel %vm454, %v1614, %v1650
      %v1664 = vsel %vm454, %v1605, %v1652
      %v1665 = vsel %vm454, %v1609, %v1654
      %v1666 = vsel %vm454, %v1611, %v1656
      %v1668 = vsel %vm601, %v1666, 0
      %1670 = vmatprep.subr.mxu0 0.0
      %1671 = vmatpush1.msra.mxu0 0.0
      %1672 = vmatprep.subr.mxu0 0.0
      %1673 = vmatpush1.msra.mxu0 0.0
      %1674 = vmatprep.subr.mxu0 0.0
      %1675 = vmatpush1.msra.mxu0 0.0
      %1676 = vmatprep.subr.mxu0 0.0
      %1677 = vmatpush1.msra.mxu0 0.0
      %1678 = vmatprep.subr.mxu0 0.0
      %1679 = vmatpush1.msra.mxu0 0.0
      %1680 = vmatprep.subr.mxu0 0.0
      %1681 = vmatpush1.msra.mxu0 0.0
      %1682 = vmatprep.subr.mxu0 0.0
      %1683 = vmatpush1.msra.mxu0 0.0
      %1684 = vmatprep.subr.mxu0 0.0
      %1685 = vmatpush1.msra.mxu0 0.0
      %1686 = vmatprep.subr.mxu0 0.0
      %1687 = vmatpush1.msra.mxu0 0.0
      %1688 = vmatprep.subr.mxu0 0.0
      %1689 = vmatpush1.msra.mxu0 0.0
      %1690 = vmatprep.subr.mxu0 0.0
      %1691 = vmatpush1.msra.mxu0 0.0
      %1692 = vmatprep.subr.mxu0 0.0
      %1693 = vmatpush1.msra.mxu0 %v1668
      %1694 = vmatprep.subr.mxu0 0.0
      %1695 = vmatpush1.msra.mxu0 %v1665
      %1696 = vmatprep.subr.mxu0 0.0
      %1697 = vmatpush1.msra.mxu0 %v1664
      %1698 = vmatprep.subr.mxu0 0.0
      %1699 = vmatpush1.msra.mxu0 %v1663
      %1700 = vmatprep.subr.mxu0 0.0
      %1701 = vmatpush1.msra.mxu0 %v1662
      %1702 = vmatprep.subr.mxu0 0.0
      %1703 = vmatpush2.msra.mxu0 0.0
      %1704 = vmatprep.subr.mxu0 0.0
      %1705 = vmatpush2.msra.mxu0 0.0
      %1706 = vmatprep.subr.mxu0 0.0
      %1707 = vmatpush2.msra.mxu0 0.0
      %1708 = vmatprep.subr.mxu0 0.0
      %1709 = vmatpush2.msra.mxu0 0.0
      %1710 = vmatprep.subr.mxu0 0.0
      %1711 = vmatpush2.msra.mxu0 0.0
      %1712 = vmatprep.subr.mxu0 0.0
      %1713 = vmatpush2.msra.mxu0 0.0
      %1714 = vmatprep.subr.mxu0 0.0
      %1715 = vmatpush2.msra.mxu0 0.0
      %1716 = vmatprep.subr.mxu0 0.0
      %1717 = vmatpush2.msra.mxu0 0.0
      %1718 = vmatprep.subr.mxu0 0.0
      %1719 = vmatpush2.msra.mxu0 0.0
      %1720 = vmatprep.subr.mxu0 0.0
      %1721 = vmatpush2.msra.mxu0 0.0
      %1722 = vmatprep.subr.mxu0 0.0
      %1723 = vmatpush2.msra.mxu0 0.0
      %1724 = vmatprep.subr.mxu0 0.0
      %1725 = vmatpush2.msra.mxu0 0.0
      %1726 = vmatprep.subr.mxu0 0.0
      %1727 = vmatpush2.msra.mxu0 0.0
      %1728 = vmatprep.subr.mxu0 0.0
      %1729 = vmatpush2.msra.mxu0 0.0
      %1730 = vmatprep.subr.mxu0 0.0
      %1731 = vmatpush2.msra.mxu0 0.0
      %1732 = vmatprep.subr.mxu0 0.0
      %1733 = vmatpush2.msra.mxu0 0.0
      %1734 = vmatprep.mubr.f32.mxu0 0.0
      %1735 = vmatmul.mubr.f32.gmra.mxu0 %v682
      %v1736 = vpop.f32.mrf.mxu0
      %v1737 = vadd.f32 %v673, %v1736
      %v1738 = vpop.f32.mrf.mxu0
      %1739 = vmatprep.mubr.f32.mxu0 0.0
      %1740 = vmatmul.mubr.f32.gmra.mxu0 %v685
      %v1741 = vpop.f32.mrf.mxu0
      %v1742 = vadd.f32 %v678, %v1741
      %v1743 = vpop.f32.mrf.mxu0
      %1744 = vdwg.mxu0
      %v1745 = vmax.f32 %v1737, 0.0
      %v1746 = vmax.f32 %v1742, 0.0
      %1747 = vmatprep.subr.mxu0 0.0
      %1748 = vmatpush1.msra.mxu0 0.0
      %1749 = vmatprep.subr.mxu0 0.0
      %1750 = vmatpush1.msra.mxu0 0.0
      %1751 = vmatprep.subr.mxu0 0.0
      %1752 = vmatpush1.msra.mxu0 0.0
      %1753 = vmatprep.subr.mxu0 0.0
      %1754 = vmatpush1.msra.mxu0 0.0
      %1755 = vmatprep.subr.mxu0 0.0
      %1756 = vmatpush1.msra.mxu0 0.0
      %1757 = vmatprep.subr.mxu0 0.0
      %1758 = vmatpush1.msra.mxu0 0.0
      %1759 = vmatprep.subr.mxu0 0.0
      %1760 = vmatpush1.msra.mxu0 0.0
      %1761 = vmatprep.subr.mxu0 0.0
      %1762 = vmatpush1.msra.mxu0 0.0
      %1763 = vmatprep.subr.mxu0 0.0
      %1764 = vmatpush1.msra.mxu0 0.0
      %1765 = vmatprep.subr.mxu0 0.0
      %1766 = vmatpush1.msra.mxu0 0.0
      %1767 = vmatprep.subr.mxu0 0.0
      %1768 = vmatpush1.msra.mxu0 0.0
      %1769 = vmatprep.subr.mxu0 0.0
      %1770 = vmatpush1.msra.mxu0 0.0
      %1771 = vmatprep.subr.mxu0 0.0
      %1772 = vmatpush1.msra.mxu0 0.0
      %1773 = vmatprep.subr.mxu0 0.0
      %1774 = vmatpush1.msra.mxu0 0.0
      %1775 = vmatprep.subr.mxu0 0.0
      %1776 = vmatpush1.msra.mxu0 %v1746
      %1777 = vmatprep.subr.mxu0 0.0
      %1778 = vmatpush1.msra.mxu0 %v1745
      %1779 = vmatprep.subr.mxu0 0.0
      %1780 = vmatpush2.msra.mxu0 0.0
      %1781 = vmatprep.subr.mxu0 0.0
      %1782 = vmatpush2.msra.mxu0 0.0
      %1783 = vmatprep.subr.mxu0 0.0
      %1784 = vmatpush2.msra.mxu0 0.0
      %1785 = vmatprep.subr.mxu0 0.0
      %1786 = vmatpush2.msra.mxu0 0.0
      %1787 = vmatprep.subr.mxu0 0.0
      %1788 = vmatpush2.msra.mxu0 0.0
      %1789 = vmatprep.subr.mxu0 0.0
      %1790 = vmatpush2.msra.mxu0 0.0
      %1791 = vmatprep.subr.mxu0 0.0
      %1792 = vmatpush2.msra.mxu0 0.0
      %1793 = vmatprep.subr.mxu0 0.0
      %1794 = vmatpush2.msra.mxu0 0.0
      %1795 = vmatprep.subr.mxu0 0.0
      %1796 = vmatpush2.msra.mxu0 0.0
      %1797 = vmatprep.subr.mxu0 0.0
      %1798 = vmatpush2.msra.mxu0 0.0
      %1799 = vmatprep.subr.mxu0 0.0
      %1800 = vmatpush2.msra.mxu0 0.0
      %1801 = vmatprep.subr.mxu0 0.0
      %1802 = vmatpush2.msra.mxu0 0.0
      %1803 = vmatprep.subr.mxu0 0.0
      %1804 = vmatpush2.msra.mxu0 0.0
      %1805 = vmatprep.subr.mxu0 0.0
      %1806 = vmatpush2.msra.mxu0 0.0
      %1807 = vmatprep.subr.mxu0 0.0
      %1808 = vmatpush2.msra.mxu0 0.0
      %1809 = vmatprep.subr.mxu0 0.0
      %1810 = vmatpush2.msra.mxu0 0.0
      %1811 = vmatprep.mubr.f32.mxu0 0.0
      %1812 = vmatmul.mubr.f32.gmra.mxu0 %v779
      %v1813 = vpop.f32.mrf.mxu0
      %v1814 = vadd.f32 %v770, %v1813
      %v1815 = vpop.f32.mrf.mxu0
      %1816 = vmatprep.mubr.f32.mxu0 0.0
      %1817 = vmatmul.mubr.f32.gmra.mxu0 %v782
      %v1818 = vpop.f32.mrf.mxu0
      %v1819 = vadd.f32 %v775, %v1818
      %v1820 = vpop.f32.mrf.mxu0
      %1821 = vdwg.mxu0
      %v1822 = vmax.f32 %v1814, 0.0
      %v1823 = vmax.f32 %v1819, 0.0
      %1824 = vmatprep.subr.mxu0 0.0
      %1825 = vmatpush1.msra.mxu0 0.0
      %1826 = vmatprep.subr.mxu0 0.0
      %1827 = vmatpush1.msra.mxu0 0.0
      %1828 = vmatprep.subr.mxu0 0.0
      %1829 = vmatpush1.msra.mxu0 0.0
      %1830 = vmatprep.subr.mxu0 0.0
      %1831 = vmatpush1.msra.mxu0 0.0
      %1832 = vmatprep.subr.mxu0 0.0
      %1833 = vmatpush1.msra.mxu0 0.0
      %1834 = vmatprep.subr.mxu0 0.0
      %1835 = vmatpush1.msra.mxu0 0.0
      %1836 = vmatprep.subr.mxu0 0.0
      %1837 = vmatpush1.msra.mxu0 0.0
      %1838 = vmatprep.subr.mxu0 0.0
      %1839 = vmatpush1.msra.mxu0 0.0
      %1840 = vmatprep.subr.mxu0 0.0
      %1841 = vmatpush1.msra.mxu0 0.0
      %1842 = vmatprep.subr.mxu0 0.0
      %1843 = vmatpush1.msra.mxu0 0.0
      %1844 = vmatprep.subr.mxu0 0.0
      %1845 = vmatpush1.msra.mxu0 0.0
      %1846 = vmatprep.subr.mxu0 0.0
      %1847 = vmatpush1.msra.mxu0 0.0
      %1848 = vmatprep.subr.mxu0 0.0
      %1849 = vmatpush1.msra.mxu0 0.0
      %1850 = vmatprep.subr.mxu0 0.0
      %1851 = vmatpush1.msra.mxu0 0.0
      %1852 = vmatprep.subr.mxu0 0.0
      %1853 = vmatpush1.msra.mxu0 %v1823
      %1854 = vmatprep.subr.mxu0 0.0
      %1855 = vmatpush1.msra.mxu0 %v1822
      %1856 = vmatprep.subr.mxu0 0.0
      %1857 = vmatpush2.msra.mxu0 0.0
      %1858 = vmatprep.subr.mxu0 0.0
      %1859 = vmatpush2.msra.mxu0 0.0
      %1860 = vmatprep.subr.mxu0 0.0
      %1861 = vmatpush2.msra.mxu0 0.0
      %1862 = vmatprep.subr.mxu0 0.0
      %1863 = vmatpush2.msra.mxu0 0.0
      %1864 = vmatprep.subr.mxu0 0.0
      %1865 = vmatpush2.msra.mxu0 0.0
      %1866 = vmatprep.subr.mxu0 0.0
      %1867 = vmatpush2.msra.mxu0 0.0
      %1868 = vmatprep.subr.mxu0 0.0
      %1869 = vmatpush2.msra.mxu0 0.0
      %1870 = vmatprep.subr.mxu0 0.0
      %1871 = vmatpush2.msra.mxu0 0.0
      %1872 = vmatprep.subr.mxu0 0.0
      %1873 = vmatpush2.msra.mxu0 0.0
      %1874 = vmatprep.subr.mxu0 0.0
      %1875 = vmatpush2.msra.mxu0 0.0
      %1876 = vmatprep.subr.mxu0 0.0
      %1877 = vmatpush2.msra.mxu0 0.0
      %1878 = vmatprep.subr.mxu0 0.0
      %1879 = vmatpush2.msra.mxu0 0.0
      %1880 = vmatprep.subr.mxu0 0.0
      %1881 = vmatpush2.msra.mxu0 0.0
      %1882 = vmatprep.subr.mxu0 0.0
      %1883 = vmatpush2.msra.mxu0 0.0
      %1884 = vmatprep.subr.mxu0 0.0
      %1885 = vmatpush2.msra.mxu0 0.0
      %1886 = vmatprep.subr.mxu0 0.0
      %1887 = vmatpush2.msra.mxu0 0.0
      %1888 = vmatprep.mubr.f32.mxu0 0.0
      %1889 = vmatmul.mubr.f32.gmra.mxu0 %v867
      %v1890 = vpop.f32.mrf.mxu0
      %v1891 = vadd.f32 %v864, %v1890
      %v1892 = vpop.f32.mrf.mxu0
      %1893 = vdwg.mxu0
      %v1894 = vmax.f32 %v1891, 0.0
      %1896 = vrot.lane.b32.xlu0 %v1894, 1
      %v1897 = vpop.permute.xlu0 %1896
      %1899 = vst.msk [vmem:[%s440] sm:$0x1] %vm944, %v1897
      %1900 = vst.msk [vmem:[%s440 + $0x18] sm:$0x1] %vm944, %v1897
      %1901 = vst.msk [vmem:[%s440 + $0x30] sm:$0x1] %vm944, %v1897
      %1902 = vst.msk [vmem:[%s440 + $0x48] sm:$0x1] %vm944, %v1897
      %1903 = vrot.lane.b32.xlu0 %v1894, 111
      %v1904 = vpop.permute.xlu0 %1903
      %1906 = vst.msk [vmem:[%s440 + $0x12] sm:$0x2] %vm952, %v1904
      %1907 = vst.msk [vmem:[%s440 + $0x2a] sm:$0x2] %vm952, %v1904
      %1908 = vst.msk [vmem:[%s440 + $0x42] sm:$0x2] %vm952, %v1904
      %1909 = vst.msk [vmem:[%s440 + $0x5a] sm:$0x2] %vm952, %v1904
      %v1910 = vld [vmem:[%s440] sm:$0xff]
      %v1911 = vld [vmem:[%s440 + $0x8] sm:$0xff]
      %v1912 = vld [vmem:[%s440 + $0x10] sm:$0xf]
      %v1913 = vld [vmem:[%s498] sm:$0xff]
      %v1914 = vld [vmem:[%s498 + $0x8] sm:$0xff]
      %v1915 = vld [vmem:[%s498 + $0x10] sm:$0xf]
      %v1916 = vld [vmem:[%s527] sm:$0xff]
      %v1917 = vld [vmem:[%s527 + $0x8] sm:$0xff]
      %v1918 = vld [vmem:[%s527 + $0x10] sm:$0xf]
      %v1919 = vld [vmem:[%s556] sm:$0xff]
      %v1920 = vld [vmem:[%s556 + $0x8] sm:$0xff]
      %v1921 = vld [vmem:[%s556 + $0x10] sm:$0xf]
      %1925 = vrot.lane.b32.xlu0 %v1910, 127
      %v1926 = vpop.permute.xlu0 %1925
      %1927 = vrot.lane.b32.xlu0 %v1911, 127
      %v1928 = vpop.permute.xlu0 %1927
      %1929 = vrot.lane.b32.xlu0 %v1912, 127
      %v1930 = vpop.permute.xlu0 %1929
      %1937 = vrot.lane.b32.xlu0 %v1913, 2
      %v1938 = vpop.permute.xlu0 %1937
      %1939 = vrot.lane.b32.xlu0 %v1914, 2
      %v1940 = vpop.permute.xlu0 %1939
      %1941 = vrot.lane.b32.xlu0 %v1915, 2
      %v1942 = vpop.permute.xlu0 %1941
      %1949 = vrot.lane.b32.xlu0 %v1916, 5
      %v1950 = vpop.permute.xlu0 %1949
      %1951 = vrot.lane.b32.xlu0 %v1917, 5
      %v1952 = vpop.permute.xlu0 %1951
      %1953 = vrot.lane.b32.xlu0 %v1918, 5
      %v1954 = vpop.permute.xlu0 %1953
      %1961 = vrot.lane.b32.xlu0 %v1919, 8
      %v1962 = vpop.permute.xlu0 %1961
      %1963 = vrot.lane.b32.xlu0 %v1920, 8
      %v1964 = vpop.permute.xlu0 %1963
      %1965 = vrot.lane.b32.xlu0 %v1921, 8
      %v1966 = vpop.permute.xlu0 %1965
      %v1970 = vsel %vm1017, %v1926, %v1938
      %v1971 = vsel %vm1017, %v1928, %v1940
      %v1972 = vsel %vm1017, %v1930, %v1942
      %v1973 = vsel %vm1021, %v1970, %v1950
      %v1974 = vsel %vm1021, %v1971, %v1952
      %v1975 = vsel %vm1021, %v1972, %v1954
      %v1976 = vsel %vm1025, %v1973, %v1962
      %v1977 = vsel %vm1025, %v1974, %v1964
      %v1978 = vsel %vm1025, %v1975, %v1966
      %1979 = vxpose.xlu0.b32.start [1/16] %v1976, 128
      %1980 = vxpose.xlu0.b32.cont [2/16] %v1977, 128
      %1981 = vxpose.xlu0.b32.cont [3/16] %v1978, 128
      %1982 = vxpose.xlu0.b32.cont [4/16] 0.0, 128
      %1983 = vxpose.xlu0.b32.cont [5/16] 0.0, 128
      %1984 = vxpose.xlu0.b32.cont [6/16] 0.0, 128
      %1985 = vxpose.xlu0.b32.cont [7/16] 0.0, 128
      %1986 = vxpose.xlu0.b32.cont [8/16] 0.0, 128
      %1987 = vxpose.xlu0.b32.cont [9/16] 0.0, 128
      %1988 = vxpose.xlu0.b32.cont [10/16] 0.0, 128
      %1989 = vxpose.xlu0.b32.cont [11/16] 0.0, 128
      %1990 = vxpose.xlu0.b32.cont [12/16] 0.0, 128
      %1991 = vxpose.xlu0.b32.cont [13/16] 0.0, 128
      %1992 = vxpose.xlu0.b32.cont [14/16] 0.0, 128
      %1993 = vxpose.xlu0.b32.cont [15/16] 0.0, 128
      %1994 = vxpose.xlu0.b32.end [16/16] 0.0, 128
      %v1995 = vpop.trf.xlu0
      %v1996 = vpop.trf.xlu0
      %v1997 = vpop.trf.xlu0
      %v1998 = vpop.trf.xlu0
      %v1999 = vpop.trf.xlu0
      %v2000 = vpop.trf.xlu0
      %v2001 = vpop.trf.xlu0
      %v2002 = vpop.trf.xlu0
      %v2003 = vpop.trf.xlu0
      %v2004 = vpop.trf.xlu0
      %v2005 = vpop.trf.xlu0
      %v2006 = vpop.trf.xlu0
      %v2007 = vpop.trf.xlu0
      %v2008 = vpop.trf.xlu0
      %v2009 = vpop.trf.xlu0
      %v2010 = vpop.trf.xlu0
      %v2013 = vrot.slane %v1995, 4
      %v2014 = vrot.slane %v1996, 4
      %v2015 = vsel %vm601, %v2013, %v2014
      %2016 = vrot.lane.b32.xlu0 %v2013, 127
      %v2017 = vpop.permute.xlu0 %2016
      %2018 = vrot.lane.b32.xlu0 %v2015, 127
      %v2019 = vpop.permute.xlu0 %2018
      %2022 = vrot.lane.b32.xlu0 %v1995, 126
      %v2023 = vpop.permute.xlu0 %2022
      %2024 = vrot.lane.b32.xlu0 %v1996, 126
      %v2025 = vpop.permute.xlu0 %2024
      %v2028 = vsel %vm601, %v1996, %v2017
      %2029 = vrot.lane.b32.xlu0 %v1910, 112
      %v2030 = vpop.permute.xlu0 %2029
      %2031 = vrot.lane.b32.xlu0 %v1911, 112
      %v2032 = vpop.permute.xlu0 %2031
      %2033 = vrot.lane.b32.xlu0 %v1912, 112
      %v2034 = vpop.permute.xlu0 %2033
      %2038 = vrot.lane.b32.xlu0 %v1913, 115
      %v2039 = vpop.permute.xlu0 %2038
      %2040 = vrot.lane.b32.xlu0 %v1914, 115
      %v2041 = vpop.permute.xlu0 %2040
      %2042 = vrot.lane.b32.xlu0 %v1915, 115
      %v2043 = vpop.permute.xlu0 %2042
      %2047 = vrot.lane.b32.xlu0 %v1916, 118
      %v2048 = vpop.permute.xlu0 %2047
      %2049 = vrot.lane.b32.xlu0 %v1917, 118
      %v2050 = vpop.permute.xlu0 %2049
      %2051 = vrot.lane.b32.xlu0 %v1918, 118
      %v2052 = vpop.permute.xlu0 %2051
      %2056 = vrot.lane.b32.xlu0 %v1919, 121
      %v2057 = vpop.permute.xlu0 %2056
      %2058 = vrot.lane.b32.xlu0 %v1920, 121
      %v2059 = vpop.permute.xlu0 %2058
      %2060 = vrot.lane.b32.xlu0 %v1921, 121
      %v2061 = vpop.permute.xlu0 %2060
      %v2065 = vsel %vm1017, %v2030, %v2039
      %v2066 = vsel %vm1017, %v2032, %v2041
      %v2067 = vsel %vm1017, %v2034, %v2043
      %v2068 = vsel %vm1021, %v2065, %v2048
      %v2069 = vsel %vm1021, %v2066, %v2050
      %v2070 = vsel %vm1021, %v2067, %v2052
      %v2071 = vsel %vm1025, %v2068, %v2057
      %v2072 = vsel %vm1025, %v2069, %v2059
      %v2073 = vsel %vm1025, %v2070, %v2061
      %2074 = vxpose.xlu0.b32.start [1/16] %v2071, 128
      %2075 = vxpose.xlu0.b32.cont [2/16] %v2072, 128
      %2076 = vxpose.xlu0.b32.cont [3/16] %v2073, 128
      %2077 = vxpose.xlu0.b32.cont [4/16] 0.0, 128
      %2078 = vxpose.xlu0.b32.cont [5/16] 0.0, 128
      %2079 = vxpose.xlu0.b32.cont [6/16] 0.0, 128
      %2080 = vxpose.xlu0.b32.cont [7/16] 0.0, 128
      %2081 = vxpose.xlu0.b32.cont [8/16] 0.0, 128
      %2082 = vxpose.xlu0.b32.cont [9/16] 0.0, 128
      %2083 = vxpose.xlu0.b32.cont [10/16] 0.0, 128
      %2084 = vxpose.xlu0.b32.cont [11/16] 0.0, 128
      %2085 = vxpose.xlu0.b32.cont [12/16] 0.0, 128
      %2086 = vxpose.xlu0.b32.cont [13/16] 0.0, 128
      %2087 = vxpose.xlu0.b32.cont [14/16] 0.0, 128
      %2088 = vxpose.xlu0.b32.cont [15/16] 0.0, 128
      %2089 = vxpose.xlu0.b32.end [16/16] 0.0, 128
      %v2090 = vpop.trf.xlu0
      %v2091 = vpop.trf.xlu0
      %v2092 = vpop.trf.xlu0
      %v2093 = vpop.trf.xlu0
      %v2094 = vpop.trf.xlu0
      %v2095 = vpop.trf.xlu0
      %v2096 = vpop.trf.xlu0
      %v2097 = vpop.trf.xlu0
      %v2098 = vpop.trf.xlu0
      %v2099 = vpop.trf.xlu0
      %v2100 = vpop.trf.xlu0
      %v2101 = vpop.trf.xlu0
      %v2102 = vpop.trf.xlu0
      %v2103 = vpop.trf.xlu0
      %v2104 = vpop.trf.xlu0
      %v2105 = vpop.trf.xlu0
      %v2108 = vrot.slane %v2090, 4
      %v2109 = vrot.slane %v2091, 4
      %v2110 = vsel %vm601, %v2108, %v2109
      %2111 = vrot.lane.b32.xlu0 %v2108, 127
      %v2112 = vpop.permute.xlu0 %2111
      %2113 = vrot.lane.b32.xlu0 %v2110, 127
      %v2114 = vpop.permute.xlu0 %2113
      %2116 = vrot.lane.b32.xlu0 %v2090, 126
      %v2117 = vpop.permute.xlu0 %2116
      %2118 = vrot.lane.b32.xlu0 %v2091, 126
      %v2119 = vpop.permute.xlu0 %2118
      %v2120 = vsel %vm601, %v2091, %v2112
      %2122 = vrot.lane.b32.xlu0 %v2090, 18
      %v2123 = vpop.permute.xlu0 %2122
      %2124 = vrot.lane.b32.xlu0 %v2120, 18
      %v2125 = vpop.permute.xlu0 %2124
      %2126 = vrot.lane.b32.xlu0 %v2114, 18
      %v2127 = vpop.permute.xlu0 %2126
      %2128 = vrot.lane.b32.xlu0 %v2117, 18
      %v2129 = vpop.permute.xlu0 %2128
      %2130 = vrot.lane.b32.xlu0 %v2119, 18
      %v2131 = vpop.permute.xlu0 %2130
      %v2137 = vsel %vm454, %v1995, %v2123
      %v2138 = vsel %vm454, %v2028, %v2125
      %v2139 = vsel %vm454, %v2019, %v2127
      %v2140 = vsel %vm454, %v2023, %v2129
      %v2141 = vsel %vm454, %v2025, %v2131
      %v2143 = vsel %vm601, %v2141, 0
      %2145 = vmatprep.subr.mxu0 0.0
      %2146 = vmatpush1.msra.mxu0 0.0
      %2147 = vmatprep.subr.mxu0 0.0
      %2148 = vmatpush1.msra.mxu0 0.0
      %2149 = vmatprep.subr.mxu0 0.0
      %2150 = vmatpush1.msra.mxu0 0.0
      %2151 = vmatprep.subr.mxu0 0.0
      %2152 = vmatpush1.msra.mxu0 0.0
      %2153 = vmatprep.subr.mxu0 0.0
      %2154 = vmatpush1.msra.mxu0 0.0
      %2155 = vmatprep.subr.mxu0 0.0
      %2156 = vmatpush1.msra.mxu0 0.0
      %2157 = vmatprep.subr.mxu0 0.0
      %2158 = vmatpush1.msra.mxu0 0.0
      %2159 = vmatprep.subr.mxu0 0.0
      %2160 = vmatpush1.msra.mxu0 0.0
      %2161 = vmatprep.subr.mxu0 0.0
      %2162 = vmatpush1.msra.mxu0 0.0
      %2163 = vmatprep.subr.mxu0 0.0
      %2164 = vmatpush1.msra.mxu0 0.0
      %2165 = vmatprep.subr.mxu0 0.0
      %2166 = vmatpush1.msra.mxu0 0.0
      %2167 = vmatprep.subr.mxu0 0.0
      %2168 = vmatpush1.msra.mxu0 %v2143
      %2169 = vmatprep.subr.mxu0 0.0
      %2170 = vmatpush1.msra.mxu0 %v2140
      %2171 = vmatprep.subr.mxu0 0.0
      %2172 = vmatpush1.msra.mxu0 %v2139
      %2173 = vmatprep.subr.mxu0 0.0
      %2174 = vmatpush1.msra.mxu0 %v2138
      %2175 = vmatprep.subr.mxu0 0.0
      %2176 = vmatpush1.msra.mxu0 %v2137
      %2177 = vmatprep.subr.mxu0 0.0
      %2178 = vmatpush2.msra.mxu0 0.0
      %2179 = vmatprep.subr.mxu0 0.0
      %2180 = vmatpush2.msra.mxu0 0.0
      %2181 = vmatprep.subr.mxu0 0.0
      %2182 = vmatpush2.msra.mxu0 0.0
      %2183 = vmatprep.subr.mxu0 0.0
      %2184 = vmatpush2.msra.mxu0 0.0
      %2185 = vmatprep.subr.mxu0 0.0
      %2186 = vmatpush2.msra.mxu0 0.0
      %2187 = vmatprep.subr.mxu0 0.0
      %2188 = vmatpush2.msra.mxu0 0.0
      %2189 = vmatprep.subr.mxu0 0.0
      %2190 = vmatpush2.msra.mxu0 0.0
      %2191 = vmatprep.subr.mxu0 0.0
      %2192 = vmatpush2.msra.mxu0 0.0
      %2193 = vmatprep.subr.mxu0 0.0
      %2194 = vmatpush2.msra.mxu0 0.0
      %2195 = vmatprep.subr.mxu0 0.0
      %2196 = vmatpush2.msra.mxu0 0.0
      %2197 = vmatprep.subr.mxu0 0.0
      %2198 = vmatpush2.msra.mxu0 0.0
      %2199 = vmatprep.subr.mxu0 0.0
      %2200 = vmatpush2.msra.mxu0 0.0
      %2201 = vmatprep.subr.mxu0 0.0
      %2202 = vmatpush2.msra.mxu0 0.0
      %2203 = vmatprep.subr.mxu0 0.0
      %2204 = vmatpush2.msra.mxu0 0.0
      %2205 = vmatprep.subr.mxu0 0.0
      %2206 = vmatpush2.msra.mxu0 0.0
      %2207 = vmatprep.subr.mxu0 0.0
      %2208 = vmatpush2.msra.mxu0 0.0
      %2209 = vmatprep.mubr.f32.mxu0 0.0
      %2210 = vmatmul.mubr.f32.gmra.mxu0 %v1203
      %v2211 = vpop.f32.mrf.mxu0
      %v2212 = vadd.f32 %v1195, %v2211
      %v2213 = vpop.f32.mrf.mxu0
      %2214 = vmatprep.mubr.f32.mxu0 0.0
      %2215 = vmatmul.mubr.f32.gmra.mxu0 %v1206
      %v2216 = vpop.f32.mrf.mxu0
      %v2217 = vadd.f32 %v1200, %v2216
      %v2218 = vpop.f32.mrf.mxu0
      %2219 = vdwg.mxu0
      %v2220 = vmax.f32 %v2212, 0.0
      %v2221 = vmax.f32 %v2217, 0.0
      %2222 = vmatprep.subr.mxu0 0.0
      %2223 = vmatpush1.msra.mxu0 0.0
      %2224 = vmatprep.subr.mxu0 0.0
      %2225 = vmatpush1.msra.mxu0 0.0
      %2226 = vmatprep.subr.mxu0 0.0
      %2227 = vmatpush1.msra.mxu0 0.0
      %2228 = vmatprep.subr.mxu0 0.0
      %2229 = vmatpush1.msra.mxu0 0.0
      %2230 = vmatprep.subr.mxu0 0.0
      %2231 = vmatpush1.msra.mxu0 0.0
      %2232 = vmatprep.subr.mxu0 0.0
      %2233 = vmatpush1.msra.mxu0 0.0
      %2234 = vmatprep.subr.mxu0 0.0
      %2235 = vmatpush1.msra.mxu0 0.0
      %2236 = vmatprep.subr.mxu0 0.0
      %2237 = vmatpush1.msra.mxu0 0.0
      %2238 = vmatprep.subr.mxu0 0.0
      %2239 = vmatpush1.msra.mxu0 0.0
      %2240 = vmatprep.subr.mxu0 0.0
      %2241 = vmatpush1.msra.mxu0 0.0
      %2242 = vmatprep.subr.mxu0 0.0
      %2243 = vmatpush1.msra.mxu0 0.0
      %2244 = vmatprep.subr.mxu0 0.0
      %2245 = vmatpush1.msra.mxu0 0.0
      %2246 = vmatprep.subr.mxu0 0.0
      %2247 = vmatpush1.msra.mxu0 0.0
      %2248 = vmatprep.subr.mxu0 0.0
      %2249 = vmatpush1.msra.mxu0 0.0
      %2250 = vmatprep.subr.mxu0 0.0
      %2251 = vmatpush1.msra.mxu0 %v2221
      %2252 = vmatprep.subr.mxu0 0.0
      %2253 = vmatpush1.msra.mxu0 %v2220
      %2254 = vmatprep.subr.mxu0 0.0
      %2255 = vmatpush2.msra.mxu0 0.0
      %2256 = vmatprep.subr.mxu0 0.0
      %2257 = vmatpush2.msra.mxu0 0.0
      %2258 = vmatprep.subr.mxu0 0.0
      %2259 = vmatpush2.msra.mxu0 0.0
      %2260 = vmatprep.subr.mxu0 0.0
      %2261 = vmatpush2.msra.mxu0 0.0
      %2262 = vmatprep.subr.mxu0 0.0
      %2263 = vmatpush2.msra.mxu0 0.0
      %2264 = vmatprep.subr.mxu0 0.0
      %2265 = vmatpush2.msra.mxu0 0.0
      %2266 = vmatprep.subr.mxu0 0.0
      %2267 = vmatpush2.msra.mxu0 0.0
      %2268 = vmatprep.subr.mxu0 0.0
      %2269 = vmatpush2.msra.mxu0 0.0
      %2270 = vmatprep.subr.mxu0 0.0
      %2271 = vmatpush2.msra.mxu0 0.0
      %2272 = vmatprep.subr.mxu0 0.0
      %2273 = vmatpush2.msra.mxu0 0.0
      %2274 = vmatprep.subr.mxu0 0.0
      %2275 = vmatpush2.msra.mxu0 0.0
      %2276 = vmatprep.subr.mxu0 0.0
      %2277 = vmatpush2.msra.mxu0 0.0
      %2278 = vmatprep.subr.mxu0 0.0
      %2279 = vmatpush2.msra.mxu0 0.0
      %2280 = vmatprep.subr.mxu0 0.0
      %2281 = vmatpush2.msra.mxu0 0.0
      %2282 = vmatprep.subr.mxu0 0.0
      %2283 = vmatpush2.msra.mxu0 0.0
      %2284 = vmatprep.subr.mxu0 0.0
      %2285 = vmatpush2.msra.mxu0 0.0
      %2286 = vmatprep.mubr.f32.mxu0 0.0
      %2287 = vmatmul.mubr.f32.gmra.mxu0 %v1299
      %v2288 = vpop.f32.mrf.mxu0
      %v2289 = vadd.f32 %v1291, %v2288
      %v2290 = vpop.f32.mrf.mxu0
      %2291 = vmatprep.mubr.f32.mxu0 0.0
      %2292 = vmatmul.mubr.f32.gmra.mxu0 %v1302
      %v2293 = vpop.f32.mrf.mxu0
      %v2294 = vadd.f32 %v1296, %v2293
      %v2295 = vpop.f32.mrf.mxu0
      %2296 = vdwg.mxu0
      %v2297 = vmax.f32 %v2289, 0.0
      %v2298 = vmax.f32 %v2294, 0.0
      %2299 = vmatprep.subr.mxu0 0.0
      %2300 = vmatpush1.msra.mxu0 0.0
      %2301 = vmatprep.subr.mxu0 0.0
      %2302 = vmatpush1.msra.mxu0 0.0
      %2303 = vmatprep.subr.mxu0 0.0
      %2304 = vmatpush1.msra.mxu0 0.0
      %2305 = vmatprep.subr.mxu0 0.0
      %2306 = vmatpush1.msra.mxu0 0.0
      %2307 = vmatprep.subr.mxu0 0.0
      %2308 = vmatpush1.msra.mxu0 0.0
      %2309 = vmatprep.subr.mxu0 0.0
      %2310 = vmatpush1.msra.mxu0 0.0
      %2311 = vmatprep.subr.mxu0 0.0
      %2312 = vmatpush1.msra.mxu0 0.0
      %2313 = vmatprep.subr.mxu0 0.0
      %2314 = vmatpush1.msra.mxu0 0.0
      %2315 = vmatprep.subr.mxu0 0.0
      %2316 = vmatpush1.msra.mxu0 0.0
      %2317 = vmatprep.subr.mxu0 0.0
      %2318 = vmatpush1.msra.mxu0 0.0
      %2319 = vmatprep.subr.mxu0 0.0
      %2320 = vmatpush1.msra.mxu0 0.0
      %2321 = vmatprep.subr.mxu0 0.0
      %2322 = vmatpush1.msra.mxu0 0.0
      %2323 = vmatprep.subr.mxu0 0.0
      %2324 = vmatpush1.msra.mxu0 0.0
      %2325 = vmatprep.subr.mxu0 0.0
      %2326 = vmatpush1.msra.mxu0 0.0
      %2327 = vmatprep.subr.mxu0 0.0
      %2328 = vmatpush1.msra.mxu0 %v2298
      %2329 = vmatprep.subr.mxu0 0.0
      %2330 = vmatpush1.msra.mxu0 %v2297
      %2331 = vmatprep.subr.mxu0 0.0
      %2332 = vmatpush2.msra.mxu0 0.0
      %2333 = vmatprep.subr.mxu0 0.0
      %2334 = vmatpush2.msra.mxu0 0.0
      %2335 = vmatprep.subr.mxu0 0.0
      %2336 = vmatpush2.msra.mxu0 0.0
      %2337 = vmatprep.subr.mxu0 0.0
      %2338 = vmatpush2.msra.mxu0 0.0
      %2339 = vmatprep.subr.mxu0 0.0
      %2340 = vmatpush2.msra.mxu0 0.0
      %2341 = vmatprep.subr.mxu0 0.0
      %2342 = vmatpush2.msra.mxu0 0.0
      %2343 = vmatprep.subr.mxu0 0.0
      %2344 = vmatpush2.msra.mxu0 0.0
      %2345 = vmatprep.subr.mxu0 0.0
      %2346 = vmatpush2.msra.mxu0 0.0
      %2347 = vmatprep.subr.mxu0 0.0
      %2348 = vmatpush2.msra.mxu0 0.0
      %2349 = vmatprep.subr.mxu0 0.0
      %2350 = vmatpush2.msra.mxu0 0.0
      %2351 = vmatprep.subr.mxu0 0.0
      %2352 = vmatpush2.msra.mxu0 0.0
      %2353 = vmatprep.subr.mxu0 0.0
      %2354 = vmatpush2.msra.mxu0 0.0
      %2355 = vmatprep.subr.mxu0 0.0
      %2356 = vmatpush2.msra.mxu0 0.0
      %2357 = vmatprep.subr.mxu0 0.0
      %2358 = vmatpush2.msra.mxu0 0.0
      %2359 = vmatprep.subr.mxu0 0.0
      %2360 = vmatpush2.msra.mxu0 0.0
      %2361 = vmatprep.subr.mxu0 0.0
      %2362 = vmatpush2.msra.mxu0 0.0
      %2363 = vmatprep.mubr.f32.mxu0 0.0
      %2364 = vmatmul.mubr.f32.gmra.mxu0 %v1387
      %v2365 = vpop.f32.mrf.mxu0
      %v2366 = vadd.f32 %v1384, %v2365
      %v2367 = vpop.f32.mrf.mxu0
      %2368 = vdwg.mxu0
      %v2369 = vmax.f32 %v2366, 0.0
      %2370 = vxpose.xlu0.b32.start [1/16] %v2369, 128
      %2371 = vxpose.xlu0.b32.cont [2/16] 0.0, 128
      %2372 = vxpose.xlu0.b32.cont [3/16] 0.0, 128
      %2373 = vxpose.xlu0.b32.cont [4/16] 0.0, 128
      %2374 = vxpose.xlu0.b32.cont [5/16] 0.0, 128
      %2375 = vxpose.xlu0.b32.cont [6/16] 0.0, 128
      %2376 = vxpose.xlu0.b32.cont [7/16] 0.0, 128
      %2377 = vxpose.xlu0.b32.cont [8/16] 0.0, 128
      %2378 = vxpose.xlu0.b32.cont [9/16] 0.0, 128
      %2379 = vxpose.xlu0.b32.cont [10/16] 0.0, 128
      %2380 = vxpose.xlu0.b32.cont [11/16] 0.0, 128
      %2381 = vxpose.xlu0.b32.cont [12/16] 0.0, 128
      %2382 = vxpose.xlu0.b32.cont [13/16] 0.0, 128
      %2383 = vxpose.xlu0.b32.cont [14/16] 0.0, 128
      %2384 = vxpose.xlu0.b32.cont [15/16] 0.0, 128
      %2385 = vxpose.xlu0.b32.end [16/16] 0.0, 128
      %v2386 = vpop.trf.xlu0
      %v2387 = vpop.trf.xlu0
      %v2388 = vpop.trf.xlu0
      %v2389 = vpop.trf.xlu0
      %v2390 = vpop.trf.xlu0
      %v2391 = vpop.trf.xlu0
      %v2392 = vpop.trf.xlu0
      %v2393 = vpop.trf.xlu0
      %v2394 = vpop.trf.xlu0
      %v2395 = vpop.trf.xlu0
      %v2396 = vpop.trf.xlu0
      %v2397 = vpop.trf.xlu0
      %v2398 = vpop.trf.xlu0
      %v2399 = vpop.trf.xlu0
      %v2400 = vpop.trf.xlu0
      %v2401 = vpop.trf.xlu0
      %v2403 = vrot.slane %v2369, 1
      %2404 = vrot.lane.b32.xlu0 %v2403, 110
      %v2405 = vpop.permute.xlu0 %2404
      %2407 = vxpose.xlu0.b32.start [1/16] %v2405, 128
      %2408 = vxpose.xlu0.b32.cont [2/16] 0.0, 128
      %2409 = vxpose.xlu0.b32.cont [3/16] 0.0, 128
      %2410 = vxpose.xlu0.b32.cont [4/16] 0.0, 128
      %2411 = vxpose.xlu0.b32.cont [5/16] 0.0, 128
      %2412 = vxpose.xlu0.b32.cont [6/16] 0.0, 128
      %2413 = vxpose.xlu0.b32.cont [7/16] 0.0, 128
      %2414 = vxpose.xlu0.b32.cont [8/16] 0.0, 128
      %2415 = vxpose.xlu0.b32.cont [9/16] 0.0, 128
      %2416 = vxpose.xlu0.b32.cont [10/16] 0.0, 128
      %2417 = vxpose.xlu0.b32.cont [11/16] 0.0, 128
      %2418 = vxpose.xlu0.b32.cont [12/16] 0.0, 128
      %2419 = vxpose.xlu0.b32.cont [13/16] 0.0, 128
      %2420 = vxpose.xlu0.b32.cont [14/16] 0.0, 128
      %2421 = vxpose.xlu0.b32.cont [15/16] 0.0, 128
      %2422 = vxpose.xlu0.b32.end [16/16] 0.0, 128
      %v2423 = vpop.trf.xlu0
      %v2424 = vpop.trf.xlu0
      %v2425 = vpop.trf.xlu0
      %v2426 = vpop.trf.xlu0
      %v2427 = vpop.trf.xlu0
      %v2428 = vpop.trf.xlu0
      %v2429 = vpop.trf.xlu0
      %v2430 = vpop.trf.xlu0
      %v2431 = vpop.trf.xlu0
      %v2432 = vpop.trf.xlu0
      %v2433 = vpop.trf.xlu0
      %v2434 = vpop.trf.xlu0
      %v2435 = vpop.trf.xlu0
      %v2436 = vpop.trf.xlu0
      %v2437 = vpop.trf.xlu0
      %v2438 = vpop.trf.xlu0
      %vm2439 = vcmask 7168
      %2440 = vst.msk [vmem:[%s440 + $0x1] sm:$0xff] %vm2439, %v2386
      %2441 = vst.msk [vmem:[%s440 + $0x9] sm:$0xff] %vm2439, %v2387
      %vm2442 = vcmask 1024
      %2443 = vst.msk [vmem:[%s440 + $0x11] sm:$0x3] %vm2442, %v2388
      %2444 = vst.msk [vmem:[%s440 + $0x19] sm:$0xff] %vm2439, %v2386
      %2445 = vst.msk [vmem:[%s440 + $0x21] sm:$0xff] %vm2439, %v2387
      %2446 = vst.msk [vmem:[%s440 + $0x29] sm:$0x3] %vm2442, %v2388
      %2447 = vst.msk [vmem:[%s440 + $0x31] sm:$0xff] %vm2439, %v2386
      %2448 = vst.msk [vmem:[%s440 + $0x39] sm:$0xff] %vm2439, %v2387
      %2449 = vst.msk [vmem:[%s440 + $0x41] sm:$0x3] %vm2442, %v2388
      %2450 = vst.msk [vmem:[%s440 + $0x49] sm:$0xff] %vm2439, %v2386
      %2451 = vst.msk [vmem:[%s440 + $0x51] sm:$0xff] %vm2439, %v2387
      %2452 = vst.msk [vmem:[%s440 + $0x59] sm:$0x3] %vm2442, %v2388
      %2456 = vrot.lane.b32.xlu0 %v2423, 19
      %v2457 = vpop.permute.xlu0 %2456
      %2458 = vrot.lane.b32.xlu0 %v2424, 19
      %v2459 = vpop.permute.xlu0 %2458
      %2460 = vrot.lane.b32.xlu0 %v2425, 19
      %v2461 = vpop.permute.xlu0 %2460
      %vm2465 = vcmask 162968
      %2466 = vst.msk [vmem:[%s440 + $0x1] sm:$0xff] %vm2465, %v2457
      %2467 = vst.msk [vmem:[%s440 + $0x9] sm:$0xff] %vm2465, %v2459
      %vm2468 = vcmask 156824
      %2469 = vst.msk [vmem:[%s440 + $0x11] sm:$0x3] %vm2468, %v2461
      %2470 = vst.msk [vmem:[%s440 + $0x19] sm:$0xff] %vm2465, %v2457
      %2471 = vst.msk [vmem:[%s440 + $0x21] sm:$0xff] %vm2465, %v2459
      %2472 = vst.msk [vmem:[%s440 + $0x29] sm:$0x3] %vm2468, %v2461
      %2473 = vst.msk [vmem:[%s440 + $0x31] sm:$0xff] %vm2465, %v2457
      %2474 = vst.msk [vmem:[%s440 + $0x39] sm:$0xff] %vm2465, %v2459
      %2475 = vst.msk [vmem:[%s440 + $0x41] sm:$0x3] %vm2468, %v2461
      %2476 = vst.msk [vmem:[%s440 + $0x49] sm:$0xff] %vm2465, %v2457
      %2477 = vst.msk [vmem:[%s440 + $0x51] sm:$0xff] %vm2465, %v2459
      %2478 = vst.msk [vmem:[%s440 + $0x59] sm:$0x3] %vm2468, %v2461
      %p2479 = scmp.lt.s32.totalorder %s24, 1
      %s2480 = scalar_select %p2479, %s24, 1
      %s2481 = smul.addr %s2480, 12
      %s2482 = smul.addr %s2481, 8
      %s2483 = scalar_lea.vmem %s13, %s2482
      // Predicated region
      $region73: #{_lambda_.1} parent=71 // pred_check
        %p2484 = pneg %p320
      $region74: #{_lambda_.1} parent=71 // pred_check_branch
        %2486 = sbr.rel (%p2484) target = $region76
      $region75: #{_lambda_.1} parent=71 // pred_region
        _
      $region76: #{_lambda_.1} parent=71 // pred_fallthru
        _
    $region72: #{_lambda_.1} parent=5 // pred_fallthru
      _
    %p2487 = scmp.le.s32.totalorder 2, %s19
    // Predicated region
    $region77: #{_lambda_.1} parent=5 // pred_check
      %p2488 = pneg %p2487
    $region78: #{_lambda_.1} parent=5 // pred_check_branch
      %2490 = sbr.rel (%p2488) target = $region80
    $region79: #{_lambda_.1} parent=5 // pred_region
      %s2491 = ssub.s32 %s19, 2
      // Predicated region
      $region81: #{_lambda_.1} parent=79 // pred_check
        %p2492 = pneg %p326
      $region82: #{_lambda_.1} parent=79 // pred_check_branch
        %2494 = sbr.rel (%p2492) target = $region84
      $region83: #{_lambda_.1} parent=79 // pred_region
        %p2495 = scmp.lt.s32.totalorder %s25, 1
        %s2496 = scalar_select %p2495, %s25, 1
        %s2497 = smul.addr %s2496, 12
        %s2498 = smul.addr %s2497, 8
        %s2499 = scalar_lea.vmem %s13, %s2498
      $region84: #{_lambda_.1} parent=79 // pred_fallthru
        _
    $region80: #{_lambda_.1} parent=5 // pred_fallthru
      _
  $region6: #{_lambda_.1} parent=0 // loop_footer
    %s23 = sadd.s32 1, %s19
  $region7: #{_lambda_.1} parent=0 // loop_footer_branch
    %18 = sbr.rel target = $region3
  $region8: #{_lambda_.1} parent=0 // loop_exit
    _

</llo_original>
